<compile_context>
chip_gen: v7x
topology: tpu7x:2x2x1
jax: 0.10.0
libtpu: 0.0.40
codegen_flags: <defaults>
</compile_context>

<pallas_src>
import jax
import jax.numpy as jnp
import numpy as np
from jax.experimental import pallas as pl
from jax.experimental.pallas import tpu as pltpu

# ----- module-consistent small config -----
IN_FEATS      = 16
OUT_FEATS     = 8
NUM_HEADS     = 4
HF            = NUM_HEADS * OUT_FEATS            # 32
NUM_METAPATHS = 4                                # IHAConv meta_paths
MH            = NUM_METAPATHS * NUM_HEADS        # 16
MHF           = NUM_METAPATHS * HF               # 128 (lane-dense output width)
NEG_SLOPE     = 0.2
NUM_ETYPES    = 3
N_NODES       = 64


def iha_mgat_kernel(feat_ref, featT_ref, wcat_ref, walr_ref, code_ref, etw_ref,
                    hsel_ref, bias_ref, out_ref):
    """All metapaths, all heads, all nodes in one invocation (grid = 1)."""
    n = feat_ref.shape[0]                      # #nodes (= #src = #dst)

    # fc_src for ALL metapaths in one lane-dense MXU matmul (bf16 operands, f32 acc).
    fsrc = jnp.dot(feat_ref[...], wcat_ref[...],
                   preferred_element_type=jnp.float32)            # (N, M*HF) = (64, 128)

    # attn_l / attn_r scores, (metapath,head)-major, straight off the MXU: attn folded
    # into W on the host, so no transposes and no scratch round trip.  Kept f32 (feeds exp).
    scores = jnp.dot(walr_ref[...], featT_ref[...],
                     preferred_element_type=jnp.float32)          # (2*MH, N)
    el = scores[:MH, :][:, None, :]            # (MH, 1, N)  per-source score
    er = scores[MH:, :][:, :, None]            # (MH, T, 1)  per-destination score
    # (^ the only remaining small relayout: a (16, 64) f32 lane->sublane move)

    # edge_norm weight + mask reconstructed from the packed int8 codes
    # (0 = no edge, e+1 = edge of type e); per-metapath etype weights read from SMEM.
    codes = code_ref[...].astype(jnp.int32)                       # (M, N, N)
    ew_slabs, mask_slabs = [], []
    for m in range(NUM_METAPATHS):
        c = codes[m]
        ew_m = jnp.zeros(c.shape, jnp.float32)
        for e in range(NUM_ETYPES - 1, -1, -1):
            ew_m = jnp.where(c == e + 1, etw_ref[m, e], ew_m)
        ew_slabs += [ew_m] * NUM_HEADS
        mask_slabs += [c > 0] * NUM_HEADS
    ewm3 = jnp.stack(ew_slabs, axis=0)                            # (MH, T, N)
    mask3 = jnp.stack(mask_slabs, axis=0)                         # (MH, T, N)

    # fn.u_add_v + edge_norm (v2=False order) + leaky_relu, all metapaths/heads at once.
    logits = (el + er) * ewm3                                     # (MH, T, N)
    logits = jnp.maximum(logits, NEG_SLOPE * logits)              # leaky_relu
    logits = jnp.where(mask3, logits, jnp.float32(-1e30))         # explicit edge mask

    # edge_softmax over incoming edges (lanes); normalization deferred past aggregation.
    mx = jnp.max(logits, axis=-1, keepdims=True)                  # (MH, T, 1)
    p = jnp.exp(logits - mx)                                      # non-edges underflow to 0
    s = jnp.sum(p, axis=-1, keepdims=True)                        # (MH, T, 1)

    # update_all(u_mul_e('ft','a'), sum): ONE (MH*T, N) x (N, M*HF) MXU matmul (bf16 ops).
    r = jnp.dot(p.reshape(MH * n, n).astype(jnp.bfloat16),
                fsrc.astype(jnp.bfloat16),
                preferred_element_type=jnp.float32)               # (MH*T, 128)
    r = r.reshape(MH, n, MHF)

    # deferred softmax scale (EUP reciprocal) + hoisted (metapath, head) column selector,
    # reduced to ONE fully lane-dense (T, 128) store, bias added once.
    r = r * pl.reciprocal(s, approx=True)
    out_ref[...] = jnp.sum(r * hsel_ref[...], axis=0) + bias_ref[...]
    # TODO(synk): activation (IHAConv passes F.elu), feat/attn dropout (p=0 / eval),
    # edge_embeddings (fc_e / attn_e), type embeddings (fc_et) and SemanticAttention
    # metapath fusion are identity / None / host-level glue in this reproduced config.


def iha_mgat_conv(feat, w_all, attn_l_all, attn_r_all, bias_all, adj_mask_all, etype_all):
    """Host glue: parameter folding/packing + edge_norm stats, then one pallas_call."""
    n = feat.shape[0]
    assert w_all.shape[0] == NUM_METAPATHS

    mask_f = adj_mask_all.astype(jnp.float32)                     # (M, N, N)

    # edge_norm per metapath: weight[e] = sum(counts) / (E * counts[e]).
    onehot = jax.nn.one_hot(etype_all, NUM_ETYPES, dtype=jnp.float32)     # (M, N, N, E)
    counts = jnp.einsum('mije,mij->me', onehot, mask_f)                   # (M, E)
    etw = counts.sum(axis=1, keepdims=True) / (
        NUM_ETYPES * jnp.where(counts > 0, counts, 1.0))                  # (M, E)

    # packed adjacency codes: 0 = no edge, e+1 = edge of type e (1 byte / edge in HBM).
    codes = ((etype_all + 1) * adj_mask_all.astype(jnp.int32)).astype(jnp.int8)

    # concat per-metapath fc_src weights along lanes -> one (Din, M*HF) bf16 MXU operand.
    w_cat = jnp.transpose(w_all, (1, 0, 2)).reshape(IN_FEATS, MHF).astype(jnp.bfloat16)

    # fold attn_l / attn_r into W (f32): walr[m*H+h, d] = sum_f W[m, d, h*F+f]*attn[m,h,f]
    w4 = w_all.reshape(NUM_METAPATHS, IN_FEATS, NUM_HEADS, OUT_FEATS)
    wl = jnp.einsum('mdhf,mhf->mhd', w4, attn_l_all).reshape(MH, IN_FEATS)
    wr = jnp.einsum('mdhf,mhf->mhd', w4, attn_r_all).reshape(MH, IN_FEATS)
    walr = jnp.concatenate([wl, wr], axis=0).astype(jnp.float32)          # (2*MH, Din)

    # hoisted (metapath, head) -> output-column selector (built once, resident).
    hsel = (jnp.arange(MHF)[None, None, :] // OUT_FEATS
            == jnp.arange(MH)[:, None, None]).astype(jnp.float32)         # (MH, 1, MHF)

    bias_cat = bias_all.reshape(1, MHF).astype(jnp.float32)

    out_flat = pl.pallas_call(
        iha_mgat_kernel,
        out_shape=jax.ShapeDtypeStruct((n, MHF), jnp.float32),
        grid_spec=pltpu.PrefetchScalarGridSpec(
            num_scalar_prefetch=0,
            grid=(1,),                        # whole problem in one step: nothing recomputed
            in_specs=[
                pl.BlockSpec((n, IN_FEATS), lambda i: (0, 0)),            # feat  (bf16)
                pl.BlockSpec((IN_FEATS, n), lambda i: (0, 0)),            # feat^T (f32)
                pl.BlockSpec((IN_FEATS, MHF), lambda i: (0, 0)),          # W concat (bf16)
                pl.BlockSpec((2 * MH, IN_FEATS), lambda i: (0, 0)),       # folded attn (f32)
                pl.BlockSpec((NUM_METAPATHS, n, n), lambda i: (0, 0, 0)), # int8 codes
                pl.BlockSpec(memory_space=pltpu.SMEM),                    # etype weights
                pl.BlockSpec((MH, 1, MHF), lambda i: (0, 0, 0)),          # column selector
                pl.BlockSpec((1, MHF), lambda i: (0, 0)),                 # bias concat
            ],
            out_specs=pl.BlockSpec((n, MHF), lambda i: (0, 0)),
        ),
        compiler_params=pltpu.CompilerParams(dimension_semantics=("arbitrary",)),
    )(feat.astype(jnp.bfloat16), feat.T.astype(jnp.float32), w_cat, walr,
      codes, etw.astype(jnp.float32), hsel, bias_cat)

    return out_flat.reshape(n, NUM_METAPATHS, NUM_HEADS, OUT_FEATS)


def mgat_reference_single(feat, w, attn_l, attn_r, bias, mask, etype):
    """Plain-JAX f32 reference of one MGATConv on the dense graph."""
    mask = mask.astype(jnp.float32)
    fsrc = (feat @ w).reshape(-1, NUM_HEADS, OUT_FEATS)
    el = (fsrc * attn_l[None]).sum(-1)                                    # (N, H)
    er = (fsrc * attn_r[None]).sum(-1)                                    # (N, H)
    counts = jnp.zeros((NUM_ETYPES,), jnp.float32).at[etype.reshape(-1)].add(mask.reshape(-1))
    etw = counts.sum() / (NUM_ETYPES * jnp.where(counts > 0, counts, 1.0))
    ew = etw[etype]                                                       # (N, N)
    logits = er[:, None, :] + el[None, :, :]                              # (Ndst, Nsrc, H)
    logits = logits * ew[:, :, None]
    logits = jnp.where(logits >= 0, logits, NEG_SLOPE * logits)
    logits = jnp.where(mask[:, :, None] > 0, logits, jnp.float32(-1e30))
    p = jnp.exp(logits - logits.max(axis=1, keepdims=True)) * mask[:, :, None]
    a = p / p.sum(axis=1, keepdims=True)
    rst = jnp.einsum('ijh,jhf->ihf', a, fsrc)
    return rst + bias.reshape(1, NUM_HEADS, OUT_FEATS)


if __name__ == "__main__":
    key = jax.random.PRNGKey(0)
    keys = jax.random.split(key, 1 + 3 * NUM_METAPATHS)
    feat = jax.random.normal(keys[0], (N_NODES, IN_FEATS), dtype=jnp.float32)

    gain = float(np.sqrt(2.0))
    w_std = gain * float(np.sqrt(2.0 / (IN_FEATS + HF)))
    a_std = gain * float(np.sqrt(2.0 / (NUM_HEADS * OUT_FEATS + OUT_FEATS)))

    w_l, al_l, ar_l = [], [], []
    for mp in range(NUM_METAPATHS):
        w_l.append(jax.random.normal(keys[1 + 3 * mp], (IN_FEATS, HF), jnp.float32) * w_std)
        al_l.append(jax.random.normal(keys[2 + 3 * mp], (NUM_HEADS, OUT_FEATS), jnp.float32) * a_std)
        ar_l.append(jax.random.normal(keys[3 + 3 * mp], (NUM_HEADS, OUT_FEATS), jnp.float32) * a_std)
    w_all = jnp.stack(w_l)
    attn_l_all = jnp.stack(al_l)
    attn_r_all = jnp.stack(ar_l)
    bias_all = jnp.zeros((NUM_METAPATHS, HF), jnp.float32)        # constant_(bias, 0)

    # Deterministic per-metapath graphs: self-loops + two ring offsets (distinct per
    # metapath), so every destination has in-edges and edge_softmax is well defined.
    adj_np = np.zeros((NUM_METAPATHS, N_NODES, N_NODES), np.float32)
    etype_np = np.zeros((NUM_METAPATHS, N_NODES, N_NODES), np.int32)
    base = np.add.outer(np.arange(N_NODES), np.arange(N_NODES))
    for mp in range(NUM_METAPATHS):
        for i in range(N_NODES):
            adj_np[mp, i, i] = 1.0
            adj_np[mp, i, (i + 1 + mp) % N_NODES] = 1.0
            adj_np[mp, i, (i + 5 + 2 * mp) % N_NODES] = 1.0
        etype_np[mp] = (base + mp) % NUM_ETYPES
    adj_mask_all = jnp.asarray(adj_np)
    etype_all = jnp.asarray(etype_np)

    out = iha_mgat_conv(feat, w_all, attn_l_all, attn_r_all, bias_all,
                        adj_mask_all, etype_all)
    out = jax.block_until_ready(out)

    ref = jnp.stack([mgat_reference_single(feat, w_all[mp], attn_l_all[mp], attn_r_all[mp],
                                           bias_all[mp], adj_mask_all[mp], etype_all[mp])
                     for mp in range(NUM_METAPATHS)], axis=1)     # (N, M, H, F)

    # 2e-2 tolerance covers the bf16 MXU operands + approx reciprocal; the score/exp path
    # is kept in f32 so the softmax itself matches the reference closely.
    np.testing.assert_allclose(np.asarray(out), np.asarray(ref), rtol=2e-2, atol=2e-2)
    assert out.shape == (N_NODES, NUM_METAPATHS, NUM_HEADS, OUT_FEATS)
    print("KERNEL_OK")
</pallas_src>

<mosaic_0001>
module attributes {stable_mosaic.version = 11 : i64} {
  func.func @iha_mgat_kernel(%arg0: i32, %arg1: memref<64x16xbf16, #tpu.memory_space<vmem>>, %arg2: memref<16x64xf32, #tpu.memory_space<vmem>>, %arg3: memref<16x128xbf16, #tpu.memory_space<vmem>>, %arg4: memref<32x16xf32, #tpu.memory_space<vmem>>, %arg5: memref<4x64x64xi8, #tpu.memory_space<vmem>>, %arg6: memref<4x3xf32, #tpu.memory_space<smem>>, %arg7: memref<16x1x128xf32, #tpu.memory_space<vmem>>, %arg8: memref<1x128xf32, #tpu.memory_space<vmem>>, %arg9: memref<64x128xf32, #tpu.memory_space<vmem>>) attributes {dimension_semantics = [#tpu.dimension_semantics<arbitrary>], iteration_bounds = array<i64: 1>, scalar_prefetch = 0 : i64, scratch_operands = 0 : i64, tpu.core_type = #tpu.core_type<tc>, window_params = [{pipeline_mode = #tpu.pipeline_mode<synchronous>, transform_indices = @transform_0, window_bounds = array<i64: 64, 16>}, {pipeline_mode = #tpu.pipeline_mode<synchronous>, transform_indices = @transform_1, window_bounds = array<i64: 16, 64>}, {pipeline_mode = #tpu.pipeline_mode<synchronous>, transform_indices = @transform_2, window_bounds = array<i64: 16, 128>}, {pipeline_mode = #tpu.pipeline_mode<synchronous>, transform_indices = @transform_3, window_bounds = array<i64: 32, 16>}, {pipeline_mode = #tpu.pipeline_mode<synchronous>, transform_indices = @transform_4, window_bounds = array<i64: 4, 64, 64>}, {transform_indices = @transform_5, window_bounds = array<i64: 4, 3>}, {pipeline_mode = #tpu.pipeline_mode<synchronous>, transform_indices = @transform_6, window_bounds = array<i64: 16, 1, 128>}, {pipeline_mode = #tpu.pipeline_mode<synchronous>, transform_indices = @transform_7, window_bounds = array<i64: 1, 128>}, {pipeline_mode = #tpu.pipeline_mode<synchronous>, transform_indices = @transform_8, window_bounds = array<i64: 64, 128>}]} {
    %c0 = arith.constant 0 : index
    %c0_0 = arith.constant 0 : index
    %0 = vector.load %arg1[%c0, %c0_0] : memref<64x16xbf16, #tpu.memory_space<vmem>>, vector<64x16xbf16>
    %c0_1 = arith.constant 0 : index
    %c0_2 = arith.constant 0 : index
    %1 = vector.load %arg3[%c0_1, %c0_2] : memref<16x128xbf16, #tpu.memory_space<vmem>>, vector<16x128xbf16>
    %cst = arith.constant dense<0.000000e+00> : vector<64x128xf32>
    %2 = tpu.matmul %0, %1, %cst {dimension_numbers = #tpu.dot_dimension_numbers<[1], [0], [0], [1], [0, 0, 1, 1], [], []>} : vector<64x16xbf16>, vector<16x128xbf16>, vector<64x128xf32> -> vector<64x128xf32>
    %c0_3 = arith.constant 0 : index
    %c0_4 = arith.constant 0 : index
    %3 = vector.load %arg4[%c0_3, %c0_4] : memref<32x16xf32, #tpu.memory_space<vmem>>, vector<32x16xf32>
    %c0_5 = arith.constant 0 : index
    %c0_6 = arith.constant 0 : index
    %4 = vector.load %arg2[%c0_5, %c0_6] : memref<16x64xf32, #tpu.memory_space<vmem>>, vector<16x64xf32>
    %cst_7 = arith.constant dense<0.000000e+00> : vector<32x64xf32>
    %5 = tpu.matmul %3, %4, %cst_7 {dimension_numbers = #tpu.dot_dimension_numbers<[1], [0], [0], [1], [0, 0, 1, 1], [], []>} : vector<32x16xf32>, vector<16x64xf32>, vector<32x64xf32> -> vector<32x64xf32>
    %6 = vector.extract_strided_slice %5 {offsets = [0, 0], sizes = [16, 64], strides = [1, 1]} : vector<32x64xf32> to vector<16x64xf32>
    %7 = vector.shape_cast %6 : vector<16x64xf32> to vector<16x1x64xf32>
    %8 = vector.extract_strided_slice %5 {offsets = [16, 0], sizes = [16, 64], strides = [1, 1]} : vector<32x64xf32> to vector<16x64xf32>
    %9 = vector.shape_cast %8 : vector<16x64xf32> to vector<16x64x1xf32>
    %c0_8 = arith.constant 0 : index
    %c0_9 = arith.constant 0 : index
    %c0_10 = arith.constant 0 : index
    %10 = vector.load %arg5[%c0_8, %c0_9, %c0_10] : memref<4x64x64xi8, #tpu.memory_space<vmem>>, vector<4x64x64xi8>
    %11 = arith.extsi %10 : vector<4x64x64xi8> to vector<4x64x64xi32>
    %12 = vector.extract_strided_slice %11 {offsets = [0, 0, 0], sizes = [1, 64, 64], strides = [1, 1, 1]} : vector<4x64x64xi32> to vector<1x64x64xi32>
    %13 = vector.shape_cast %12 : vector<1x64x64xi32> to vector<64x64xi32>
    %cst_11 = arith.constant 0.000000e+00 : f32
    %14 = vector.broadcast %cst_11 : f32 to vector<64x64xf32>
    %c3_i32 = arith.constant 3 : i32
    %15 = vector.broadcast %c3_i32 : i32 to vector<64x64xi32>
    %16 = arith.cmpi eq, %13, %15 : vector<64x64xi32>
    %c0_12 = arith.constant 0 : index
    %c2 = arith.constant 2 : index
    %17 = memref.load %arg6[%c0_12, %c2] : memref<4x3xf32, #tpu.memory_space<smem>>
    %18 = vector.broadcast %17 : f32 to vector<64x64xf32>
    %19 = arith.select %16, %18, %14 : vector<64x64xi1>, vector<64x64xf32>
    %c2_i32 = arith.constant 2 : i32
    %20 = vector.broadcast %c2_i32 : i32 to vector<64x64xi32>
    %21 = arith.cmpi eq, %13, %20 : vector<64x64xi32>
    %c0_13 = arith.constant 0 : index
    %c1 = arith.constant 1 : index
    %22 = memref.load %arg6[%c0_13, %c1] : memref<4x3xf32, #tpu.memory_space<smem>>
    %23 = vector.broadcast %22 : f32 to vector<64x64xf32>
    %24 = arith.select %21, %23, %19 : vector<64x64xi1>, vector<64x64xf32>
    %c1_i32 = arith.constant 1 : i32
    %25 = vector.broadcast %c1_i32 : i32 to vector<64x64xi32>
    %26 = arith.cmpi eq, %13, %25 : vector<64x64xi32>
    %c0_14 = arith.constant 0 : index
    %c0_15 = arith.constant 0 : index
    %27 = memref.load %arg6[%c0_14, %c0_15] : memref<4x3xf32, #tpu.memory_space<smem>>
    %28 = vector.broadcast %27 : f32 to vector<64x64xf32>
    %29 = arith.select %26, %28, %24 : vector<64x64xi1>, vector<64x64xf32>
    %c0_i32 = arith.constant 0 : i32
    %30 = vector.broadcast %c0_i32 : i32 to vector<64x64xi32>
    %31 = arith.cmpi sgt, %13, %30 : vector<64x64xi32>
    %32 = vector.extract_strided_slice %11 {offsets = [1, 0, 0], sizes = [1, 64, 64], strides = [1, 1, 1]} : vector<4x64x64xi32> to vector<1x64x64xi32>
    %33 = vector.shape_cast %32 : vector<1x64x64xi32> to vector<64x64xi32>
    %cst_16 = arith.constant 0.000000e+00 : f32
    %34 = vector.broadcast %cst_16 : f32 to vector<64x64xf32>
    %c3_i32_17 = arith.constant 3 : i32
    %35 = vector.broadcast %c3_i32_17 : i32 to vector<64x64xi32>
    %36 = arith.cmpi eq, %33, %35 : vector<64x64xi32>
    %c1_18 = arith.constant 1 : index
    %c2_19 = arith.constant 2 : index
    %37 = memref.load %arg6[%c1_18, %c2_19] : memref<4x3xf32, #tpu.memory_space<smem>>
    %38 = vector.broadcast %37 : f32 to vector<64x64xf32>
    %39 = arith.select %36, %38, %34 : vector<64x64xi1>, vector<64x64xf32>
    %c2_i32_20 = arith.constant 2 : i32
    %40 = vector.broadcast %c2_i32_20 : i32 to vector<64x64xi32>
    %41 = arith.cmpi eq, %33, %40 : vector<64x64xi32>
    %c1_21 = arith.constant 1 : index
    %c1_22 = arith.constant 1 : index
    %42 = memref.load %arg6[%c1_21, %c1_22] : memref<4x3xf32, #tpu.memory_space<smem>>
    %43 = vector.broadcast %42 : f32 to vector<64x64xf32>
    %44 = arith.select %41, %43, %39 : vector<64x64xi1>, vector<64x64xf32>
    %c1_i32_23 = arith.constant 1 : i32
    %45 = vector.broadcast %c1_i32_23 : i32 to vector<64x64xi32>
    %46 = arith.cmpi eq, %33, %45 : vector<64x64xi32>
    %c1_24 = arith.constant 1 : index
    %c0_25 = arith.constant 0 : index
    %47 = memref.load %arg6[%c1_24, %c0_25] : memref<4x3xf32, #tpu.memory_space<smem>>
    %48 = vector.broadcast %47 : f32 to vector<64x64xf32>
    %49 = arith.select %46, %48, %44 : vector<64x64xi1>, vector<64x64xf32>
    %c0_i32_26 = arith.constant 0 : i32
    %50 = vector.broadcast %c0_i32_26 : i32 to vector<64x64xi32>
    %51 = arith.cmpi sgt, %33, %50 : vector<64x64xi32>
    %52 = vector.extract_strided_slice %11 {offsets = [2, 0, 0], sizes = [1, 64, 64], strides = [1, 1, 1]} : vector<4x64x64xi32> to vector<1x64x64xi32>
    %53 = vector.shape_cast %52 : vector<1x64x64xi32> to vector<64x64xi32>
    %cst_27 = arith.constant 0.000000e+00 : f32
    %54 = vector.broadcast %cst_27 : f32 to vector<64x64xf32>
    %c3_i32_28 = arith.constant 3 : i32
    %55 = vector.broadcast %c3_i32_28 : i32 to vector<64x64xi32>
    %56 = arith.cmpi eq, %53, %55 : vector<64x64xi32>
    %c2_29 = arith.constant 2 : index
    %c2_30 = arith.constant 2 : index
    %57 = memref.load %arg6[%c2_29, %c2_30] : memref<4x3xf32, #tpu.memory_space<smem>>
    %58 = vector.broadcast %57 : f32 to vector<64x64xf32>
    %59 = arith.select %56, %58, %54 : vector<64x64xi1>, vector<64x64xf32>
    %c2_i32_31 = arith.constant 2 : i32
    %60 = vector.broadcast %c2_i32_31 : i32 to vector<64x64xi32>
    %61 = arith.cmpi eq, %53, %60 : vector<64x64xi32>
    %c2_32 = arith.constant 2 : index
    %c1_33 = arith.constant 1 : index
    %62 = memref.load %arg6[%c2_32, %c1_33] : memref<4x3xf32, #tpu.memory_space<smem>>
    %63 = vector.broadcast %62 : f32 to vector<64x64xf32>
    %64 = arith.select %61, %63, %59 : vector<64x64xi1>, vector<64x64xf32>
    %c1_i32_34 = arith.constant 1 : i32
    %65 = vector.broadcast %c1_i32_34 : i32 to vector<64x64xi32>
    %66 = arith.cmpi eq, %53, %65 : vector<64x64xi32>
    %c2_35 = arith.constant 2 : index
    %c0_36 = arith.constant 0 : index
    %67 = memref.load %arg6[%c2_35, %c0_36] : memref<4x3xf32, #tpu.memory_space<smem>>
    %68 = vector.broadcast %67 : f32 to vector<64x64xf32>
    %69 = arith.select %66, %68, %64 : vector<64x64xi1>, vector<64x64xf32>
    %c0_i32_37 = arith.constant 0 : i32
    %70 = vector.broadcast %c0_i32_37 : i32 to vector<64x64xi32>
    %71 = arith.cmpi sgt, %53, %70 : vector<64x64xi32>
    %72 = vector.extract_strided_slice %11 {offsets = [3, 0, 0], sizes = [1, 64, 64], strides = [1, 1, 1]} : vector<4x64x64xi32> to vector<1x64x64xi32>
    %73 = vector.shape_cast %72 : vector<1x64x64xi32> to vector<64x64xi32>
    %cst_38 = arith.constant 0.000000e+00 : f32
    %74 = vector.broadcast %cst_38 : f32 to vector<64x64xf32>
    %c3_i32_39 = arith.constant 3 : i32
    %75 = vector.broadcast %c3_i32_39 : i32 to vector<64x64xi32>
    %76 = arith.cmpi eq, %73, %75 : vector<64x64xi32>
    %c3 = arith.constant 3 : index
    %c2_40 = arith.constant 2 : index
    %77 = memref.load %arg6[%c3, %c2_40] : memref<4x3xf32, #tpu.memory_space<smem>>
    %78 = vector.broadcast %77 : f32 to vector<64x64xf32>
    %79 = arith.select %76, %78, %74 : vector<64x64xi1>, vector<64x64xf32>
    %c2_i32_41 = arith.constant 2 : i32
    %80 = vector.broadcast %c2_i32_41 : i32 to vector<64x64xi32>
    %81 = arith.cmpi eq, %73, %80 : vector<64x64xi32>
    %c3_42 = arith.constant 3 : index
    %c1_43 = arith.constant 1 : index
    %82 = memref.load %arg6[%c3_42, %c1_43] : memref<4x3xf32, #tpu.memory_space<smem>>
    %83 = vector.broadcast %82 : f32 to vector<64x64xf32>
    %84 = arith.select %81, %83, %79 : vector<64x64xi1>, vector<64x64xf32>
    %c1_i32_44 = arith.constant 1 : i32
    %85 = vector.broadcast %c1_i32_44 : i32 to vector<64x64xi32>
    %86 = arith.cmpi eq, %73, %85 : vector<64x64xi32>
    %c3_45 = arith.constant 3 : index
    %c0_46 = arith.constant 0 : index
    %87 = memref.load %arg6[%c3_45, %c0_46] : memref<4x3xf32, #tpu.memory_space<smem>>
    %88 = vector.broadcast %87 : f32 to vector<64x64xf32>
    %89 = arith.select %86, %88, %84 : vector<64x64xi1>, vector<64x64xf32>
    %c0_i32_47 = arith.constant 0 : i32
    %90 = vector.broadcast %c0_i32_47 : i32 to vector<64x64xi32>
    %91 = arith.cmpi sgt, %73, %90 : vector<64x64xi32>
    %92 = vector.shape_cast %29 : vector<64x64xf32> to vector<1x64x64xf32>
    %93 = vector.shape_cast %29 : vector<64x64xf32> to vector<1x64x64xf32>
    %94 = vector.shape_cast %29 : vector<64x64xf32> to vector<1x64x64xf32>
    %95 = vector.shape_cast %29 : vector<64x64xf32> to vector<1x64x64xf32>
    %96 = vector.shape_cast %49 : vector<64x64xf32> to vector<1x64x64xf32>
    %97 = vector.shape_cast %49 : vector<64x64xf32> to vector<1x64x64xf32>
    %98 = vector.shape_cast %49 : vector<64x64xf32> to vector<1x64x64xf32>
    %99 = vector.shape_cast %49 : vector<64x64xf32> to vector<1x64x64xf32>
    %100 = vector.shape_cast %69 : vector<64x64xf32> to vector<1x64x64xf32>
    %101 = vector.shape_cast %69 : vector<64x64xf32> to vector<1x64x64xf32>
    %102 = vector.shape_cast %69 : vector<64x64xf32> to vector<1x64x64xf32>
    %103 = vector.shape_cast %69 : vector<64x64xf32> to vector<1x64x64xf32>
    %104 = vector.shape_cast %89 : vector<64x64xf32> to vector<1x64x64xf32>
    %105 = vector.shape_cast %89 : vector<64x64xf32> to vector<1x64x64xf32>
    %106 = vector.shape_cast %89 : vector<64x64xf32> to vector<1x64x64xf32>
    %107 = vector.shape_cast %89 : vector<64x64xf32> to vector<1x64x64xf32>
    %108 = tpu.concatenate %92, %93, %94, %95, %96, %97, %98, %99, %100, %101, %102, %103, %104, %105, %106, %107 in 0 : vector<1x64x64xf32>, vector<1x64x64xf32>, vector<1x64x64xf32>, vector<1x64x64xf32>, vector<1x64x64xf32>, vector<1x64x64xf32>, vector<1x64x64xf32>, vector<1x64x64xf32>, vector<1x64x64xf32>, vector<1x64x64xf32>, vector<1x64x64xf32>, vector<1x64x64xf32>, vector<1x64x64xf32>, vector<1x64x64xf32>, vector<1x64x64xf32>, vector<1x64x64xf32> -> vector<16x64x64xf32>
    %109 = vector.shape_cast %31 : vector<64x64xi1> to vector<1x64x64xi1>
    %110 = vector.shape_cast %31 : vector<64x64xi1> to vector<1x64x64xi1>
    %111 = vector.shape_cast %31 : vector<64x64xi1> to vector<1x64x64xi1>
    %112 = vector.shape_cast %31 : vector<64x64xi1> to vector<1x64x64xi1>
    %113 = vector.shape_cast %51 : vector<64x64xi1> to vector<1x64x64xi1>
    %114 = vector.shape_cast %51 : vector<64x64xi1> to vector<1x64x64xi1>
    %115 = vector.shape_cast %51 : vector<64x64xi1> to vector<1x64x64xi1>
    %116 = vector.shape_cast %51 : vector<64x64xi1> to vector<1x64x64xi1>
    %117 = vector.shape_cast %71 : vector<64x64xi1> to vector<1x64x64xi1>
    %118 = vector.shape_cast %71 : vector<64x64xi1> to vector<1x64x64xi1>
    %119 = vector.shape_cast %71 : vector<64x64xi1> to vector<1x64x64xi1>
    %120 = vector.shape_cast %71 : vector<64x64xi1> to vector<1x64x64xi1>
    %121 = vector.shape_cast %91 : vector<64x64xi1> to vector<1x64x64xi1>
    %122 = vector.shape_cast %91 : vector<64x64xi1> to vector<1x64x64xi1>
    %123 = vector.shape_cast %91 : vector<64x64xi1> to vector<1x64x64xi1>
    %124 = vector.shape_cast %91 : vector<64x64xi1> to vector<1x64x64xi1>
    %125 = tpu.concatenate %109, %110, %111, %112, %113, %114, %115, %116, %117, %118, %119, %120, %121, %122, %123, %124 in 0 : vector<1x64x64xi1>, vector<1x64x64xi1>, vector<1x64x64xi1>, vector<1x64x64xi1>, vector<1x64x64xi1>, vector<1x64x64xi1>, vector<1x64x64xi1>, vector<1x64x64xi1>, vector<1x64x64xi1>, vector<1x64x64xi1>, vector<1x64x64xi1>, vector<1x64x64xi1>, vector<1x64x64xi1>, vector<1x64x64xi1>, vector<1x64x64xi1>, vector<1x64x64xi1> -> vector<16x64x64xi1>
    %126 = vector.broadcast %7 : vector<16x1x64xf32> to vector<16x64x64xf32>
    %127 = vector.broadcast %9 : vector<16x64x1xf32> to vector<16x64x64xf32>
    %128 = arith.addf %126, %127 : vector<16x64x64xf32>
    %129 = arith.mulf %128, %108 : vector<16x64x64xf32>
    %cst_48 = arith.constant 2.000000e-01 : f32
    %130 = vector.broadcast %cst_48 : f32 to vector<16x64x64xf32>
    %131 = arith.mulf %130, %129 : vector<16x64x64xf32>
    %132 = arith.maximumf %129, %131 : vector<16x64x64xf32>
    %cst_49 = arith.constant -1.000000e+30 : f32
    %133 = vector.broadcast %cst_49 : f32 to vector<16x64x64xf32>
    %134 = arith.select %125, %132, %133 : vector<16x64x64xi1>, vector<16x64x64xf32>
    %cst_50 = arith.constant dense<0xFF800000> : vector<16x64xf32>
    %135 = vector.multi_reduction <maximumf>, %134, %cst_50 [2] : vector<16x64x64xf32> to vector<16x64xf32>
    %136 = vector.shape_cast %135 : vector<16x64xf32> to vector<16x64x1xf32>
    %137 = vector.broadcast %136 : vector<16x64x1xf32> to vector<16x64x64xf32>
    %138 = arith.subf %134, %137 : vector<16x64x64xf32>
    %139 = math.exp %138 : vector<16x64x64xf32>
    %cst_51 = arith.constant dense<0.000000e+00> : vector<16x64xf32>
    %140 = vector.multi_reduction <add>, %139, %cst_51 [2] : vector<16x64x64xf32> to vector<16x64xf32>
    %141 = vector.shape_cast %140 : vector<16x64xf32> to vector<16x64x1xf32>
    %142 = vector.shape_cast %139 : vector<16x64x64xf32> to vector<1024x64xf32>
    %143 = arith.truncf %142 : vector<1024x64xf32> to vector<1024x64xbf16>
    %144 = arith.truncf %2 : vector<64x128xf32> to vector<64x128xbf16>
    %cst_52 = arith.constant dense<0.000000e+00> : vector<1024x128xf32>
    %145 = tpu.matmul %143, %144, %cst_52 {dimension_numbers = #tpu.dot_dimension_numbers<[1], [0], [0], [1], [0, 0, 1, 1], [], []>} : vector<1024x64xbf16>, vector<64x128xbf16>, vector<1024x128xf32> -> vector<1024x128xf32>
    %146 = vector.shape_cast %145 : vector<1024x128xf32> to vector<16x64x128xf32>
    %147 = tpu.reciprocal %141 {approx = true} : vector<16x64x1xf32> -> vector<16x64x1xf32>
    %148 = vector.broadcast %147 : vector<16x64x1xf32> to vector<16x64x128xf32>
    %149 = arith.mulf %146, %148 : vector<16x64x128xf32>
    %c0_53 = arith.constant 0 : index
    %c0_54 = arith.constant 0 : index
    %c0_55 = arith.constant 0 : index
    %150 = vector.load %arg7[%c0_53, %c0_54, %c0_55] : memref<16x1x128xf32, #tpu.memory_space<vmem>>, vector<16x1x128xf32>
    %151 = vector.broadcast %150 : vector<16x1x128xf32> to vector<16x64x128xf32>
    %152 = arith.mulf %149, %151 : vector<16x64x128xf32>
    %cst_56 = arith.constant dense<0.000000e+00> : vector<64x128xf32>
    %153 = vector.multi_reduction <add>, %152, %cst_56 [0] : vector<16x64x128xf32> to vector<64x128xf32>
    %c0_57 = arith.constant 0 : index
    %c0_58 = arith.constant 0 : index
    %154 = vector.load %arg8[%c0_57, %c0_58] : memref<1x128xf32, #tpu.memory_space<vmem>>, vector<1x128xf32>
    %155 = vector.broadcast %154 : vector<1x128xf32> to vector<64x128xf32>
    %156 = arith.addf %153, %155 : vector<64x128xf32>
    %c0_59 = arith.constant 0 : index
    %c0_60 = arith.constant 0 : index
    %157 = vector.load %arg9[%c0_59, %c0_60] : memref<64x128xf32, #tpu.memory_space<vmem>>, vector<64x128xf32>
    tpu.vector_store %arg9[%c0_59, %c0_60], %156 {strides = array<i32>} : memref<64x128xf32, #tpu.memory_space<vmem>>, vector<64x128xf32>,
    return
  }
  func.func @transform_0(%arg0: i32) -> (i32, i32) {
    %c0_i32 = arith.constant 0 : i32
    %c0_i32_0 = arith.constant 0 : i32
    %c0_i32_1 = arith.constant 0 : i32
    return %c0_i32, %c0_i32_0 : i32, i32
  }
  func.func @transform_1(%arg0: i32) -> (i32, i32) {
    %c0_i32 = arith.constant 0 : i32
    %c0_i32_0 = arith.constant 0 : i32
    %c0_i32_1 = arith.constant 0 : i32
    return %c0_i32, %c0_i32_0 : i32, i32
  }
  func.func @transform_2(%arg0: i32) -> (i32, i32) {
    %c0_i32 = arith.constant 0 : i32
    %c0_i32_0 = arith.constant 0 : i32
    %c0_i32_1 = arith.constant 0 : i32
    return %c0_i32, %c0_i32_0 : i32, i32
  }
  func.func @transform_3(%arg0: i32) -> (i32, i32) {
    %c0_i32 = arith.constant 0 : i32
    %c0_i32_0 = arith.constant 0 : i32
    %c0_i32_1 = arith.constant 0 : i32
    return %c0_i32, %c0_i32_0 : i32, i32
  }
  func.func @transform_4(%arg0: i32) -> (i32, i32, i32) {
    %c0_i32 = arith.constant 0 : i32
    %c0_i32_0 = arith.constant 0 : i32
    %c0_i32_1 = arith.constant 0 : i32
    %c0_i32_2 = arith.constant 0 : i32
    return %c0_i32, %c0_i32_0, %c0_i32_1 : i32, i32, i32
  }
  func.func @transform_5(%arg0: i32) -> (i32, i32) {
    %c0_i32 = arith.constant 0 : i32
    %c0_i32_0 = arith.constant 0 : i32
    %c0_i32_1 = arith.constant 0 : i32
    return %c0_i32, %c0_i32_0 : i32, i32
  }
  func.func @transform_6(%arg0: i32) -> (i32, i32, i32) {
    %c0_i32 = arith.constant 0 : i32
    %c0_i32_0 = arith.constant 0 : i32
    %c0_i32_1 = arith.constant 0 : i32
    %c0_i32_2 = arith.constant 0 : i32
    return %c0_i32, %c0_i32_0, %c0_i32_1 : i32, i32, i32
  }
  func.func @transform_7(%arg0: i32) -> (i32, i32) {
    %c0_i32 = arith.constant 0 : i32
    %c0_i32_0 = arith.constant 0 : i32
    %c0_i32_1 = arith.constant 0 : i32
    return %c0_i32, %c0_i32_0 : i32, i32
  }
  func.func @transform_8(%arg0: i32) -> (i32, i32) {
    %c0_i32 = arith.constant 0 : i32
    %c0_i32_0 = arith.constant 0 : i32
    %c0_i32_1 = arith.constant 0 : i32
    return %c0_i32, %c0_i32_0 : i32, i32
  }
}

</mosaic_0001>

<llo_original>
// kernel: tpu_custom_call.1
$region0: #{tpu_custom_call.1}
  #allocation0 [shape = 'u32[]', space=smem, size = 0x4, offset = 0x4, fixed_abs, tag = 'smem constant byte address 0x4 - core index']
  #allocation1 [shape = 'u32[144,128]{1,0:T(1,128)}', space=vmem, size = 0x12000, scoped, tag = 'internal scratch']
  %s0 = inlined_call_operand.vmem [shape: bf16[64,16], index: 0, kind: input, shape index: {}]
  %s1 = inlined_call_operand.vmem [shape: f32[16,64], index: 1, kind: input, shape index: {}]
  %s2 = inlined_call_operand.hbm [shape: bf16[16,128], index: 2, kind: input, shape index: {}]
  %s3 = inlined_call_operand.vmem [shape: f32[32,16], index: 3, kind: input, shape index: {}]
  %s4 = inlined_call_operand.vmem [shape: s8[4,64,64], index: 4, kind: input, shape index: {}]
  %s5 = inlined_call_operand.vmem [shape: f32[4,3], index: 5, kind: input, shape index: {}]
  %s6 = inlined_call_operand.vmem [shape: f32[16,1,128], index: 6, kind: input, shape index: {}]
  %s7 = inlined_call_operand.vmem [shape: f32[1,128], index: 7, kind: input, shape index: {}]
  %s8 = inlined_call_operand.hbm [shape: f32[64,128], index: 8, kind: output, shape index: {}]
  %s9 = sld [smem:[#allocation0]]
  $region50: #{tpu_custom_call.1} parent=0
    _
  %s11 = ssub.s32 1, %s9
  %s12 = scalar_select 0, %s11, %s9
  $region1: #{tpu_custom_call.1} parent=0
    #allocation2 [shape = 'u8[4096]{0}', space=vmem, size = 0x1000, scoped, tag = 'input window, operand 2, single buffered']
    #allocation3 [shape = 's32[1]{0}', space=sflag, size = 0x4, scoped, tag = 'scoped memory for tpu_custom_call.1']
    #allocation4 [shape = 's32[1]{0}', space=sflag, size = 0x4, scoped, tag = 'scoped memory for tpu_custom_call.1']
    #allocation5 [shape = 's32[1]{0}', space=sflag, size = 0x4, scoped, tag = 'scoped memory for tpu_custom_call.1']
    #allocation6 [shape = 'u8[2048]{0}', space=smem, size = 0x800, scoped, tag = 'input window, operand 5, single buffered']
    #allocation7 [shape = 'u8[32768]{0}', space=vmem, size = 0x8000, scoped, tag = 'output window, operand 0, single buffered']
    %13 = vsyncpa [#allocation3], 0
    %14 = vsyncpa [#allocation5], 0
    %15 = vsyncpa [#allocation4], 0
    // Predicated region
    $region2: #{tpu_custom_call.1} parent=1 // pred_check
      _
    $region3: #{tpu_custom_call.1} parent=1 // pred_check_branch
      %17 = sbr.rel (0) target = $region5
    $region4: #{tpu_custom_call.1} parent=1 // pred_region
      _
    $region5: #{tpu_custom_call.1} parent=1 // pred_fallthru
      _
    // Predicated region
    $region6: #{tpu_custom_call.1} parent=1 // pred_check
      _
    $region7: #{tpu_custom_call.1} parent=1 // pred_check_branch
      %19 = sbr.rel (0) target = $region9
    $region8: #{tpu_custom_call.1} parent=1 // pred_region
      _
    $region9: #{tpu_custom_call.1} parent=1 // pred_fallthru
      _
    // Predicated region
    $region10: #{tpu_custom_call.1} parent=1 // pred_check
      _
    $region11: #{tpu_custom_call.1} parent=1 // pred_check_branch
      %21 = sbr.rel (0) target = $region13
    $region12: #{tpu_custom_call.1} parent=1 // pred_region
      %s23 = ssub.s32 128, 128
      %24 = vsyncadd [#allocation3], %s23
      %s25 = sshll.u32 [#allocation2], 4
      %s26 = int_to_ptr.vmem [resolvable:$true] %s25
      %31 = dma.hbm_to_vmem [thread:$0]  %s2, 128, %s26, [#allocation3], 64, 64, 4
    $region13: #{tpu_custom_call.1} parent=1 // pred_fallthru
      _
    // Predicated region
    $region14: #{tpu_custom_call.1} parent=1 // pred_check
      _
    $region15: #{tpu_custom_call.1} parent=1 // pred_check_branch
      %33 = sbr.rel (0) target = $region17
    $region16: #{tpu_custom_call.1} parent=1 // pred_region
      _
    $region17: #{tpu_custom_call.1} parent=1 // pred_fallthru
      _
    // Predicated region
    $region18: #{tpu_custom_call.1} parent=1 // pred_check
      _
    $region19: #{tpu_custom_call.1} parent=1 // pred_check_branch
      %35 = sbr.rel (0) target = $region21
    $region20: #{tpu_custom_call.1} parent=1 // pred_region
      _
    $region21: #{tpu_custom_call.1} parent=1 // pred_fallthru
      _
    // Predicated region
    $region22: #{tpu_custom_call.1} parent=1 // pred_check
      _
    $region23: #{tpu_custom_call.1} parent=1 // pred_check_branch
      %37 = sbr.rel (0) target = $region25
    $region24: #{tpu_custom_call.1} parent=1 // pred_region
      %s39 = ssub.s32 64, 64
      %40 = vsyncadd [#allocation5], %s39
      %s42 = sshll.u32 %s5, 4
      %s43 = int_to_ptr.vmem [resolvable:$true] %s42
      %45 = dma.vmem_to_smem %s43, 64, [#allocation6], [#allocation5]
    $region25: #{tpu_custom_call.1} parent=1 // pred_fallthru
      _
    // Predicated region
    $region26: #{tpu_custom_call.1} parent=1 // pred_check
      _
    $region27: #{tpu_custom_call.1} parent=1 // pred_check_branch
      %47 = sbr.rel (0) target = $region29
    $region28: #{tpu_custom_call.1} parent=1 // pred_region
      _
    $region29: #{tpu_custom_call.1} parent=1 // pred_fallthru
      _
    // Predicated region
    $region30: #{tpu_custom_call.1} parent=1 // pred_check
      _
    $region31: #{tpu_custom_call.1} parent=1 // pred_check_branch
      %49 = sbr.rel (0) target = $region33
    $region32: #{tpu_custom_call.1} parent=1 // pred_region
      _
    $region33: #{tpu_custom_call.1} parent=1 // pred_fallthru
      _
    // Predicated region
    $region34: #{tpu_custom_call.1} parent=1 // pred_check
      _
    $region35: #{tpu_custom_call.1} parent=1 // pred_check_branch
      %51 = sbr.rel (0) target = $region37
    $region36: #{tpu_custom_call.1} parent=1 // pred_region
      %52 = dma.done [#allocation3], 128
    $region37: #{tpu_custom_call.1} parent=1 // pred_fallthru
      _
    // Predicated region
    $region38: #{tpu_custom_call.1} parent=1 // pred_check
      _
    $region39: #{tpu_custom_call.1} parent=1 // pred_check_branch
      %54 = sbr.rel (0) target = $region41
    $region40: #{tpu_custom_call.1} parent=1 // pred_region
      %55 = dma.done [#allocation5], 64
    $region41: #{tpu_custom_call.1} parent=1 // pred_fallthru
      _
    %56 = sfence
    %v58 = vld [vmem:[%s0] sm:$0xf]
    %v59 = vld [vmem:[%s0 + $0x4] sm:$0xf]
    %v60 = vld [vmem:[%s0 + $0x8] sm:$0xf]
    %v61 = vld [vmem:[%s0 + $0xc] sm:$0xf]
    %v62 = vld [vmem:[%s0 + $0x10] sm:$0xf]
    %v63 = vld [vmem:[%s0 + $0x14] sm:$0xf]
    %v64 = vld [vmem:[%s0 + $0x18] sm:$0xf]
    %v65 = vld [vmem:[%s0 + $0x1c] sm:$0xf]
    %v66 = vld [vmem:[#allocation2] sm:$0xf]
    %v67 = vld [vmem:[#allocation2 + $0x4] sm:$0xf]
    %v76 = vunpack.c.l.b16 %v58
    %v77 = vunpack.c.l.b16 %v59
    %v78 = vunpack.c.l.b16 %v60
    %v79 = vunpack.c.l.b16 %v61
    %v80 = vunpack.c.l.b16 %v62
    %v81 = vunpack.c.l.b16 %v63
    %v82 = vunpack.c.l.b16 %v64
    %v83 = vunpack.c.l.b16 %v65
    %v84 = vpack.c.b16 %v77, %v76
    %v85 = vpack.c.b16 %v79, %v78
    %v86 = vpack.c.b16 %v81, %v80
    %v87 = vpack.c.b16 %v83, %v82
    %v90 = vunpack.c.l.b16 %v66
    %v91 = vunpack.c.l.b16 %v67
    %v92 = vpack.c.b16 %v91, %v90
    %vm94 = vcmask 130048
    %v96 = vsel %vm94, %v84, 0
    %v99 = vsel %vm94, %v85, 0
    %v102 = vsel %vm94, %v86, 0
    %v105 = vsel %vm94, %v87, 0
    %107 = vmatprep.subr.bf16.mxu0 0
    %108 = vmatpush1.bf16.msra.mxu0 %v92
    %109 = vmatprep.subr.bf16.mxu0 0
    %110 = vmatpush1.bf16.msra.mxu0 0
    %111 = vmatprep.subr.bf16.mxu0 0
    %112 = vmatpush1.bf16.msra.mxu0 0
    %113 = vmatprep.subr.bf16.mxu0 0
    %114 = vmatpush1.bf16.msra.mxu0 0
    %115 = vmatprep.subr.bf16.mxu0 0
    %116 = vmatpush1.bf16.msra.mxu0 0
    %117 = vmatprep.subr.bf16.mxu0 0
    %118 = vmatpush1.bf16.msra.mxu0 0
    %119 = vmatprep.subr.bf16.mxu0 0
    %120 = vmatpush1.bf16.msra.mxu0 0
    %121 = vmatprep.subr.bf16.mxu0 0
    %122 = vmatpush1.bf16.msra.mxu0 0
    %123 = vmatprep.subr.bf16.mxu0 0
    %124 = vmatpush1.bf16.msra.mxu0 0
    %125 = vmatprep.subr.bf16.mxu0 0
    %126 = vmatpush1.bf16.msra.mxu0 0
    %127 = vmatprep.subr.bf16.mxu0 0
    %128 = vmatpush1.bf16.msra.mxu0 0
    %129 = vmatprep.subr.bf16.mxu0 0
    %130 = vmatpush1.bf16.msra.mxu0 0
    %131 = vmatprep.subr.bf16.mxu0 0
    %132 = vmatpush1.bf16.msra.mxu0 0
    %133 = vmatprep.subr.bf16.mxu0 0
    %134 = vmatpush1.bf16.msra.mxu0 0
    %135 = vmatprep.subr.bf16.mxu0 0
    %136 = vmatpush1.bf16.msra.mxu0 0
    %137 = vmatprep.subr.bf16.mxu0 0
    %138 = vmatpush1.bf16.msra.mxu0 0
    %139 = vmatprep.mubr.bf16.mxu0 0
    %140 = vmatmul.mubr.bf16.gmra.mrb[0].mxu0 %v96
    %v141 = vpop.f32.mrb[0].mxu0
    %v142 = vadd.f32 0.0, %v141
    %v143 = vpop.f32.mrb[0].mxu0
    %v144 = vpop.f32.mrb[0].mxu0
    %v145 = vadd.f32 0.0, %v144
    %v146 = vpop.f32.mrb[0].mxu0
    %147 = vmatprep.mubr.bf16.mxu0 0
    %148 = vmatmul.mubr.bf16.gmra.mrb[0].mxu0 %v99
    %v149 = vpop.f32.mrb[0].mxu0
    %v150 = vadd.f32 0.0, %v149
    %v151 = vpop.f32.mrb[0].mxu0
    %v152 = vpop.f32.mrb[0].mxu0
    %v153 = vadd.f32 0.0, %v152
    %v154 = vpop.f32.mrb[0].mxu0
    %155 = vmatprep.mubr.bf16.mxu0 0
    %156 = vmatmul.mubr.bf16.gmra.mrb[0].mxu0 %v102
    %v157 = vpop.f32.mrb[0].mxu0
    %v158 = vadd.f32 0.0, %v157
    %v159 = vpop.f32.mrb[0].mxu0
    %v160 = vpop.f32.mrb[0].mxu0
    %v161 = vadd.f32 0.0, %v160
    %v162 = vpop.f32.mrb[0].mxu0
    %163 = vmatprep.mubr.bf16.mxu0 0
    %164 = vmatmul.mubr.bf16.gmra.mrb[0].mxu0 %v105
    %v165 = vpop.f32.mrb[0].mxu0
    %v166 = vadd.f32 0.0, %v165
    %v167 = vpop.f32.mrb[0].mxu0
    %v168 = vpop.f32.mrb[0].mxu0
    %v169 = vadd.f32 0.0, %v168
    %v170 = vpop.f32.mrb[0].mxu0
    %171 = vdwg.mxu0
    %v172 = vld [vmem:[%s3] sm:$0xff]
    %v173 = vld [vmem:[%s3 + $0x8] sm:$0xff]
    %v174 = vld [vmem:[%s3 + $0x10] sm:$0xff]
    %v175 = vld [vmem:[%s3 + $0x18] sm:$0xff]
    %v176 = vld [vmem:[%s1] sm:$0xff]
    %v177 = vld [vmem:[%s1 + $0x8] sm:$0xff]
    %v179 = vsel %vm94, %v172, 0
    %v182 = vsel %vm94, %v173, 0
    %v185 = vsel %vm94, %v174, 0
    %v188 = vsel %vm94, %v175, 0
    %190 = vmatprep.subr.mxu0 0.0
    %191 = vmatpush1.msra.mxu0 %v176
    %192 = vmatprep.subr.mxu0 0.0
    %193 = vmatpush1.msra.mxu0 %v177
    %194 = vmatprep.subr.mxu0 0.0
    %195 = vmatpush1.msra.mxu0 0.0
    %196 = vmatprep.subr.mxu0 0.0
    %197 = vmatpush1.msra.mxu0 0.0
    %198 = vmatprep.subr.mxu0 0.0
    %199 = vmatpush1.msra.mxu0 0.0
    %200 = vmatprep.subr.mxu0 0.0
    %201 = vmatpush1.msra.mxu0 0.0
    %202 = vmatprep.subr.mxu0 0.0
    %203 = vmatpush1.msra.mxu0 0.0
    %204 = vmatprep.subr.mxu0 0.0
    %205 = vmatpush1.msra.mxu0 0.0
    %206 = vmatprep.subr.mxu0 0.0
    %207 = vmatpush1.msra.mxu0 0.0
    %208 = vmatprep.subr.mxu0 0.0
    %209 = vmatpush1.msra.mxu0 0.0
    %210 = vmatprep.subr.mxu0 0.0
    %211 = vmatpush1.msra.mxu0 0.0
    %212 = vmatprep.subr.mxu0 0.0
    %213 = vmatpush1.msra.mxu0 0.0
    %214 = vmatprep.subr.mxu0 0.0
    %215 = vmatpush1.msra.mxu0 0.0
    %216 = vmatprep.subr.mxu0 0.0
    %217 = vmatpush1.msra.mxu0 0.0
    %218 = vmatprep.subr.mxu0 0.0
    %219 = vmatpush1.msra.mxu0 0.0
    %220 = vmatprep.subr.mxu0 0.0
    %221 = vmatpush1.msra.mxu0 0.0
    %222 = vmatprep.subr.mxu0 0.0
    %223 = vmatpush1.msra.mxu0 0.0
    %224 = vmatprep.subr.mxu0 0.0
    %225 = vmatpush1.msra.mxu0 0.0
    %226 = vmatprep.subr.mxu0 0.0
    %227 = vmatpush1.msra.mxu0 0.0
    %228 = vmatprep.subr.mxu0 0.0
    %229 = vmatpush1.msra.mxu0 0.0
    %230 = vmatprep.subr.mxu0 0.0
    %231 = vmatpush1.msra.mxu0 0.0
    %232 = vmatprep.subr.mxu0 0.0
    %233 = vmatpush1.msra.mxu0 0.0
    %234 = vmatprep.subr.mxu0 0.0
    %235 = vmatpush1.msra.mxu0 0.0
    %236 = vmatprep.subr.mxu0 0.0
    %237 = vmatpush1.msra.mxu0 0.0
    %238 = vmatprep.subr.mxu0 0.0
    %239 = vmatpush1.msra.mxu0 0.0
    %240 = vmatprep.subr.mxu0 0.0
    %241 = vmatpush1.msra.mxu0 0.0
    %242 = vmatprep.subr.mxu0 0.0
    %243 = vmatpush1.msra.mxu0 0.0
    %244 = vmatprep.subr.mxu0 0.0
    %245 = vmatpush1.msra.mxu0 0.0
    %246 = vmatprep.subr.mxu0 0.0
    %247 = vmatpush1.msra.mxu0 0.0
    %248 = vmatprep.subr.mxu0 0.0
    %249 = vmatpush1.msra.mxu0 0.0
    %250 = vmatprep.subr.mxu0 0.0
    %251 = vmatpush1.msra.mxu0 0.0
    %252 = vmatprep.subr.mxu0 0.0
    %253 = vmatpush1.msra.mxu0 0.0
    %254 = vmatprep.mubr.f32.mxu0 0.0
    %255 = vmatmul.mubr.f32.gmra.mrb[0].mxu0 %v179
    %v256 = vpop.f32.mrb[0].mxu0
    %v257 = vadd.f32 0.0, %v256
    %v258 = vpop.f32.mrb[0].mxu0
    %259 = vmatprep.mubr.f32.mxu0 0.0
    %260 = vmatmul.mubr.f32.gmra.mrb[0].mxu0 %v182
    %v261 = vpop.f32.mrb[0].mxu0
    %v262 = vadd.f32 0.0, %v261
    %v263 = vpop.f32.mrb[0].mxu0
    %264 = vmatprep.mubr.f32.mxu0 0.0
    %265 = vmatmul.mubr.f32.gmra.mrb[0].mxu0 %v185
    %v266 = vpop.f32.mrb[0].mxu0
    %v267 = vadd.f32 0.0, %v266
    %v268 = vpop.f32.mrb[0].mxu0
    %269 = vmatprep.mubr.f32.mxu0 0.0
    %270 = vmatmul.mubr.f32.gmra.mrb[0].mxu0 %v188
    %v271 = vpop.f32.mrb[0].mxu0
    %v272 = vadd.f32 0.0, %v271
    %v273 = vpop.f32.mrb[0].mxu0
    %274 = vdwg.mxu0
    %v277 = vcombine.high %v257, %v257
    %v279 = vunpack.c.l.s4 1966171168
    %v280 = vunpack.c.0.s8 %v279
    %v281 = vlaneseq
    %v282 = vshrl.u32 %v281, 7
    %v283 = vsub.s32 %v280, %v282
    %v284 = vrot.slane %v257, %v283
    %v286 = vunpack.c.l.s4 1966171168
    %v287 = vunpack.c.0.s8 %v286
    %v288 = vlaneseq
    %v289 = vshrl.u32 %v288, 7
    %v290 = vsub.s32 %v287, %v289
    %v291 = vrot.slane %v277, %v290
    %v292 = vcombine.high %v284, %v284
    %v293 = vcombine.high %v291, %v291
    %v295 = vunpack.c.l.s4 1966171168
    %v296 = vunpack.c.0.s8 %v295
    %v297 = vlaneseq
    %v298 = vshrl.u32 %v297, 7
    %v299 = vsub.s32 %v296, %v298
    %v300 = vrot.slane %v284, %v299
    %v302 = vunpack.c.l.s4 1966171168
    %v303 = vunpack.c.0.s8 %v302
    %v304 = vlaneseq
    %v305 = vshrl.u32 %v304, 7
    %v306 = vsub.s32 %v303, %v305
    %v307 = vrot.slane %v291, %v306
    %v309 = vunpack.c.l.s4 1966171168
    %v310 = vunpack.c.0.s8 %v309
    %v311 = vlaneseq
    %v312 = vshrl.u32 %v311, 7
    %v313 = vsub.s32 %v310, %v312
    %v314 = vrot.slane %v292, %v313
    %v316 = vunpack.c.l.s4 1966171168
    %v317 = vunpack.c.0.s8 %v316
    %v318 = vlaneseq
    %v319 = vshrl.u32 %v318, 7
    %v320 = vsub.s32 %v317, %v319
    %v321 = vrot.slane %v293, %v320
    %v322 = vcombine.high %v300, %v300
    %v323 = vcombine.high %v307, %v307
    %v324 = vcombine.high %v314, %v314
    %v325 = vcombine.high %v321, %v321
    %v326 = vcombine.high %v262, %v262
    %v328 = vunpack.c.l.s4 1966171168
    %v329 = vunpack.c.0.s8 %v328
    %v330 = vlaneseq
    %v331 = vshrl.u32 %v330, 7
    %v332 = vsub.s32 %v329, %v331
    %v333 = vrot.slane %v262, %v332
    %v335 = vunpack.c.l.s4 1966171168
    %v336 = vunpack.c.0.s8 %v335
    %v337 = vlaneseq
    %v338 = vshrl.u32 %v337, 7
    %v339 = vsub.s32 %v336, %v338
    %v340 = vrot.slane %v326, %v339
    %v341 = vcombine.high %v333, %v333
    %v342 = vcombine.high %v340, %v340
    %v344 = vunpack.c.l.s4 1966171168
    %v345 = vunpack.c.0.s8 %v344
    %v346 = vlaneseq
    %v347 = vshrl.u32 %v346, 7
    %v348 = vsub.s32 %v345, %v347
    %v349 = vrot.slane %v333, %v348
    %v351 = vunpack.c.l.s4 1966171168
    %v352 = vunpack.c.0.s8 %v351
    %v353 = vlaneseq
    %v354 = vshrl.u32 %v353, 7
    %v355 = vsub.s32 %v352, %v354
    %v356 = vrot.slane %v340, %v355
    %v358 = vunpack.c.l.s4 1966171168
    %v359 = vunpack.c.0.s8 %v358
    %v360 = vlaneseq
    %v361 = vshrl.u32 %v360, 7
    %v362 = vsub.s32 %v359, %v361
    %v363 = vrot.slane %v341, %v362
    %v365 = vunpack.c.l.s4 1966171168
    %v366 = vunpack.c.0.s8 %v365
    %v367 = vlaneseq
    %v368 = vshrl.u32 %v367, 7
    %v369 = vsub.s32 %v366, %v368
    %v370 = vrot.slane %v342, %v369
    %v371 = vcombine.high %v349, %v349
    %v372 = vcombine.high %v356, %v356
    %v373 = vcombine.high %v363, %v363
    %v374 = vcombine.high %v370, %v370
    %v375 = vlaneseq
    %v376 = vshrl.u32 %v375, 7
    %v377 = vsub.s32 0, %v376
    %v378 = vrot.slane %v267, %v377
    %380 = vbcast.lane.b32.xlu0 %v378, 256
    %v381 = vpop.permute.xlu0 %380
    %s383 = sor.u32 256, 8
    %384 = vbcast.lane.b32.xlu0 %v378, %s383
    %v385 = vpop.permute.xlu0 %384
    %s387 = sor.u32 256, 16
    %388 = vbcast.lane.b32.xlu0 %v378, %s387
    %v389 = vpop.permute.xlu0 %388
    %s391 = sor.u32 256, 24
    %392 = vbcast.lane.b32.xlu0 %v378, %s391
    %v393 = vpop.permute.xlu0 %392
    %s395 = sor.u32 256, 32
    %396 = vbcast.lane.b32.xlu0 %v378, %s395
    %v397 = vpop.permute.xlu0 %396
    %s399 = sor.u32 256, 40
    %400 = vbcast.lane.b32.xlu0 %v378, %s399
    %v401 = vpop.permute.xlu0 %400
    %s403 = sor.u32 256, 48
    %404 = vbcast.lane.b32.xlu0 %v378, %s403
    %v405 = vpop.permute.xlu0 %404
    %s407 = sor.u32 256, 56
    %408 = vbcast.lane.b32.xlu0 %v378, %s407
    %v409 = vpop.permute.xlu0 %408
    %v410 = vlaneseq
    %v411 = vshrl.u32 %v410, 7
    %v412 = vsub.s32 1, %v411
    %v413 = vrot.slane %v267, %v412
    %415 = vbcast.lane.b32.xlu0 %v413, 256
    %v416 = vpop.permute.xlu0 %415
    %s418 = sor.u32 256, 8
    %419 = vbcast.lane.b32.xlu0 %v413, %s418
    %v420 = vpop.permute.xlu0 %419
    %s422 = sor.u32 256, 16
    %423 = vbcast.lane.b32.xlu0 %v413, %s422
    %v424 = vpop.permute.xlu0 %423
    %s426 = sor.u32 256, 24
    %427 = vbcast.lane.b32.xlu0 %v413, %s426
    %v428 = vpop.permute.xlu0 %427
    %s430 = sor.u32 256, 32
    %431 = vbcast.lane.b32.xlu0 %v413, %s430
    %v432 = vpop.permute.xlu0 %431
    %s434 = sor.u32 256, 40
    %435 = vbcast.lane.b32.xlu0 %v413, %s434
    %v436 = vpop.permute.xlu0 %435
    %s438 = sor.u32 256, 48
    %439 = vbcast.lane.b32.xlu0 %v413, %s438
    %v440 = vpop.permute.xlu0 %439
    %s442 = sor.u32 256, 56
    %443 = vbcast.lane.b32.xlu0 %v413, %s442
    %v444 = vpop.permute.xlu0 %443
    %v445 = vlaneseq
    %v446 = vshrl.u32 %v445, 7
    %v447 = vsub.s32 2, %v446
    %v448 = vrot.slane %v267, %v447
    %450 = vbcast.lane.b32.xlu0 %v448, 256
    %v451 = vpop.permute.xlu0 %450
    %s453 = sor.u32 256, 8
    %454 = vbcast.lane.b32.xlu0 %v448, %s453
    %v455 = vpop.permute.xlu0 %454
    %s457 = sor.u32 256, 16
    %458 = vbcast.lane.b32.xlu0 %v448, %s457
    %v459 = vpop.permute.xlu0 %458
    %s461 = sor.u32 256, 24
    %462 = vbcast.lane.b32.xlu0 %v448, %s461
    %v463 = vpop.permute.xlu0 %462
    %s465 = sor.u32 256, 32
    %466 = vbcast.lane.b32.xlu0 %v448, %s465
    %v467 = vpop.permute.xlu0 %466
    %s469 = sor.u32 256, 40
    %470 = vbcast.lane.b32.xlu0 %v448, %s469
    %v471 = vpop.permute.xlu0 %470
    %s473 = sor.u32 256, 48
    %474 = vbcast.lane.b32.xlu0 %v448, %s473
    %v475 = vpop.permute.xlu0 %474
    %s477 = sor.u32 256, 56
    %478 = vbcast.lane.b32.xlu0 %v448, %s477
    %v479 = vpop.permute.xlu0 %478
    %v480 = vlaneseq
    %v481 = vshrl.u32 %v480, 7
    %v482 = vsub.s32 3, %v481
    %v483 = vrot.slane %v267, %v482
    %485 = vbcast.lane.b32.xlu0 %v483, 256
    %v486 = vpop.permute.xlu0 %485
    %s488 = sor.u32 256, 8
    %489 = vbcast.lane.b32.xlu0 %v483, %s488
    %v490 = vpop.permute.xlu0 %489
    %s492 = sor.u32 256, 16
    %493 = vbcast.lane.b32.xlu0 %v483, %s492
    %v494 = vpop.permute.xlu0 %493
    %s496 = sor.u32 256, 24
    %497 = vbcast.lane.b32.xlu0 %v483, %s496
    %v498 = vpop.permute.xlu0 %497
    %s500 = sor.u32 256, 32
    %501 = vbcast.lane.b32.xlu0 %v483, %s500
    %v502 = vpop.permute.xlu0 %501
    %s504 = sor.u32 256, 40
    %505 = vbcast.lane.b32.xlu0 %v483, %s504
    %v506 = vpop.permute.xlu0 %505
    %s508 = sor.u32 256, 48
    %509 = vbcast.lane.b32.xlu0 %v483, %s508
    %v510 = vpop.permute.xlu0 %509
    %s512 = sor.u32 256, 56
    %513 = vbcast.lane.b32.xlu0 %v483, %s512
    %v514 = vpop.permute.xlu0 %513
    %v515 = vlaneseq
    %v516 = vshrl.u32 %v515, 7
    %v517 = vsub.s32 4, %v516
    %v518 = vrot.slane %v267, %v517
    %520 = vbcast.lane.b32.xlu0 %v518, 256
    %v521 = vpop.permute.xlu0 %520
    %s523 = sor.u32 256, 8
    %524 = vbcast.lane.b32.xlu0 %v518, %s523
    %v525 = vpop.permute.xlu0 %524
    %s527 = sor.u32 256, 16
    %528 = vbcast.lane.b32.xlu0 %v518, %s527
    %v529 = vpop.permute.xlu0 %528
    %s531 = sor.u32 256, 24
    %532 = vbcast.lane.b32.xlu0 %v518, %s531
    %v533 = vpop.permute.xlu0 %532
    %s535 = sor.u32 256, 32
    %536 = vbcast.lane.b32.xlu0 %v518, %s535
    %v537 = vpop.permute.xlu0 %536
    %s539 = sor.u32 256, 40
    %540 = vbcast.lane.b32.xlu0 %v518, %s539
    %v541 = vpop.permute.xlu0 %540
    %s543 = sor.u32 256, 48
    %544 = vbcast.lane.b32.xlu0 %v518, %s543
    %v545 = vpop.permute.xlu0 %544
    %s547 = sor.u32 256, 56
    %548 = vbcast.lane.b32.xlu0 %v518, %s547
    %v549 = vpop.permute.xlu0 %548
    %v550 = vlaneseq
    %v551 = vshrl.u32 %v550, 7
    %v552 = vsub.s32 5, %v551
    %v553 = vrot.slane %v267, %v552
    %555 = vbcast.lane.b32.xlu0 %v553, 256
    %v556 = vpop.permute.xlu0 %555
    %s558 = sor.u32 256, 8
    %559 = vbcast.lane.b32.xlu0 %v553, %s558
    %v560 = vpop.permute.xlu0 %559
    %s562 = sor.u32 256, 16
    %563 = vbcast.lane.b32.xlu0 %v553, %s562
    %v564 = vpop.permute.xlu0 %563
    %s566 = sor.u32 256, 24
    %567 = vbcast.lane.b32.xlu0 %v553, %s566
    %v568 = vpop.permute.xlu0 %567
    %s570 = sor.u32 256, 32
    %571 = vbcast.lane.b32.xlu0 %v553, %s570
    %v572 = vpop.permute.xlu0 %571
    %s574 = sor.u32 256, 40
    %575 = vbcast.lane.b32.xlu0 %v553, %s574
    %v576 = vpop.permute.xlu0 %575
    %s578 = sor.u32 256, 48
    %579 = vbcast.lane.b32.xlu0 %v553, %s578
    %v580 = vpop.permute.xlu0 %579
    %s582 = sor.u32 256, 56
    %583 = vbcast.lane.b32.xlu0 %v553, %s582
    %v584 = vpop.permute.xlu0 %583
    %v585 = vlaneseq
    %v586 = vshrl.u32 %v585, 7
    %v587 = vsub.s32 6, %v586
    %v588 = vrot.slane %v267, %v587
    %590 = vbcast.lane.b32.xlu0 %v588, 256
    %v591 = vpop.permute.xlu0 %590
    %s593 = sor.u32 256, 8
    %594 = vbcast.lane.b32.xlu0 %v588, %s593
    %v595 = vpop.permute.xlu0 %594
    %s597 = sor.u32 256, 16
    %598 = vbcast.lane.b32.xlu0 %v588, %s597
    %v599 = vpop.permute.xlu0 %598
    %s601 = sor.u32 256, 24
    %602 = vbcast.lane.b32.xlu0 %v588, %s601
    %v603 = vpop.permute.xlu0 %602
    %s605 = sor.u32 256, 32
    %606 = vbcast.lane.b32.xlu0 %v588, %s605
    %v607 = vpop.permute.xlu0 %606
    %s609 = sor.u32 256, 40
    %610 = vbcast.lane.b32.xlu0 %v588, %s609
    %v611 = vpop.permute.xlu0 %610
    %s613 = sor.u32 256, 48
    %614 = vbcast.lane.b32.xlu0 %v588, %s613
    %v615 = vpop.permute.xlu0 %614
    %s617 = sor.u32 256, 56
    %618 = vbcast.lane.b32.xlu0 %v588, %s617
    %v619 = vpop.permute.xlu0 %618
    %v620 = vlaneseq
    %v621 = vshrl.u32 %v620, 7
    %v622 = vsub.s32 7, %v621
    %v623 = vrot.slane %v267, %v622
    %625 = vbcast.lane.b32.xlu0 %v623, 256
    %v626 = vpop.permute.xlu0 %625
    %s628 = sor.u32 256, 8
    %629 = vbcast.lane.b32.xlu0 %v623, %s628
    %v630 = vpop.permute.xlu0 %629
    %s632 = sor.u32 256, 16
    %633 = vbcast.lane.b32.xlu0 %v623, %s632
    %v634 = vpop.permute.xlu0 %633
    %s636 = sor.u32 256, 24
    %637 = vbcast.lane.b32.xlu0 %v623, %s636
    %v638 = vpop.permute.xlu0 %637
    %s640 = sor.u32 256, 32
    %641 = vbcast.lane.b32.xlu0 %v623, %s640
    %v642 = vpop.permute.xlu0 %641
    %s644 = sor.u32 256, 40
    %645 = vbcast.lane.b32.xlu0 %v623, %s644
    %v646 = vpop.permute.xlu0 %645
    %s648 = sor.u32 256, 48
    %649 = vbcast.lane.b32.xlu0 %v623, %s648
    %v650 = vpop.permute.xlu0 %649
    %s652 = sor.u32 256, 56
    %653 = vbcast.lane.b32.xlu0 %v623, %s652
    %v654 = vpop.permute.xlu0 %653
    %v655 = vlaneseq
    %v656 = vshrl.u32 %v655, 7
    %v657 = vsub.s32 0, %v656
    %v658 = vrot.slane %v272, %v657
    %660 = vbcast.lane.b32.xlu0 %v658, 256
    %v661 = vpop.permute.xlu0 %660
    %s663 = sor.u32 256, 8
    %664 = vbcast.lane.b32.xlu0 %v658, %s663
    %v665 = vpop.permute.xlu0 %664
    %s667 = sor.u32 256, 16
    %668 = vbcast.lane.b32.xlu0 %v658, %s667
    %v669 = vpop.permute.xlu0 %668
    %s671 = sor.u32 256, 24
    %672 = vbcast.lane.b32.xlu0 %v658, %s671
    %v673 = vpop.permute.xlu0 %672
    %s675 = sor.u32 256, 32
    %676 = vbcast.lane.b32.xlu0 %v658, %s675
    %v677 = vpop.permute.xlu0 %676
    %s679 = sor.u32 256, 40
    %680 = vbcast.lane.b32.xlu0 %v658, %s679
    %v681 = vpop.permute.xlu0 %680
    %s683 = sor.u32 256, 48
    %684 = vbcast.lane.b32.xlu0 %v658, %s683
    %v685 = vpop.permute.xlu0 %684
    %s687 = sor.u32 256, 56
    %688 = vbcast.lane.b32.xlu0 %v658, %s687
    %v689 = vpop.permute.xlu0 %688
    %v690 = vlaneseq
    %v691 = vshrl.u32 %v690, 7
    %v692 = vsub.s32 1, %v691
    %v693 = vrot.slane %v272, %v692
    %695 = vbcast.lane.b32.xlu0 %v693, 256
    %v696 = vpop.permute.xlu0 %695
    %s698 = sor.u32 256, 8
    %699 = vbcast.lane.b32.xlu0 %v693, %s698
    %v700 = vpop.permute.xlu0 %699
    %s702 = sor.u32 256, 16
    %703 = vbcast.lane.b32.xlu0 %v693, %s702
    %v704 = vpop.permute.xlu0 %703
    %s706 = sor.u32 256, 24
    %707 = vbcast.lane.b32.xlu0 %v693, %s706
    %v708 = vpop.permute.xlu0 %707
    %s710 = sor.u32 256, 32
    %711 = vbcast.lane.b32.xlu0 %v693, %s710
    %v712 = vpop.permute.xlu0 %711
    %s714 = sor.u32 256, 40
    %715 = vbcast.lane.b32.xlu0 %v693, %s714
    %v716 = vpop.permute.xlu0 %715
    %s718 = sor.u32 256, 48
    %719 = vbcast.lane.b32.xlu0 %v693, %s718
    %v720 = vpop.permute.xlu0 %719
    %s722 = sor.u32 256, 56
    %723 = vbcast.lane.b32.xlu0 %v693, %s722
    %v724 = vpop.permute.xlu0 %723
    %v725 = vlaneseq
    %v726 = vshrl.u32 %v725, 7
    %v727 = vsub.s32 2, %v726
    %v728 = vrot.slane %v272, %v727
    %730 = vbcast.lane.b32.xlu0 %v728, 256
    %v731 = vpop.permute.xlu0 %730
    %s733 = sor.u32 256, 8
    %734 = vbcast.lane.b32.xlu0 %v728, %s733
    %v735 = vpop.permute.xlu0 %734
    %s737 = sor.u32 256, 16
    %738 = vbcast.lane.b32.xlu0 %v728, %s737
    %v739 = vpop.permute.xlu0 %738
    %s741 = sor.u32 256, 24
    %742 = vbcast.lane.b32.xlu0 %v728, %s741
    %v743 = vpop.permute.xlu0 %742
    %s745 = sor.u32 256, 32
    %746 = vbcast.lane.b32.xlu0 %v728, %s745
    %v747 = vpop.permute.xlu0 %746
    %s749 = sor.u32 256, 40
    %750 = vbcast.lane.b32.xlu0 %v728, %s749
    %v751 = vpop.permute.xlu0 %750
    %s753 = sor.u32 256, 48
    %754 = vbcast.lane.b32.xlu0 %v728, %s753
    %v755 = vpop.permute.xlu0 %754
    %s757 = sor.u32 256, 56
    %758 = vbcast.lane.b32.xlu0 %v728, %s757
    %v759 = vpop.permute.xlu0 %758
    %v760 = vlaneseq
    %v761 = vshrl.u32 %v760, 7
    %v762 = vsub.s32 3, %v761
    %v763 = vrot.slane %v272, %v762
    %765 = vbcast.lane.b32.xlu0 %v763, 256
    %v766 = vpop.permute.xlu0 %765
    %s768 = sor.u32 256, 8
    %769 = vbcast.lane.b32.xlu0 %v763, %s768
    %v770 = vpop.permute.xlu0 %769
    %s772 = sor.u32 256, 16
    %773 = vbcast.lane.b32.xlu0 %v763, %s772
    %v774 = vpop.permute.xlu0 %773
    %s776 = sor.u32 256, 24
    %777 = vbcast.lane.b32.xlu0 %v763, %s776
    %v778 = vpop.permute.xlu0 %777
    %s780 = sor.u32 256, 32
    %781 = vbcast.lane.b32.xlu0 %v763, %s780
    %v782 = vpop.permute.xlu0 %781
    %s784 = sor.u32 256, 40
    %785 = vbcast.lane.b32.xlu0 %v763, %s784
    %v786 = vpop.permute.xlu0 %785
    %s788 = sor.u32 256, 48
    %789 = vbcast.lane.b32.xlu0 %v763, %s788
    %v790 = vpop.permute.xlu0 %789
    %s792 = sor.u32 256, 56
    %793 = vbcast.lane.b32.xlu0 %v763, %s792
    %v794 = vpop.permute.xlu0 %793
    %v795 = vlaneseq
    %v796 = vshrl.u32 %v795, 7
    %v797 = vsub.s32 4, %v796
    %v798 = vrot.slane %v272, %v797
    %800 = vbcast.lane.b32.xlu0 %v798, 256
    %v801 = vpop.permute.xlu0 %800
    %s803 = sor.u32 256, 8
    %804 = vbcast.lane.b32.xlu0 %v798, %s803
    %v805 = vpop.permute.xlu0 %804
    %s807 = sor.u32 256, 16
    %808 = vbcast.lane.b32.xlu0 %v798, %s807
    %v809 = vpop.permute.xlu0 %808
    %s811 = sor.u32 256, 24
    %812 = vbcast.lane.b32.xlu0 %v798, %s811
    %v813 = vpop.permute.xlu0 %812
    %s815 = sor.u32 256, 32
    %816 = vbcast.lane.b32.xlu0 %v798, %s815
    %v817 = vpop.permute.xlu0 %816
    %s819 = sor.u32 256, 40
    %820 = vbcast.lane.b32.xlu0 %v798, %s819
    %v821 = vpop.permute.xlu0 %820
    %s823 = sor.u32 256, 48
    %824 = vbcast.lane.b32.xlu0 %v798, %s823
    %v825 = vpop.permute.xlu0 %824
    %s827 = sor.u32 256, 56
    %828 = vbcast.lane.b32.xlu0 %v798, %s827
    %v829 = vpop.permute.xlu0 %828
    %v830 = vlaneseq
    %v831 = vshrl.u32 %v830, 7
    %v832 = vsub.s32 5, %v831
    %v833 = vrot.slane %v272, %v832
    %835 = vbcast.lane.b32.xlu0 %v833, 256
    %v836 = vpop.permute.xlu0 %835
    %s838 = sor.u32 256, 8
    %839 = vbcast.lane.b32.xlu0 %v833, %s838
    %v840 = vpop.permute.xlu0 %839
    %s842 = sor.u32 256, 16
    %843 = vbcast.lane.b32.xlu0 %v833, %s842
    %v844 = vpop.permute.xlu0 %843
    %s846 = sor.u32 256, 24
    %847 = vbcast.lane.b32.xlu0 %v833, %s846
    %v848 = vpop.permute.xlu0 %847
    %s850 = sor.u32 256, 32
    %851 = vbcast.lane.b32.xlu0 %v833, %s850
    %v852 = vpop.permute.xlu0 %851
    %s854 = sor.u32 256, 40
    %855 = vbcast.lane.b32.xlu0 %v833, %s854
    %v856 = vpop.permute.xlu0 %855
    %s858 = sor.u32 256, 48
    %859 = vbcast.lane.b32.xlu0 %v833, %s858
    %v860 = vpop.permute.xlu0 %859
    %s862 = sor.u32 256, 56
    %863 = vbcast.lane.b32.xlu0 %v833, %s862
    %v864 = vpop.permute.xlu0 %863
    %v865 = vlaneseq
    %v866 = vshrl.u32 %v865, 7
    %v867 = vsub.s32 6, %v866
    %v868 = vrot.slane %v272, %v867
    %870 = vbcast.lane.b32.xlu0 %v868, 256
    %v871 = vpop.permute.xlu0 %870
    %s873 = sor.u32 256, 8
    %874 = vbcast.lane.b32.xlu0 %v868, %s873
    %v875 = vpop.permute.xlu0 %874
    %s877 = sor.u32 256, 16
    %878 = vbcast.lane.b32.xlu0 %v868, %s877
    %v879 = vpop.permute.xlu0 %878
    %s881 = sor.u32 256, 24
    %882 = vbcast.lane.b32.xlu0 %v868, %s881
    %v883 = vpop.permute.xlu0 %882
    %s885 = sor.u32 256, 32
    %886 = vbcast.lane.b32.xlu0 %v868, %s885
    %v887 = vpop.permute.xlu0 %886
    %s889 = sor.u32 256, 40
    %890 = vbcast.lane.b32.xlu0 %v868, %s889
    %v891 = vpop.permute.xlu0 %890
    %s893 = sor.u32 256, 48
    %894 = vbcast.lane.b32.xlu0 %v868, %s893
    %v895 = vpop.permute.xlu0 %894
    %s897 = sor.u32 256, 56
    %898 = vbcast.lane.b32.xlu0 %v868, %s897
    %v899 = vpop.permute.xlu0 %898
    %v900 = vlaneseq
    %v901 = vshrl.u32 %v900, 7
    %v902 = vsub.s32 7, %v901
    %v903 = vrot.slane %v272, %v902
    %905 = vbcast.lane.b32.xlu0 %v903, 256
    %v906 = vpop.permute.xlu0 %905
    %s908 = sor.u32 256, 8
    %909 = vbcast.lane.b32.xlu0 %v903, %s908
    %v910 = vpop.permute.xlu0 %909
    %s912 = sor.u32 256, 16
    %913 = vbcast.lane.b32.xlu0 %v903, %s912
    %v914 = vpop.permute.xlu0 %913
    %s916 = sor.u32 256, 24
    %917 = vbcast.lane.b32.xlu0 %v903, %s916
    %v918 = vpop.permute.xlu0 %917
    %s920 = sor.u32 256, 32
    %921 = vbcast.lane.b32.xlu0 %v903, %s920
    %v922 = vpop.permute.xlu0 %921
    %s924 = sor.u32 256, 40
    %925 = vbcast.lane.b32.xlu0 %v903, %s924
    %v926 = vpop.permute.xlu0 %925
    %s928 = sor.u32 256, 48
    %929 = vbcast.lane.b32.xlu0 %v903, %s928
    %v930 = vpop.permute.xlu0 %929
    %s932 = sor.u32 256, 56
    %933 = vbcast.lane.b32.xlu0 %v903, %s932
    %v934 = vpop.permute.xlu0 %933
    %v935 = vld [vmem:[%s4] sm:$0xff]
    %v936 = vld [vmem:[%s4 + $0x8] sm:$0xff]
    %v937 = vld [vmem:[%s4 + $0x10] sm:$0xff]
    %v938 = vld [vmem:[%s4 + $0x18] sm:$0xff]
    %v939 = vld [vmem:[%s4 + $0x20] sm:$0xff]
    %v940 = vld [vmem:[%s4 + $0x28] sm:$0xff]
    %v941 = vld [vmem:[%s4 + $0x30] sm:$0xff]
    %v942 = vld [vmem:[%s4 + $0x38] sm:$0xff]
    %v943 = vunpack.c.0.s8 %v935
    %v944 = vunpack.c.1.s8 %v935
    %v945 = vunpack.c.2.s8 %v935
    %v946 = vunpack.c.3.s8 %v935
    %v947 = vunpack.c.0.s8 %v936
    %v948 = vunpack.c.1.s8 %v936
    %v949 = vunpack.c.2.s8 %v936
    %v950 = vunpack.c.3.s8 %v936
    %v951 = vunpack.c.0.s8 %v937
    %v952 = vunpack.c.1.s8 %v937
    %v953 = vunpack.c.2.s8 %v937
    %v954 = vunpack.c.3.s8 %v937
    %v955 = vunpack.c.0.s8 %v938
    %v956 = vunpack.c.1.s8 %v938
    %v957 = vunpack.c.2.s8 %v938
    %v958 = vunpack.c.3.s8 %v938
    %v959 = vunpack.c.0.s8 %v939
    %v960 = vunpack.c.1.s8 %v939
    %v961 = vunpack.c.2.s8 %v939
    %v962 = vunpack.c.3.s8 %v939
    %v963 = vunpack.c.0.s8 %v940
    %v964 = vunpack.c.1.s8 %v940
    %v965 = vunpack.c.2.s8 %v940
    %v966 = vunpack.c.3.s8 %v940
    %v967 = vunpack.c.0.s8 %v941
    %v968 = vunpack.c.1.s8 %v941
    %v969 = vunpack.c.2.s8 %v941
    %v970 = vunpack.c.3.s8 %v941
    %v971 = vunpack.c.0.s8 %v942
    %v972 = vunpack.c.1.s8 %v942
    %v973 = vunpack.c.2.s8 %v942
    %v974 = vunpack.c.3.s8 %v942
    %vm975 = vcmp.eq.s32.totalorder %v943, 3
    %vm976 = vcmp.eq.s32.totalorder %v944, 3
    %vm977 = vcmp.eq.s32.totalorder %v945, 3
    %vm978 = vcmp.eq.s32.totalorder %v946, 3
    %vm979 = vcmp.eq.s32.totalorder %v947, 3
    %vm980 = vcmp.eq.s32.totalorder %v948, 3
    %vm981 = vcmp.eq.s32.totalorder %v949, 3
    %vm982 = vcmp.eq.s32.totalorder %v950, 3
    %s983 = sld [smem:[#allocation6 + $0x2]]
    %v984 = vstv %s983
    %v985 = vsel %vm975, %v984, 0.0
    %v986 = vsel %vm976, %v984, 0.0
    %v987 = vsel %vm977, %v984, 0.0
    %v988 = vsel %vm978, %v984, 0.0
    %v989 = vsel %vm979, %v984, 0.0
    %v990 = vsel %vm980, %v984, 0.0
    %v991 = vsel %vm981, %v984, 0.0
    %v992 = vsel %vm982, %v984, 0.0
    %vm993 = vcmp.eq.s32.totalorder %v943, 2
    %vm994 = vcmp.eq.s32.totalorder %v944, 2
    %vm995 = vcmp.eq.s32.totalorder %v945, 2
    %vm996 = vcmp.eq.s32.totalorder %v946, 2
    %vm997 = vcmp.eq.s32.totalorder %v947, 2
    %vm998 = vcmp.eq.s32.totalorder %v948, 2
    %vm999 = vcmp.eq.s32.totalorder %v949, 2
    %vm1000 = vcmp.eq.s32.totalorder %v950, 2
    %s1001 = sld [smem:[#allocation6 + $0x1]]
    %v1002 = vstv %s1001
    %v1003 = vsel %vm993, %v1002, %v985
    %v1004 = vsel %vm994, %v1002, %v986
    %v1005 = vsel %vm995, %v1002, %v987
    %v1006 = vsel %vm996, %v1002, %v988
    %v1007 = vsel %vm997, %v1002, %v989
    %v1008 = vsel %vm998, %v1002, %v990
    %v1009 = vsel %vm999, %v1002, %v991
    %v1010 = vsel %vm1000, %v1002, %v992
    %vm1011 = vcmp.eq.s32.totalorder %v943, 1
    %vm1012 = vcmp.eq.s32.totalorder %v944, 1
    %vm1013 = vcmp.eq.s32.totalorder %v945, 1
    %vm1014 = vcmp.eq.s32.totalorder %v946, 1
    %vm1015 = vcmp.eq.s32.totalorder %v947, 1
    %vm1016 = vcmp.eq.s32.totalorder %v948, 1
    %vm1017 = vcmp.eq.s32.totalorder %v949, 1
    %vm1018 = vcmp.eq.s32.totalorder %v950, 1
    %s1019 = sld [smem:[#allocation6]]
    %v1020 = vstv %s1019
    %v1021 = vsel %vm1011, %v1020, %v1003
    %v1022 = vsel %vm1012, %v1020, %v1004
    %v1023 = vsel %vm1013, %v1020, %v1005
    %v1024 = vsel %vm1014, %v1020, %v1006
    %v1025 = vsel %vm1015, %v1020, %v1007
    %v1026 = vsel %vm1016, %v1020, %v1008
    %v1027 = vsel %vm1017, %v1020, %v1009
    %v1028 = vsel %vm1018, %v1020, %v1010
    %vm1029 = vcmp.gt.s32.totalorder %v943, 0
    %vm1030 = vcmp.gt.s32.totalorder %v944, 0
    %vm1031 = vcmp.gt.s32.totalorder %v945, 0
    %vm1032 = vcmp.gt.s32.totalorder %v946, 0
    %vm1033 = vcmp.gt.s32.totalorder %v947, 0
    %vm1034 = vcmp.gt.s32.totalorder %v948, 0
    %vm1035 = vcmp.gt.s32.totalorder %v949, 0
    %vm1036 = vcmp.gt.s32.totalorder %v950, 0
    %vm1037 = vcmp.eq.s32.totalorder %v951, 3
    %vm1038 = vcmp.eq.s32.totalorder %v952, 3
    %vm1039 = vcmp.eq.s32.totalorder %v953, 3
    %vm1040 = vcmp.eq.s32.totalorder %v954, 3
    %vm1041 = vcmp.eq.s32.totalorder %v955, 3
    %vm1042 = vcmp.eq.s32.totalorder %v956, 3
    %vm1043 = vcmp.eq.s32.totalorder %v957, 3
    %vm1044 = vcmp.eq.s32.totalorder %v958, 3
    %s1045 = sld [smem:[#allocation6 + $0x82]]
    %v1046 = vstv %s1045
    %v1047 = vsel %vm1037, %v1046, 0.0
    %v1048 = vsel %vm1038, %v1046, 0.0
    %v1049 = vsel %vm1039, %v1046, 0.0
    %v1050 = vsel %vm1040, %v1046, 0.0
    %v1051 = vsel %vm1041, %v1046, 0.0
    %v1052 = vsel %vm1042, %v1046, 0.0
    %v1053 = vsel %vm1043, %v1046, 0.0
    %v1054 = vsel %vm1044, %v1046, 0.0
    %vm1055 = vcmp.eq.s32.totalorder %v951, 2
    %vm1056 = vcmp.eq.s32.totalorder %v952, 2
    %vm1057 = vcmp.eq.s32.totalorder %v953, 2
    %vm1058 = vcmp.eq.s32.totalorder %v954, 2
    %vm1059 = vcmp.eq.s32.totalorder %v955, 2
    %vm1060 = vcmp.eq.s32.totalorder %v956, 2
    %vm1061 = vcmp.eq.s32.totalorder %v957, 2
    %vm1062 = vcmp.eq.s32.totalorder %v958, 2
    %s1063 = sld [smem:[#allocation6 + $0x81]]
    %v1064 = vstv %s1063
    %v1065 = vsel %vm1055, %v1064, %v1047
    %v1066 = vsel %vm1056, %v1064, %v1048
    %v1067 = vsel %vm1057, %v1064, %v1049
    %v1068 = vsel %vm1058, %v1064, %v1050
    %v1069 = vsel %vm1059, %v1064, %v1051
    %v1070 = vsel %vm1060, %v1064, %v1052
    %v1071 = vsel %vm1061, %v1064, %v1053
    %v1072 = vsel %vm1062, %v1064, %v1054
    %vm1073 = vcmp.eq.s32.totalorder %v951, 1
    %vm1074 = vcmp.eq.s32.totalorder %v952, 1
    %vm1075 = vcmp.eq.s32.totalorder %v953, 1
    %vm1076 = vcmp.eq.s32.totalorder %v954, 1
    %vm1077 = vcmp.eq.s32.totalorder %v955, 1
    %vm1078 = vcmp.eq.s32.totalorder %v956, 1
    %vm1079 = vcmp.eq.s32.totalorder %v957, 1
    %vm1080 = vcmp.eq.s32.totalorder %v958, 1
    %s1081 = sld [smem:[#allocation6 + $0x80]]
    %v1082 = vstv %s1081
    %v1083 = vsel %vm1073, %v1082, %v1065
    %v1084 = vsel %vm1074, %v1082, %v1066
    %v1085 = vsel %vm1075, %v1082, %v1067
    %v1086 = vsel %vm1076, %v1082, %v1068
    %v1087 = vsel %vm1077, %v1082, %v1069
    %v1088 = vsel %vm1078, %v1082, %v1070
    %v1089 = vsel %vm1079, %v1082, %v1071
    %v1090 = vsel %vm1080, %v1082, %v1072
    %vm1091 = vcmp.gt.s32.totalorder %v951, 0
    %vm1092 = vcmp.gt.s32.totalorder %v952, 0
    %vm1093 = vcmp.gt.s32.totalorder %v953, 0
    %vm1094 = vcmp.gt.s32.totalorder %v954, 0
    %vm1095 = vcmp.gt.s32.totalorder %v955, 0
    %vm1096 = vcmp.gt.s32.totalorder %v956, 0
    %vm1097 = vcmp.gt.s32.totalorder %v957, 0
    %vm1098 = vcmp.gt.s32.totalorder %v958, 0
    %vm1099 = vcmp.eq.s32.totalorder %v959, 3
    %vm1100 = vcmp.eq.s32.totalorder %v960, 3
    %vm1101 = vcmp.eq.s32.totalorder %v961, 3
    %vm1102 = vcmp.eq.s32.totalorder %v962, 3
    %vm1103 = vcmp.eq.s32.totalorder %v963, 3
    %vm1104 = vcmp.eq.s32.totalorder %v964, 3
    %vm1105 = vcmp.eq.s32.totalorder %v965, 3
    %vm1106 = vcmp.eq.s32.totalorder %v966, 3
    %s1107 = sld [smem:[#allocation6 + $0x102]]
    %v1108 = vstv %s1107
    %v1109 = vsel %vm1099, %v1108, 0.0
    %v1110 = vsel %vm1100, %v1108, 0.0
    %v1111 = vsel %vm1101, %v1108, 0.0
    %v1112 = vsel %vm1102, %v1108, 0.0
    %v1113 = vsel %vm1103, %v1108, 0.0
    %v1114 = vsel %vm1104, %v1108, 0.0
    %v1115 = vsel %vm1105, %v1108, 0.0
    %v1116 = vsel %vm1106, %v1108, 0.0
    %vm1117 = vcmp.eq.s32.totalorder %v959, 2
    %vm1118 = vcmp.eq.s32.totalorder %v960, 2
    %vm1119 = vcmp.eq.s32.totalorder %v961, 2
    %vm1120 = vcmp.eq.s32.totalorder %v962, 2
    %vm1121 = vcmp.eq.s32.totalorder %v963, 2
    %vm1122 = vcmp.eq.s32.totalorder %v964, 2
    %vm1123 = vcmp.eq.s32.totalorder %v965, 2
    %vm1124 = vcmp.eq.s32.totalorder %v966, 2
    %s1125 = sld [smem:[#allocation6 + $0x101]]
    %v1126 = vstv %s1125
    %v1127 = vsel %vm1117, %v1126, %v1109
    %v1128 = vsel %vm1118, %v1126, %v1110
    %v1129 = vsel %vm1119, %v1126, %v1111
    %v1130 = vsel %vm1120, %v1126, %v1112
    %v1131 = vsel %vm1121, %v1126, %v1113
    %v1132 = vsel %vm1122, %v1126, %v1114
    %v1133 = vsel %vm1123, %v1126, %v1115
    %v1134 = vsel %vm1124, %v1126, %v1116
    %vm1135 = vcmp.eq.s32.totalorder %v959, 1
    %vm1136 = vcmp.eq.s32.totalorder %v960, 1
    %vm1137 = vcmp.eq.s32.totalorder %v961, 1
    %vm1138 = vcmp.eq.s32.totalorder %v962, 1
    %vm1139 = vcmp.eq.s32.totalorder %v963, 1
    %vm1140 = vcmp.eq.s32.totalorder %v964, 1
    %vm1141 = vcmp.eq.s32.totalorder %v965, 1
    %vm1142 = vcmp.eq.s32.totalorder %v966, 1
    %s1143 = sld [smem:[#allocation6 + $0x100]]
    %v1144 = vstv %s1143
    %v1145 = vsel %vm1135, %v1144, %v1127
    %v1146 = vsel %vm1136, %v1144, %v1128
    %v1147 = vsel %vm1137, %v1144, %v1129
    %v1148 = vsel %vm1138, %v1144, %v1130
    %v1149 = vsel %vm1139, %v1144, %v1131
    %v1150 = vsel %vm1140, %v1144, %v1132
    %v1151 = vsel %vm1141, %v1144, %v1133
    %v1152 = vsel %vm1142, %v1144, %v1134
    %vm1153 = vcmp.gt.s32.totalorder %v959, 0
    %vm1154 = vcmp.gt.s32.totalorder %v960, 0
    %vm1155 = vcmp.gt.s32.totalorder %v961, 0
    %vm1156 = vcmp.gt.s32.totalorder %v962, 0
    %vm1157 = vcmp.gt.s32.totalorder %v963, 0
    %vm1158 = vcmp.gt.s32.totalorder %v964, 0
    %vm1159 = vcmp.gt.s32.totalorder %v965, 0
    %vm1160 = vcmp.gt.s32.totalorder %v966, 0
    %vm1161 = vcmp.eq.s32.totalorder %v967, 3
    %vm1162 = vcmp.eq.s32.totalorder %v968, 3
    %vm1163 = vcmp.eq.s32.totalorder %v969, 3
    %vm1164 = vcmp.eq.s32.totalorder %v970, 3
    %vm1165 = vcmp.eq.s32.totalorder %v971, 3
    %vm1166 = vcmp.eq.s32.totalorder %v972, 3
    %vm1167 = vcmp.eq.s32.totalorder %v973, 3
    %vm1168 = vcmp.eq.s32.totalorder %v974, 3
    %s1169 = sld [smem:[#allocation6 + $0x182]]
    %v1170 = vstv %s1169
    %v1171 = vsel %vm1161, %v1170, 0.0
    %v1172 = vsel %vm1162, %v1170, 0.0
    %v1173 = vsel %vm1163, %v1170, 0.0
    %v1174 = vsel %vm1164, %v1170, 0.0
    %v1175 = vsel %vm1165, %v1170, 0.0
    %v1176 = vsel %vm1166, %v1170, 0.0
    %v1177 = vsel %vm1167, %v1170, 0.0
    %v1178 = vsel %vm1168, %v1170, 0.0
    %vm1179 = vcmp.eq.s32.totalorder %v967, 2
    %vm1180 = vcmp.eq.s32.totalorder %v968, 2
    %vm1181 = vcmp.eq.s32.totalorder %v969, 2
    %vm1182 = vcmp.eq.s32.totalorder %v970, 2
    %vm1183 = vcmp.eq.s32.totalorder %v971, 2
    %vm1184 = vcmp.eq.s32.totalorder %v972, 2
    %vm1185 = vcmp.eq.s32.totalorder %v973, 2
    %vm1186 = vcmp.eq.s32.totalorder %v974, 2
    %s1187 = sld [smem:[#allocation6 + $0x181]]
    %v1188 = vstv %s1187
    %v1189 = vsel %vm1179, %v1188, %v1171
    %v1190 = vsel %vm1180, %v1188, %v1172
    %v1191 = vsel %vm1181, %v1188, %v1173
    %v1192 = vsel %vm1182, %v1188, %v1174
    %v1193 = vsel %vm1183, %v1188, %v1175
    %v1194 = vsel %vm1184, %v1188, %v1176
    %v1195 = vsel %vm1185, %v1188, %v1177
    %v1196 = vsel %vm1186, %v1188, %v1178
    %vm1197 = vcmp.eq.s32.totalorder %v967, 1
    %vm1198 = vcmp.eq.s32.totalorder %v968, 1
    %vm1199 = vcmp.eq.s32.totalorder %v969, 1
    %vm1200 = vcmp.eq.s32.totalorder %v970, 1
    %vm1201 = vcmp.eq.s32.totalorder %v971, 1
    %vm1202 = vcmp.eq.s32.totalorder %v972, 1
    %vm1203 = vcmp.eq.s32.totalorder %v973, 1
    %vm1204 = vcmp.eq.s32.totalorder %v974, 1
    %s1205 = sld [smem:[#allocation6 + $0x180]]
    %v1206 = vstv %s1205
    %v1207 = vsel %vm1197, %v1206, %v1189
    %v1208 = vsel %vm1198, %v1206, %v1190
    %v1209 = vsel %vm1199, %v1206, %v1191
    %v1210 = vsel %vm1200, %v1206, %v1192
    %v1211 = vsel %vm1201, %v1206, %v1193
    %v1212 = vsel %vm1202, %v1206, %v1194
    %v1213 = vsel %vm1203, %v1206, %v1195
    %v1214 = vsel %vm1204, %v1206, %v1196
    %vm1215 = vcmp.gt.s32.totalorder %v967, 0
    %vm1216 = vcmp.gt.s32.totalorder %v968, 0
    %vm1217 = vcmp.gt.s32.totalorder %v969, 0
    %vm1218 = vcmp.gt.s32.totalorder %v970, 0
    %vm1219 = vcmp.gt.s32.totalorder %v971, 0
    %vm1220 = vcmp.gt.s32.totalorder %v972, 0
    %vm1221 = vcmp.gt.s32.totalorder %v973, 0
    %vm1222 = vcmp.gt.s32.totalorder %v974, 0
    %v1223 = vlaneseq
    %v1224 = vshrl.u32 %v1223, 7
    %v1225 = vsub.s32 0, %v1224
    %v1226 = vrot.slane %v300, %v1225
    %v1227 = vlaneseq
    %v1228 = vshrl.u32 %v1227, 7
    %v1229 = vsub.s32 0, %v1228
    %v1230 = vrot.slane %v314, %v1229
    %v1231 = vlaneseq
    %v1232 = vshrl.u32 %v1231, 7
    %v1233 = vsub.s32 0, %v1232
    %v1234 = vrot.slane %v322, %v1233
    %v1235 = vlaneseq
    %v1236 = vshrl.u32 %v1235, 7
    %v1237 = vsub.s32 0, %v1236
    %v1238 = vrot.slane %v324, %v1237
    %v1239 = vlaneseq
    %v1240 = vshrl.u32 %v1239, 7
    %v1241 = vsub.s32 0, %v1240
    %v1242 = vrot.slane %v307, %v1241
    %v1243 = vlaneseq
    %v1244 = vshrl.u32 %v1243, 7
    %v1245 = vsub.s32 0, %v1244
    %v1246 = vrot.slane %v321, %v1245
    %v1247 = vlaneseq
    %v1248 = vshrl.u32 %v1247, 7
    %v1249 = vsub.s32 0, %v1248
    %v1250 = vrot.slane %v323, %v1249
    %v1251 = vlaneseq
    %v1252 = vshrl.u32 %v1251, 7
    %v1253 = vsub.s32 0, %v1252
    %v1254 = vrot.slane %v325, %v1253
    %v1255 = vlaneseq
    %v1256 = vshrl.u32 %v1255, 7
    %v1257 = vsub.s32 0, %v1256
    %v1258 = vrot.slane %v349, %v1257
    %v1259 = vlaneseq
    %v1260 = vshrl.u32 %v1259, 7
    %v1261 = vsub.s32 0, %v1260
    %v1262 = vrot.slane %v363, %v1261
    %v1263 = vlaneseq
    %v1264 = vshrl.u32 %v1263, 7
    %v1265 = vsub.s32 0, %v1264
    %v1266 = vrot.slane %v371, %v1265
    %v1267 = vlaneseq
    %v1268 = vshrl.u32 %v1267, 7
    %v1269 = vsub.s32 0, %v1268
    %v1270 = vrot.slane %v373, %v1269
    %v1271 = vlaneseq
    %v1272 = vshrl.u32 %v1271, 7
    %v1273 = vsub.s32 0, %v1272
    %v1274 = vrot.slane %v356, %v1273
    %v1275 = vlaneseq
    %v1276 = vshrl.u32 %v1275, 7
    %v1277 = vsub.s32 0, %v1276
    %v1278 = vrot.slane %v370, %v1277
    %v1279 = vlaneseq
    %v1280 = vshrl.u32 %v1279, 7
    %v1281 = vsub.s32 0, %v1280
    %v1282 = vrot.slane %v372, %v1281
    %v1283 = vlaneseq
    %v1284 = vshrl.u32 %v1283, 7
    %v1285 = vsub.s32 0, %v1284
    %v1286 = vrot.slane %v374, %v1285
    %v1303 = vadd.f32 %v1226, %v381
    %v1304 = vadd.f32 %v1226, %v385
    %v1305 = vadd.f32 %v1226, %v389
    %v1306 = vadd.f32 %v1226, %v393
    %v1307 = vadd.f32 %v1226, %v397
    %v1308 = vadd.f32 %v1226, %v401
    %v1309 = vadd.f32 %v1226, %v405
    %v1310 = vadd.f32 %v1226, %v409
    %v1311 = vadd.f32 %v1230, %v416
    %v1312 = vadd.f32 %v1230, %v420
    %v1313 = vadd.f32 %v1230, %v424
    %v1314 = vadd.f32 %v1230, %v428
    %v1315 = vadd.f32 %v1230, %v432
    %v1316 = vadd.f32 %v1230, %v436
    %v1317 = vadd.f32 %v1230, %v440
    %v1318 = vadd.f32 %v1230, %v444
    %v1319 = vadd.f32 %v1234, %v451
    %v1320 = vadd.f32 %v1234, %v455
    %v1321 = vadd.f32 %v1234, %v459
    %v1322 = vadd.f32 %v1234, %v463
    %v1323 = vadd.f32 %v1234, %v467
    %v1324 = vadd.f32 %v1234, %v471
    %v1325 = vadd.f32 %v1234, %v475
    %v1326 = vadd.f32 %v1234, %v479
    %v1327 = vadd.f32 %v1238, %v486
    %v1328 = vadd.f32 %v1238, %v490
    %v1329 = vadd.f32 %v1238, %v494
    %v1330 = vadd.f32 %v1238, %v498
    %v1331 = vadd.f32 %v1238, %v502
    %v1332 = vadd.f32 %v1238, %v506
    %v1333 = vadd.f32 %v1238, %v510
    %v1334 = vadd.f32 %v1238, %v514
    %v1335 = vadd.f32 %v1242, %v521
    %v1336 = vadd.f32 %v1242, %v525
    %v1337 = vadd.f32 %v1242, %v529
    %v1338 = vadd.f32 %v1242, %v533
    %v1339 = vadd.f32 %v1242, %v537
    %v1340 = vadd.f32 %v1242, %v541
    %v1341 = vadd.f32 %v1242, %v545
    %v1342 = vadd.f32 %v1242, %v549
    %v1343 = vadd.f32 %v1246, %v556
    %v1344 = vadd.f32 %v1246, %v560
    %v1345 = vadd.f32 %v1246, %v564
    %v1346 = vadd.f32 %v1246, %v568
    %v1347 = vadd.f32 %v1246, %v572
    %v1348 = vadd.f32 %v1246, %v576
    %v1349 = vadd.f32 %v1246, %v580
    %v1350 = vadd.f32 %v1246, %v584
    %v1351 = vadd.f32 %v1250, %v591
    %v1352 = vadd.f32 %v1250, %v595
    %v1353 = vadd.f32 %v1250, %v599
    %v1354 = vadd.f32 %v1250, %v603
    %v1355 = vadd.f32 %v1250, %v607
    %v1356 = vadd.f32 %v1250, %v611
    %v1357 = vadd.f32 %v1250, %v615
    %v1358 = vadd.f32 %v1250, %v619
    %v1359 = vadd.f32 %v1254, %v626
    %v1360 = vadd.f32 %v1254, %v630
    %v1361 = vadd.f32 %v1254, %v634
    %v1362 = vadd.f32 %v1254, %v638
    %v1363 = vadd.f32 %v1254, %v642
    %v1364 = vadd.f32 %v1254, %v646
    %v1365 = vadd.f32 %v1254, %v650
    %v1366 = vadd.f32 %v1254, %v654
    %v1367 = vadd.f32 %v1258, %v661
    %v1368 = vadd.f32 %v1258, %v665
    %v1369 = vadd.f32 %v1258, %v669
    %v1370 = vadd.f32 %v1258, %v673
    %v1371 = vadd.f32 %v1258, %v677
    %v1372 = vadd.f32 %v1258, %v681
    %v1373 = vadd.f32 %v1258, %v685
    %v1374 = vadd.f32 %v1258, %v689
    %v1375 = vadd.f32 %v1262, %v696
    %v1376 = vadd.f32 %v1262, %v700
    %v1377 = vadd.f32 %v1262, %v704
    %v1378 = vadd.f32 %v1262, %v708
    %v1379 = vadd.f32 %v1262, %v712
    %v1380 = vadd.f32 %v1262, %v716
    %v1381 = vadd.f32 %v1262, %v720
    %v1382 = vadd.f32 %v1262, %v724
    %v1383 = vadd.f32 %v1266, %v731
    %v1384 = vadd.f32 %v1266, %v735
    %v1385 = vadd.f32 %v1266, %v739
    %v1386 = vadd.f32 %v1266, %v743
    %v1387 = vadd.f32 %v1266, %v747
    %v1388 = vadd.f32 %v1266, %v751
    %v1389 = vadd.f32 %v1266, %v755
    %v1390 = vadd.f32 %v1266, %v759
    %v1391 = vadd.f32 %v1270, %v766
    %v1392 = vadd.f32 %v1270, %v770
    %v1393 = vadd.f32 %v1270, %v774
    %v1394 = vadd.f32 %v1270, %v778
    %v1395 = vadd.f32 %v1270, %v782
    %v1396 = vadd.f32 %v1270, %v786
    %v1397 = vadd.f32 %v1270, %v790
    %v1398 = vadd.f32 %v1270, %v794
    %v1399 = vadd.f32 %v1274, %v801
    %v1400 = vadd.f32 %v1274, %v805
    %v1401 = vadd.f32 %v1274, %v809
    %v1402 = vadd.f32 %v1274, %v813
    %v1403 = vadd.f32 %v1274, %v817
    %v1404 = vadd.f32 %v1274, %v821
    %v1405 = vadd.f32 %v1274, %v825
    %v1406 = vadd.f32 %v1274, %v829
    %v1407 = vadd.f32 %v1278, %v836
    %v1408 = vadd.f32 %v1278, %v840
    %v1409 = vadd.f32 %v1278, %v844
    %v1410 = vadd.f32 %v1278, %v848
    %v1411 = vadd.f32 %v1278, %v852
    %v1412 = vadd.f32 %v1278, %v856
    %v1413 = vadd.f32 %v1278, %v860
    %v1414 = vadd.f32 %v1278, %v864
    %v1415 = vadd.f32 %v1282, %v871
    %v1416 = vadd.f32 %v1282, %v875
    %v1417 = vadd.f32 %v1282, %v879
    %v1418 = vadd.f32 %v1282, %v883
    %v1419 = vadd.f32 %v1282, %v887
    %v1420 = vadd.f32 %v1282, %v891
    %v1421 = vadd.f32 %v1282, %v895
    %v1422 = vadd.f32 %v1282, %v899
    %v1423 = vadd.f32 %v1286, %v906
    %v1424 = vadd.f32 %v1286, %v910
    %v1425 = vadd.f32 %v1286, %v914
    %v1426 = vadd.f32 %v1286, %v918
    %v1427 = vadd.f32 %v1286, %v922
    %v1428 = vadd.f32 %v1286, %v926
    %v1429 = vadd.f32 %v1286, %v930
    %v1430 = vadd.f32 %v1286, %v934
    %v1431 = vmul.f32 %v1303, %v1021
    %v1432 = vmul.f32 %v1304, %v1022
    %v1433 = vmul.f32 %v1305, %v1023
    %v1434 = vmul.f32 %v1306, %v1024
    %v1435 = vmul.f32 %v1307, %v1025
    %v1436 = vmul.f32 %v1308, %v1026
    %v1437 = vmul.f32 %v1309, %v1027
    %v1438 = vmul.f32 %v1310, %v1028
    %v1439 = vmul.f32 %v1311, %v1021
    %v1440 = vmul.f32 %v1312, %v1022
    %v1441 = vmul.f32 %v1313, %v1023
    %v1442 = vmul.f32 %v1314, %v1024
    %v1443 = vmul.f32 %v1315, %v1025
    %v1444 = vmul.f32 %v1316, %v1026
    %v1445 = vmul.f32 %v1317, %v1027
    %v1446 = vmul.f32 %v1318, %v1028
    %v1447 = vmul.f32 %v1319, %v1021
    %v1448 = vmul.f32 %v1320, %v1022
    %v1449 = vmul.f32 %v1321, %v1023
    %v1450 = vmul.f32 %v1322, %v1024
    %v1451 = vmul.f32 %v1323, %v1025
    %v1452 = vmul.f32 %v1324, %v1026
    %v1453 = vmul.f32 %v1325, %v1027
    %v1454 = vmul.f32 %v1326, %v1028
    %v1455 = vmul.f32 %v1327, %v1021
    %v1456 = vmul.f32 %v1328, %v1022
    %v1457 = vmul.f32 %v1329, %v1023
    %v1458 = vmul.f32 %v1330, %v1024
    %v1459 = vmul.f32 %v1331, %v1025
    %v1460 = vmul.f32 %v1332, %v1026
    %v1461 = vmul.f32 %v1333, %v1027
    %v1462 = vmul.f32 %v1334, %v1028
    %v1463 = vmul.f32 %v1335, %v1083
    %v1464 = vmul.f32 %v1336, %v1084
    %v1465 = vmul.f32 %v1337, %v1085
    %v1466 = vmul.f32 %v1338, %v1086
    %v1467 = vmul.f32 %v1339, %v1087
    %v1468 = vmul.f32 %v1340, %v1088
    %v1469 = vmul.f32 %v1341, %v1089
    %v1470 = vmul.f32 %v1342, %v1090
    %v1471 = vmul.f32 %v1343, %v1083
    %v1472 = vmul.f32 %v1344, %v1084
    %v1473 = vmul.f32 %v1345, %v1085
    %v1474 = vmul.f32 %v1346, %v1086
    %v1475 = vmul.f32 %v1347, %v1087
    %v1476 = vmul.f32 %v1348, %v1088
    %v1477 = vmul.f32 %v1349, %v1089
    %v1478 = vmul.f32 %v1350, %v1090
    %v1479 = vmul.f32 %v1351, %v1083
    %v1480 = vmul.f32 %v1352, %v1084
    %v1481 = vmul.f32 %v1353, %v1085
    %v1482 = vmul.f32 %v1354, %v1086
    %v1483 = vmul.f32 %v1355, %v1087
    %v1484 = vmul.f32 %v1356, %v1088
    %v1485 = vmul.f32 %v1357, %v1089
    %v1486 = vmul.f32 %v1358, %v1090
    %v1487 = vmul.f32 %v1359, %v1083
    %v1488 = vmul.f32 %v1360, %v1084
    %v1489 = vmul.f32 %v1361, %v1085
    %v1490 = vmul.f32 %v1362, %v1086
    %v1491 = vmul.f32 %v1363, %v1087
    %v1492 = vmul.f32 %v1364, %v1088
    %v1493 = vmul.f32 %v1365, %v1089
    %v1494 = vmul.f32 %v1366, %v1090
    %v1495 = vmul.f32 %v1367, %v1145
    %v1496 = vmul.f32 %v1368, %v1146
    %v1497 = vmul.f32 %v1369, %v1147
    %v1498 = vmul.f32 %v1370, %v1148
    %v1499 = vmul.f32 %v1371, %v1149
    %v1500 = vmul.f32 %v1372, %v1150
    %v1501 = vmul.f32 %v1373, %v1151
    %v1502 = vmul.f32 %v1374, %v1152
    %v1503 = vmul.f32 %v1375, %v1145
    %v1504 = vmul.f32 %v1376, %v1146
    %v1505 = vmul.f32 %v1377, %v1147
    %v1506 = vmul.f32 %v1378, %v1148
    %v1507 = vmul.f32 %v1379, %v1149
    %v1508 = vmul.f32 %v1380, %v1150
    %v1509 = vmul.f32 %v1381, %v1151
    %v1510 = vmul.f32 %v1382, %v1152
    %v1511 = vmul.f32 %v1383, %v1145
    %v1512 = vmul.f32 %v1384, %v1146
    %v1513 = vmul.f32 %v1385, %v1147
    %v1514 = vmul.f32 %v1386, %v1148
    %v1515 = vmul.f32 %v1387, %v1149
    %v1516 = vmul.f32 %v1388, %v1150
    %v1517 = vmul.f32 %v1389, %v1151
    %v1518 = vmul.f32 %v1390, %v1152
    %v1519 = vmul.f32 %v1391, %v1145
    %v1520 = vmul.f32 %v1392, %v1146
    %v1521 = vmul.f32 %v1393, %v1147
    %v1522 = vmul.f32 %v1394, %v1148
    %v1523 = vmul.f32 %v1395, %v1149
    %v1524 = vmul.f32 %v1396, %v1150
    %v1525 = vmul.f32 %v1397, %v1151
    %v1526 = vmul.f32 %v1398, %v1152
    %v1527 = vmul.f32 %v1399, %v1207
    %v1528 = vmul.f32 %v1400, %v1208
    %v1529 = vmul.f32 %v1401, %v1209
    %v1530 = vmul.f32 %v1402, %v1210
    %v1531 = vmul.f32 %v1403, %v1211
    %v1532 = vmul.f32 %v1404, %v1212
    %v1533 = vmul.f32 %v1405, %v1213
    %v1534 = vmul.f32 %v1406, %v1214
    %v1535 = vmul.f32 %v1407, %v1207
    %v1536 = vmul.f32 %v1408, %v1208
    %v1537 = vmul.f32 %v1409, %v1209
    %v1538 = vmul.f32 %v1410, %v1210
    %v1539 = vmul.f32 %v1411, %v1211
    %v1540 = vmul.f32 %v1412, %v1212
    %v1541 = vmul.f32 %v1413, %v1213
    %v1542 = vmul.f32 %v1414, %v1214
    %v1543 = vmul.f32 %v1415, %v1207
    %v1544 = vmul.f32 %v1416, %v1208
    %v1545 = vmul.f32 %v1417, %v1209
    %v1546 = vmul.f32 %v1418, %v1210
    %v1547 = vmul.f32 %v1419, %v1211
    %v1548 = vmul.f32 %v1420, %v1212
    %v1549 = vmul.f32 %v1421, %v1213
    %v1550 = vmul.f32 %v1422, %v1214
    %v1551 = vmul.f32 %v1423, %v1207
    %v1552 = vmul.f32 %v1424, %v1208
    %v1553 = vmul.f32 %v1425, %v1209
    %v1554 = vmul.f32 %v1426, %v1210
    %v1555 = vmul.f32 %v1427, %v1211
    %v1556 = vmul.f32 %v1428, %v1212
    %v1557 = vmul.f32 %v1429, %v1213
    %v1558 = vmul.f32 %v1430, %v1214
    %v1559 = vmul.f32 %v1431, 0.2
    %v1560 = vmul.f32 %v1432, 0.2
    %v1561 = vmul.f32 %v1433, 0.2
    %v1562 = vmul.f32 %v1434, 0.2
    %v1563 = vmul.f32 %v1435, 0.2
    %v1564 = vmul.f32 %v1436, 0.2
    %v1565 = vmul.f32 %v1437, 0.2
    %v1566 = vmul.f32 %v1438, 0.2
    %v1567 = vmul.f32 %v1439, 0.2
    %v1568 = vmul.f32 %v1440, 0.2
    %v1569 = vmul.f32 %v1441, 0.2
    %v1570 = vmul.f32 %v1442, 0.2
    %v1571 = vmul.f32 %v1443, 0.2
    %v1572 = vmul.f32 %v1444, 0.2
    %v1573 = vmul.f32 %v1445, 0.2
    %v1574 = vmul.f32 %v1446, 0.2
    %v1575 = vmul.f32 %v1447, 0.2
    %v1576 = vmul.f32 %v1448, 0.2
    %v1577 = vmul.f32 %v1449, 0.2
    %v1578 = vmul.f32 %v1450, 0.2
    %v1579 = vmul.f32 %v1451, 0.2
    %v1580 = vmul.f32 %v1452, 0.2
    %v1581 = vmul.f32 %v1453, 0.2
    %v1582 = vmul.f32 %v1454, 0.2
    %v1583 = vmul.f32 %v1455, 0.2
    %v1584 = vmul.f32 %v1456, 0.2
    %v1585 = vmul.f32 %v1457, 0.2
    %v1586 = vmul.f32 %v1458, 0.2
    %v1587 = vmul.f32 %v1459, 0.2
    %v1588 = vmul.f32 %v1460, 0.2
    %v1589 = vmul.f32 %v1461, 0.2
    %v1590 = vmul.f32 %v1462, 0.2
    %v1591 = vmul.f32 %v1463, 0.2
    %v1592 = vmul.f32 %v1464, 0.2
    %v1593 = vmul.f32 %v1465, 0.2
    %v1594 = vmul.f32 %v1466, 0.2
    %v1595 = vmul.f32 %v1467, 0.2
    %v1596 = vmul.f32 %v1468, 0.2
    %v1597 = vmul.f32 %v1469, 0.2
    %v1598 = vmul.f32 %v1470, 0.2
    %v1599 = vmul.f32 %v1471, 0.2
    %v1600 = vmul.f32 %v1472, 0.2
    %v1601 = vmul.f32 %v1473, 0.2
    %v1602 = vmul.f32 %v1474, 0.2
    %v1603 = vmul.f32 %v1475, 0.2
    %v1604 = vmul.f32 %v1476, 0.2
    %v1605 = vmul.f32 %v1477, 0.2
    %v1606 = vmul.f32 %v1478, 0.2
    %v1607 = vmul.f32 %v1479, 0.2
    %v1608 = vmul.f32 %v1480, 0.2
    %v1609 = vmul.f32 %v1481, 0.2
    %v1610 = vmul.f32 %v1482, 0.2
    %v1611 = vmul.f32 %v1483, 0.2
    %v1612 = vmul.f32 %v1484, 0.2
    %v1613 = vmul.f32 %v1485, 0.2
    %v1614 = vmul.f32 %v1486, 0.2
    %v1615 = vmul.f32 %v1487, 0.2
    %v1616 = vmul.f32 %v1488, 0.2
    %v1617 = vmul.f32 %v1489, 0.2
    %v1618 = vmul.f32 %v1490, 0.2
    %v1619 = vmul.f32 %v1491, 0.2
    %v1620 = vmul.f32 %v1492, 0.2
    %v1621 = vmul.f32 %v1493, 0.2
    %v1622 = vmul.f32 %v1494, 0.2
    %v1623 = vmul.f32 %v1495, 0.2
    %v1624 = vmul.f32 %v1496, 0.2
    %v1625 = vmul.f32 %v1497, 0.2
    %v1626 = vmul.f32 %v1498, 0.2
    %v1627 = vmul.f32 %v1499, 0.2
    %v1628 = vmul.f32 %v1500, 0.2
    %v1629 = vmul.f32 %v1501, 0.2
    %v1630 = vmul.f32 %v1502, 0.2
    %v1631 = vmul.f32 %v1503, 0.2
    %v1632 = vmul.f32 %v1504, 0.2
    %v1633 = vmul.f32 %v1505, 0.2
    %v1634 = vmul.f32 %v1506, 0.2
    %v1635 = vmul.f32 %v1507, 0.2
    %v1636 = vmul.f32 %v1508, 0.2
    %v1637 = vmul.f32 %v1509, 0.2
    %v1638 = vmul.f32 %v1510, 0.2
    %v1639 = vmul.f32 %v1511, 0.2
    %v1640 = vmul.f32 %v1512, 0.2
    %v1641 = vmul.f32 %v1513, 0.2
    %v1642 = vmul.f32 %v1514, 0.2
    %v1643 = vmul.f32 %v1515, 0.2
    %v1644 = vmul.f32 %v1516, 0.2
    %v1645 = vmul.f32 %v1517, 0.2
    %v1646 = vmul.f32 %v1518, 0.2
    %v1647 = vmul.f32 %v1519, 0.2
    %v1648 = vmul.f32 %v1520, 0.2
    %v1649 = vmul.f32 %v1521, 0.2
    %v1650 = vmul.f32 %v1522, 0.2
    %v1651 = vmul.f32 %v1523, 0.2
    %v1652 = vmul.f32 %v1524, 0.2
    %v1653 = vmul.f32 %v1525, 0.2
    %v1654 = vmul.f32 %v1526, 0.2
    %v1655 = vmul.f32 %v1527, 0.2
    %v1656 = vmul.f32 %v1528, 0.2
    %v1657 = vmul.f32 %v1529, 0.2
    %v1658 = vmul.f32 %v1530, 0.2
    %v1659 = vmul.f32 %v1531, 0.2
    %v1660 = vmul.f32 %v1532, 0.2
    %v1661 = vmul.f32 %v1533, 0.2
    %v1662 = vmul.f32 %v1534, 0.2
    %v1663 = vmul.f32 %v1535, 0.2
    %v1664 = vmul.f32 %v1536, 0.2
    %v1665 = vmul.f32 %v1537, 0.2
    %v1666 = vmul.f32 %v1538, 0.2
    %v1667 = vmul.f32 %v1539, 0.2
    %v1668 = vmul.f32 %v1540, 0.2
    %v1669 = vmul.f32 %v1541, 0.2
    %v1670 = vmul.f32 %v1542, 0.2
    %v1671 = vmul.f32 %v1543, 0.2
    %v1672 = vmul.f32 %v1544, 0.2
    %v1673 = vmul.f32 %v1545, 0.2
    %v1674 = vmul.f32 %v1546, 0.2
    %v1675 = vmul.f32 %v1547, 0.2
    %v1676 = vmul.f32 %v1548, 0.2
    %v1677 = vmul.f32 %v1549, 0.2
    %v1678 = vmul.f32 %v1550, 0.2
    %v1679 = vmul.f32 %v1551, 0.2
    %v1680 = vmul.f32 %v1552, 0.2
    %v1681 = vmul.f32 %v1553, 0.2
    %v1682 = vmul.f32 %v1554, 0.2
    %v1683 = vmul.f32 %v1555, 0.2
    %v1684 = vmul.f32 %v1556, 0.2
    %v1685 = vmul.f32 %v1557, 0.2
    %v1686 = vmul.f32 %v1558, 0.2
    %v1687 = vmax.f32 %v1431, %v1559
    %v1688 = vmax.f32 %v1432, %v1560
    %v1689 = vmax.f32 %v1433, %v1561
    %v1690 = vmax.f32 %v1434, %v1562
    %v1691 = vmax.f32 %v1435, %v1563
    %v1692 = vmax.f32 %v1436, %v1564
    %v1693 = vmax.f32 %v1437, %v1565
    %v1694 = vmax.f32 %v1438, %v1566
    %v1695 = vmax.f32 %v1439, %v1567
    %v1696 = vmax.f32 %v1440, %v1568
    %v1697 = vmax.f32 %v1441, %v1569
    %v1698 = vmax.f32 %v1442, %v1570
    %v1699 = vmax.f32 %v1443, %v1571
    %v1700 = vmax.f32 %v1444, %v1572
    %v1701 = vmax.f32 %v1445, %v1573
    %v1702 = vmax.f32 %v1446, %v1574
    %v1703 = vmax.f32 %v1447, %v1575
    %v1704 = vmax.f32 %v1448, %v1576
    %v1705 = vmax.f32 %v1449, %v1577
    %v1706 = vmax.f32 %v1450, %v1578
    %v1707 = vmax.f32 %v1451, %v1579
    %v1708 = vmax.f32 %v1452, %v1580
    %v1709 = vmax.f32 %v1453, %v1581
    %v1710 = vmax.f32 %v1454, %v1582
    %v1711 = vmax.f32 %v1455, %v1583
    %v1712 = vmax.f32 %v1456, %v1584
    %v1713 = vmax.f32 %v1457, %v1585
    %v1714 = vmax.f32 %v1458, %v1586
    %v1715 = vmax.f32 %v1459, %v1587
    %v1716 = vmax.f32 %v1460, %v1588
    %v1717 = vmax.f32 %v1461, %v1589
    %v1718 = vmax.f32 %v1462, %v1590
    %v1719 = vmax.f32 %v1463, %v1591
    %v1720 = vmax.f32 %v1464, %v1592
    %v1721 = vmax.f32 %v1465, %v1593
    %v1722 = vmax.f32 %v1466, %v1594
    %v1723 = vmax.f32 %v1467, %v1595
    %v1724 = vmax.f32 %v1468, %v1596
    %v1725 = vmax.f32 %v1469, %v1597
    %v1726 = vmax.f32 %v1470, %v1598
    %v1727 = vmax.f32 %v1471, %v1599
    %v1728 = vmax.f32 %v1472, %v1600
    %v1729 = vmax.f32 %v1473, %v1601
    %v1730 = vmax.f32 %v1474, %v1602
    %v1731 = vmax.f32 %v1475, %v1603
    %v1732 = vmax.f32 %v1476, %v1604
    %v1733 = vmax.f32 %v1477, %v1605
    %v1734 = vmax.f32 %v1478, %v1606
    %v1735 = vmax.f32 %v1479, %v1607
    %v1736 = vmax.f32 %v1480, %v1608
    %v1737 = vmax.f32 %v1481, %v1609
    %v1738 = vmax.f32 %v1482, %v1610
    %v1739 = vmax.f32 %v1483, %v1611
    %v1740 = vmax.f32 %v1484, %v1612
    %v1741 = vmax.f32 %v1485, %v1613
    %v1742 = vmax.f32 %v1486, %v1614
    %v1743 = vmax.f32 %v1487, %v1615
    %v1744 = vmax.f32 %v1488, %v1616
    %v1745 = vmax.f32 %v1489, %v1617
    %v1746 = vmax.f32 %v1490, %v1618
    %v1747 = vmax.f32 %v1491, %v1619
    %v1748 = vmax.f32 %v1492, %v1620
    %v1749 = vmax.f32 %v1493, %v1621
    %v1750 = vmax.f32 %v1494, %v1622
    %v1751 = vmax.f32 %v1495, %v1623
    %v1752 = vmax.f32 %v1496, %v1624
    %v1753 = vmax.f32 %v1497, %v1625
    %v1754 = vmax.f32 %v1498, %v1626
    %v1755 = vmax.f32 %v1499, %v1627
    %v1756 = vmax.f32 %v1500, %v1628
    %v1757 = vmax.f32 %v1501, %v1629
    %v1758 = vmax.f32 %v1502, %v1630
    %v1759 = vmax.f32 %v1503, %v1631
    %v1760 = vmax.f32 %v1504, %v1632
    %v1761 = vmax.f32 %v1505, %v1633
    %v1762 = vmax.f32 %v1506, %v1634
    %v1763 = vmax.f32 %v1507, %v1635
    %v1764 = vmax.f32 %v1508, %v1636
    %v1765 = vmax.f32 %v1509, %v1637
    %v1766 = vmax.f32 %v1510, %v1638
    %v1767 = vmax.f32 %v1511, %v1639
    %v1768 = vmax.f32 %v1512, %v1640
    %v1769 = vmax.f32 %v1513, %v1641
    %v1770 = vmax.f32 %v1514, %v1642
    %v1771 = vmax.f32 %v1515, %v1643
    %v1772 = vmax.f32 %v1516, %v1644
    %v1773 = vmax.f32 %v1517, %v1645
    %v1774 = vmax.f32 %v1518, %v1646
    %v1775 = vmax.f32 %v1519, %v1647
    %v1776 = vmax.f32 %v1520, %v1648
    %v1777 = vmax.f32 %v1521, %v1649
    %v1778 = vmax.f32 %v1522, %v1650
    %v1779 = vmax.f32 %v1523, %v1651
    %v1780 = vmax.f32 %v1524, %v1652
    %v1781 = vmax.f32 %v1525, %v1653
    %v1782 = vmax.f32 %v1526, %v1654
    %v1783 = vmax.f32 %v1527, %v1655
    %v1784 = vmax.f32 %v1528, %v1656
    %v1785 = vmax.f32 %v1529, %v1657
    %v1786 = vmax.f32 %v1530, %v1658
    %v1787 = vmax.f32 %v1531, %v1659
    %v1788 = vmax.f32 %v1532, %v1660
    %v1789 = vmax.f32 %v1533, %v1661
    %v1790 = vmax.f32 %v1534, %v1662
    %v1791 = vmax.f32 %v1535, %v1663
    %v1792 = vmax.f32 %v1536, %v1664
    %v1793 = vmax.f32 %v1537, %v1665
    %v1794 = vmax.f32 %v1538, %v1666
    %v1795 = vmax.f32 %v1539, %v1667
    %v1796 = vmax.f32 %v1540, %v1668
    %v1797 = vmax.f32 %v1541, %v1669
    %v1798 = vmax.f32 %v1542, %v1670
    %v1799 = vmax.f32 %v1543, %v1671
    %v1800 = vmax.f32 %v1544, %v1672
    %v1801 = vmax.f32 %v1545, %v1673
    %v1802 = vmax.f32 %v1546, %v1674
    %v1803 = vmax.f32 %v1547, %v1675
    %v1804 = vmax.f32 %v1548, %v1676
    %v1805 = vmax.f32 %v1549, %v1677
    %v1806 = vmax.f32 %v1550, %v1678
    %v1807 = vmax.f32 %v1551, %v1679
    %v1808 = vmax.f32 %v1552, %v1680
    %v1809 = vmax.f32 %v1553, %v1681
    %v1810 = vmax.f32 %v1554, %v1682
    %v1811 = vmax.f32 %v1555, %v1683
    %v1812 = vmax.f32 %v1556, %v1684
    %v1813 = vmax.f32 %v1557, %v1685
    %v1814 = vmax.f32 %v1558, %v1686
    %v1815 = vsel %vm1029, %v1687, -1e+30
    %v1816 = vsel %vm1030, %v1688, -1e+30
    %v1817 = vsel %vm1031, %v1689, -1e+30
    %v1818 = vsel %vm1032, %v1690, -1e+30
    %v1819 = vsel %vm1033, %v1691, -1e+30
    %v1820 = vsel %vm1034, %v1692, -1e+30
    %v1821 = vsel %vm1035, %v1693, -1e+30
    %v1822 = vsel %vm1036, %v1694, -1e+30
    %v1823 = vsel %vm1029, %v1695, -1e+30
    %v1824 = vsel %vm1030, %v1696, -1e+30
    %v1825 = vsel %vm1031, %v1697, -1e+30
    %v1826 = vsel %vm1032, %v1698, -1e+30
    %v1827 = vsel %vm1033, %v1699, -1e+30
    %v1828 = vsel %vm1034, %v1700, -1e+30
    %v1829 = vsel %vm1035, %v1701, -1e+30
    %v1830 = vsel %vm1036, %v1702, -1e+30
    %v1831 = vsel %vm1029, %v1703, -1e+30
    %v1832 = vsel %vm1030, %v1704, -1e+30
    %v1833 = vsel %vm1031, %v1705, -1e+30
    %v1834 = vsel %vm1032, %v1706, -1e+30
    %v1835 = vsel %vm1033, %v1707, -1e+30
    %v1836 = vsel %vm1034, %v1708, -1e+30
    %v1837 = vsel %vm1035, %v1709, -1e+30
    %v1838 = vsel %vm1036, %v1710, -1e+30
    %v1839 = vsel %vm1029, %v1711, -1e+30
    %v1840 = vsel %vm1030, %v1712, -1e+30
    %v1841 = vsel %vm1031, %v1713, -1e+30
    %v1842 = vsel %vm1032, %v1714, -1e+30
    %v1843 = vsel %vm1033, %v1715, -1e+30
    %v1844 = vsel %vm1034, %v1716, -1e+30
    %v1845 = vsel %vm1035, %v1717, -1e+30
    %v1846 = vsel %vm1036, %v1718, -1e+30
    %v1847 = vsel %vm1091, %v1719, -1e+30
    %v1848 = vsel %vm1092, %v1720, -1e+30
    %v1849 = vsel %vm1093, %v1721, -1e+30
    %v1850 = vsel %vm1094, %v1722, -1e+30
    %v1851 = vsel %vm1095, %v1723, -1e+30
    %v1852 = vsel %vm1096, %v1724, -1e+30
    %v1853 = vsel %vm1097, %v1725, -1e+30
    %v1854 = vsel %vm1098, %v1726, -1e+30
    %v1855 = vsel %vm1091, %v1727, -1e+30
    %v1856 = vsel %vm1092, %v1728, -1e+30
    %v1857 = vsel %vm1093, %v1729, -1e+30
    %v1858 = vsel %vm1094, %v1730, -1e+30
    %v1859 = vsel %vm1095, %v1731, -1e+30
    %v1860 = vsel %vm1096, %v1732, -1e+30
    %v1861 = vsel %vm1097, %v1733, -1e+30
    %v1862 = vsel %vm1098, %v1734, -1e+30
    %v1863 = vsel %vm1091, %v1735, -1e+30
    %v1864 = vsel %vm1092, %v1736, -1e+30
    %v1865 = vsel %vm1093, %v1737, -1e+30
    %v1866 = vsel %vm1094, %v1738, -1e+30
    %v1867 = vsel %vm1095, %v1739, -1e+30
    %v1868 = vsel %vm1096, %v1740, -1e+30
    %v1869 = vsel %vm1097, %v1741, -1e+30
    %v1870 = vsel %vm1098, %v1742, -1e+30
    %v1871 = vsel %vm1091, %v1743, -1e+30
    %v1872 = vsel %vm1092, %v1744, -1e+30
    %v1873 = vsel %vm1093, %v1745, -1e+30
    %v1874 = vsel %vm1094, %v1746, -1e+30
    %v1875 = vsel %vm1095, %v1747, -1e+30
    %v1876 = vsel %vm1096, %v1748, -1e+30
    %v1877 = vsel %vm1097, %v1749, -1e+30
    %v1878 = vsel %vm1098, %v1750, -1e+30
    %v1879 = vsel %vm1153, %v1751, -1e+30
    %v1880 = vsel %vm1154, %v1752, -1e+30
    %v1881 = vsel %vm1155, %v1753, -1e+30
    %v1882 = vsel %vm1156, %v1754, -1e+30
    %v1883 = vsel %vm1157, %v1755, -1e+30
    %v1884 = vsel %vm1158, %v1756, -1e+30
    %v1885 = vsel %vm1159, %v1757, -1e+30
    %v1886 = vsel %vm1160, %v1758, -1e+30
    %v1887 = vsel %vm1153, %v1759, -1e+30
    %v1888 = vsel %vm1154, %v1760, -1e+30
    %v1889 = vsel %vm1155, %v1761, -1e+30
    %v1890 = vsel %vm1156, %v1762, -1e+30
    %v1891 = vsel %vm1157, %v1763, -1e+30
    %v1892 = vsel %vm1158, %v1764, -1e+30
    %v1893 = vsel %vm1159, %v1765, -1e+30
    %v1894 = vsel %vm1160, %v1766, -1e+30
    %v1895 = vsel %vm1153, %v1767, -1e+30
    %v1896 = vsel %vm1154, %v1768, -1e+30
    %v1897 = vsel %vm1155, %v1769, -1e+30
    %v1898 = vsel %vm1156, %v1770, -1e+30
    %v1899 = vsel %vm1157, %v1771, -1e+30
    %v1900 = vsel %vm1158, %v1772, -1e+30
    %v1901 = vsel %vm1159, %v1773, -1e+30
    %v1902 = vsel %vm1160, %v1774, -1e+30
    %v1903 = vsel %vm1153, %v1775, -1e+30
    %v1904 = vsel %vm1154, %v1776, -1e+30
    %v1905 = vsel %vm1155, %v1777, -1e+30
    %v1906 = vsel %vm1156, %v1778, -1e+30
    %v1907 = vsel %vm1157, %v1779, -1e+30
    %v1908 = vsel %vm1158, %v1780, -1e+30
    %v1909 = vsel %vm1159, %v1781, -1e+30
    %v1910 = vsel %vm1160, %v1782, -1e+30
    %v1911 = vsel %vm1215, %v1783, -1e+30
    %v1912 = vsel %vm1216, %v1784, -1e+30
    %v1913 = vsel %vm1217, %v1785, -1e+30
    %v1914 = vsel %vm1218, %v1786, -1e+30
    %v1915 = vsel %vm1219, %v1787, -1e+30
    %v1916 = vsel %vm1220, %v1788, -1e+30
    %v1917 = vsel %vm1221, %v1789, -1e+30
    %v1918 = vsel %vm1222, %v1790, -1e+30
    %v1919 = vsel %vm1215, %v1791, -1e+30
    %v1920 = vsel %vm1216, %v1792, -1e+30
    %v1921 = vsel %vm1217, %v1793, -1e+30
    %v1922 = vsel %vm1218, %v1794, -1e+30
    %v1923 = vsel %vm1219, %v1795, -1e+30
    %v1924 = vsel %vm1220, %v1796, -1e+30
    %v1925 = vsel %vm1221, %v1797, -1e+30
    %v1926 = vsel %vm1222, %v1798, -1e+30
    %v1927 = vsel %vm1215, %v1799, -1e+30
    %v1928 = vsel %vm1216, %v1800, -1e+30
    %v1929 = vsel %vm1217, %v1801, -1e+30
    %v1930 = vsel %vm1218, %v1802, -1e+30
    %v1931 = vsel %vm1219, %v1803, -1e+30
    %v1932 = vsel %vm1220, %v1804, -1e+30
    %v1933 = vsel %vm1221, %v1805, -1e+30
    %v1934 = vsel %vm1222, %v1806, -1e+30
    %v1935 = vsel %vm1215, %v1807, -1e+30
    %v1936 = vsel %vm1216, %v1808, -1e+30
    %v1937 = vsel %vm1217, %v1809, -1e+30
    %v1938 = vsel %vm1218, %v1810, -1e+30
    %v1939 = vsel %vm1219, %v1811, -1e+30
    %v1940 = vsel %vm1220, %v1812, -1e+30
    %v1941 = vsel %vm1221, %v1813, -1e+30
    %v1942 = vsel %vm1222, %v1814, -1e+30
    %vm1943 = vcmask 523264
    %v1944 = vsel %vm1943, %v1815, -inf
    %1945 = vmax.xlane.f32.xlu0 %v1944
    %v1946 = vpop.xlane.xlu0 %1945
    %v1947 = vsel %vm1943, %v1816, -inf
    %1948 = vmax.xlane.f32.xlu0 %v1947
    %v1949 = vpop.xlane.xlu0 %1948
    %v1950 = vsel %vm1943, %v1817, -inf
    %1951 = vmax.xlane.f32.xlu0 %v1950
    %v1952 = vpop.xlane.xlu0 %1951
    %v1953 = vsel %vm1943, %v1818, -inf
    %1954 = vmax.xlane.f32.xlu0 %v1953
    %v1955 = vpop.xlane.xlu0 %1954
    %v1956 = vsel %vm1943, %v1819, -inf
    %1957 = vmax.xlane.f32.xlu0 %v1956
    %v1958 = vpop.xlane.xlu0 %1957
    %v1959 = vsel %vm1943, %v1820, -inf
    %1960 = vmax.xlane.f32.xlu0 %v1959
    %v1961 = vpop.xlane.xlu0 %1960
    %v1962 = vsel %vm1943, %v1821, -inf
    %1963 = vmax.xlane.f32.xlu0 %v1962
    %v1964 = vpop.xlane.xlu0 %1963
    %v1965 = vsel %vm1943, %v1822, -inf
    %1966 = vmax.xlane.f32.xlu0 %v1965
    %v1967 = vpop.xlane.xlu0 %1966
    %v1968 = vsel %vm1943, %v1823, -inf
    %1969 = vmax.xlane.f32.xlu0 %v1968
    %v1970 = vpop.xlane.xlu0 %1969
    %v1971 = vsel %vm1943, %v1824, -inf
    %1972 = vmax.xlane.f32.xlu0 %v1971
    %v1973 = vpop.xlane.xlu0 %1972
    %v1974 = vsel %vm1943, %v1825, -inf
    %1975 = vmax.xlane.f32.xlu0 %v1974
    %v1976 = vpop.xlane.xlu0 %1975
    %v1977 = vsel %vm1943, %v1826, -inf
    %1978 = vmax.xlane.f32.xlu0 %v1977
    %v1979 = vpop.xlane.xlu0 %1978
    %v1980 = vsel %vm1943, %v1827, -inf
    %1981 = vmax.xlane.f32.xlu0 %v1980
    %v1982 = vpop.xlane.xlu0 %1981
    %v1983 = vsel %vm1943, %v1828, -inf
    %1984 = vmax.xlane.f32.xlu0 %v1983
    %v1985 = vpop.xlane.xlu0 %1984
    %v1986 = vsel %vm1943, %v1829, -inf
    %1987 = vmax.xlane.f32.xlu0 %v1986
    %v1988 = vpop.xlane.xlu0 %1987
    %v1989 = vsel %vm1943, %v1830, -inf
    %1990 = vmax.xlane.f32.xlu0 %v1989
    %v1991 = vpop.xlane.xlu0 %1990
    %v1992 = vsel %vm1943, %v1831, -inf
    %1993 = vmax.xlane.f32.xlu0 %v1992
    %v1994 = vpop.xlane.xlu0 %1993
    %v1995 = vsel %vm1943, %v1832, -inf
    %1996 = vmax.xlane.f32.xlu0 %v1995
    %v1997 = vpop.xlane.xlu0 %1996
    %v1998 = vsel %vm1943, %v1833, -inf
    %1999 = vmax.xlane.f32.xlu0 %v1998
    %v2000 = vpop.xlane.xlu0 %1999
    %v2001 = vsel %vm1943, %v1834, -inf
    %2002 = vmax.xlane.f32.xlu0 %v2001
    %v2003 = vpop.xlane.xlu0 %2002
    %v2004 = vsel %vm1943, %v1835, -inf
    %2005 = vmax.xlane.f32.xlu0 %v2004
    %v2006 = vpop.xlane.xlu0 %2005
    %v2007 = vsel %vm1943, %v1836, -inf
    %2008 = vmax.xlane.f32.xlu0 %v2007
    %v2009 = vpop.xlane.xlu0 %2008
    %v2010 = vsel %vm1943, %v1837, -inf
    %2011 = vmax.xlane.f32.xlu0 %v2010
    %v2012 = vpop.xlane.xlu0 %2011
    %v2013 = vsel %vm1943, %v1838, -inf
    %2014 = vmax.xlane.f32.xlu0 %v2013
    %v2015 = vpop.xlane.xlu0 %2014
    %v2016 = vsel %vm1943, %v1839, -inf
    %2017 = vmax.xlane.f32.xlu0 %v2016
    %v2018 = vpop.xlane.xlu0 %2017
    %v2019 = vsel %vm1943, %v1840, -inf
    %2020 = vmax.xlane.f32.xlu0 %v2019
    %v2021 = vpop.xlane.xlu0 %2020
    %v2022 = vsel %vm1943, %v1841, -inf
    %2023 = vmax.xlane.f32.xlu0 %v2022
    %v2024 = vpop.xlane.xlu0 %2023
    %v2025 = vsel %vm1943, %v1842, -inf
    %2026 = vmax.xlane.f32.xlu0 %v2025
    %v2027 = vpop.xlane.xlu0 %2026
    %v2028 = vsel %vm1943, %v1843, -inf
    %2029 = vmax.xlane.f32.xlu0 %v2028
    %v2030 = vpop.xlane.xlu0 %2029
    %v2031 = vsel %vm1943, %v1844, -inf
    %2032 = vmax.xlane.f32.xlu0 %v2031
    %v2033 = vpop.xlane.xlu0 %2032
    %v2034 = vsel %vm1943, %v1845, -inf
    %2035 = vmax.xlane.f32.xlu0 %v2034
    %v2036 = vpop.xlane.xlu0 %2035
    %v2037 = vsel %vm1943, %v1846, -inf
    %2038 = vmax.xlane.f32.xlu0 %v2037
    %v2039 = vpop.xlane.xlu0 %2038
    %v2040 = vsel %vm1943, %v1847, -inf
    %2041 = vmax.xlane.f32.xlu0 %v2040
    %v2042 = vpop.xlane.xlu0 %2041
    %v2043 = vsel %vm1943, %v1848, -inf
    %2044 = vmax.xlane.f32.xlu0 %v2043
    %v2045 = vpop.xlane.xlu0 %2044
    %v2046 = vsel %vm1943, %v1849, -inf
    %2047 = vmax.xlane.f32.xlu0 %v2046
    %v2048 = vpop.xlane.xlu0 %2047
    %v2049 = vsel %vm1943, %v1850, -inf
    %2050 = vmax.xlane.f32.xlu0 %v2049
    %v2051 = vpop.xlane.xlu0 %2050
    %v2052 = vsel %vm1943, %v1851, -inf
    %2053 = vmax.xlane.f32.xlu0 %v2052
    %v2054 = vpop.xlane.xlu0 %2053
    %v2055 = vsel %vm1943, %v1852, -inf
    %2056 = vmax.xlane.f32.xlu0 %v2055
    %v2057 = vpop.xlane.xlu0 %2056
    %v2058 = vsel %vm1943, %v1853, -inf
    %2059 = vmax.xlane.f32.xlu0 %v2058
    %v2060 = vpop.xlane.xlu0 %2059
    %v2061 = vsel %vm1943, %v1854, -inf
    %2062 = vmax.xlane.f32.xlu0 %v2061
    %v2063 = vpop.xlane.xlu0 %2062
    %v2064 = vsel %vm1943, %v1855, -inf
    %2065 = vmax.xlane.f32.xlu0 %v2064
    %v2066 = vpop.xlane.xlu0 %2065
    %v2067 = vsel %vm1943, %v1856, -inf
    %2068 = vmax.xlane.f32.xlu0 %v2067
    %v2069 = vpop.xlane.xlu0 %2068
    %v2070 = vsel %vm1943, %v1857, -inf
    %2071 = vmax.xlane.f32.xlu0 %v2070
    %v2072 = vpop.xlane.xlu0 %2071
    %v2073 = vsel %vm1943, %v1858, -inf
    %2074 = vmax.xlane.f32.xlu0 %v2073
    %v2075 = vpop.xlane.xlu0 %2074
    %v2076 = vsel %vm1943, %v1859, -inf
    %2077 = vmax.xlane.f32.xlu0 %v2076
    %v2078 = vpop.xlane.xlu0 %2077
    %v2079 = vsel %vm1943, %v1860, -inf
    %2080 = vmax.xlane.f32.xlu0 %v2079
    %v2081 = vpop.xlane.xlu0 %2080
    %v2082 = vsel %vm1943, %v1861, -inf
    %2083 = vmax.xlane.f32.xlu0 %v2082
    %v2084 = vpop.xlane.xlu0 %2083
    %v2085 = vsel %vm1943, %v1862, -inf
    %2086 = vmax.xlane.f32.xlu0 %v2085
    %v2087 = vpop.xlane.xlu0 %2086
    %v2088 = vsel %vm1943, %v1863, -inf
    %2089 = vmax.xlane.f32.xlu0 %v2088
    %v2090 = vpop.xlane.xlu0 %2089
    %v2091 = vsel %vm1943, %v1864, -inf
    %2092 = vmax.xlane.f32.xlu0 %v2091
    %v2093 = vpop.xlane.xlu0 %2092
    %v2094 = vsel %vm1943, %v1865, -inf
    %2095 = vmax.xlane.f32.xlu0 %v2094
    %v2096 = vpop.xlane.xlu0 %2095
    %v2097 = vsel %vm1943, %v1866, -inf
    %2098 = vmax.xlane.f32.xlu0 %v2097
    %v2099 = vpop.xlane.xlu0 %2098
    %v2100 = vsel %vm1943, %v1867, -inf
    %2101 = vmax.xlane.f32.xlu0 %v2100
    %v2102 = vpop.xlane.xlu0 %2101
    %v2103 = vsel %vm1943, %v1868, -inf
    %2104 = vmax.xlane.f32.xlu0 %v2103
    %v2105 = vpop.xlane.xlu0 %2104
    %v2106 = vsel %vm1943, %v1869, -inf
    %2107 = vmax.xlane.f32.xlu0 %v2106
    %v2108 = vpop.xlane.xlu0 %2107
    %v2109 = vsel %vm1943, %v1870, -inf
    %2110 = vmax.xlane.f32.xlu0 %v2109
    %v2111 = vpop.xlane.xlu0 %2110
    %v2112 = vsel %vm1943, %v1871, -inf
    %2113 = vmax.xlane.f32.xlu0 %v2112
    %v2114 = vpop.xlane.xlu0 %2113
    %v2115 = vsel %vm1943, %v1872, -inf
    %2116 = vmax.xlane.f32.xlu0 %v2115
    %v2117 = vpop.xlane.xlu0 %2116
    %v2118 = vsel %vm1943, %v1873, -inf
    %2119 = vmax.xlane.f32.xlu0 %v2118
    %v2120 = vpop.xlane.xlu0 %2119
    %v2121 = vsel %vm1943, %v1874, -inf
    %2122 = vmax.xlane.f32.xlu0 %v2121
    %v2123 = vpop.xlane.xlu0 %2122
    %v2124 = vsel %vm1943, %v1875, -inf
    %2125 = vmax.xlane.f32.xlu0 %v2124
    %v2126 = vpop.xlane.xlu0 %2125
    %v2127 = vsel %vm1943, %v1876, -inf
    %2128 = vmax.xlane.f32.xlu0 %v2127
    %v2129 = vpop.xlane.xlu0 %2128
    %v2130 = vsel %vm1943, %v1877, -inf
    %2131 = vmax.xlane.f32.xlu0 %v2130
    %v2132 = vpop.xlane.xlu0 %2131
    %v2133 = vsel %vm1943, %v1878, -inf
    %2134 = vmax.xlane.f32.xlu0 %v2133
    %v2135 = vpop.xlane.xlu0 %2134
    %v2136 = vsel %vm1943, %v1879, -inf
    %2137 = vmax.xlane.f32.xlu0 %v2136
    %v2138 = vpop.xlane.xlu0 %2137
    %v2139 = vsel %vm1943, %v1880, -inf
    %2140 = vmax.xlane.f32.xlu0 %v2139
    %v2141 = vpop.xlane.xlu0 %2140
    %v2142 = vsel %vm1943, %v1881, -inf
    %2143 = vmax.xlane.f32.xlu0 %v2142
    %v2144 = vpop.xlane.xlu0 %2143
    %v2145 = vsel %vm1943, %v1882, -inf
    %2146 = vmax.xlane.f32.xlu0 %v2145
    %v2147 = vpop.xlane.xlu0 %2146
    %v2148 = vsel %vm1943, %v1883, -inf
    %2149 = vmax.xlane.f32.xlu0 %v2148
    %v2150 = vpop.xlane.xlu0 %2149
    %v2151 = vsel %vm1943, %v1884, -inf
    %2152 = vmax.xlane.f32.xlu0 %v2151
    %v2153 = vpop.xlane.xlu0 %2152
    %v2154 = vsel %vm1943, %v1885, -inf
    %2155 = vmax.xlane.f32.xlu0 %v2154
    %v2156 = vpop.xlane.xlu0 %2155
    %v2157 = vsel %vm1943, %v1886, -inf
    %2158 = vmax.xlane.f32.xlu0 %v2157
    %v2159 = vpop.xlane.xlu0 %2158
    %v2160 = vsel %vm1943, %v1887, -inf
    %2161 = vmax.xlane.f32.xlu0 %v2160
    %v2162 = vpop.xlane.xlu0 %2161
    %v2163 = vsel %vm1943, %v1888, -inf
    %2164 = vmax.xlane.f32.xlu0 %v2163
    %v2165 = vpop.xlane.xlu0 %2164
    %v2166 = vsel %vm1943, %v1889, -inf
    %2167 = vmax.xlane.f32.xlu0 %v2166
    %v2168 = vpop.xlane.xlu0 %2167
    %v2169 = vsel %vm1943, %v1890, -inf
    %2170 = vmax.xlane.f32.xlu0 %v2169
    %v2171 = vpop.xlane.xlu0 %2170
    %v2172 = vsel %vm1943, %v1891, -inf
    %2173 = vmax.xlane.f32.xlu0 %v2172
    %v2174 = vpop.xlane.xlu0 %2173
    %v2175 = vsel %vm1943, %v1892, -inf
    %2176 = vmax.xlane.f32.xlu0 %v2175
    %v2177 = vpop.xlane.xlu0 %2176
    %v2178 = vsel %vm1943, %v1893, -inf
    %2179 = vmax.xlane.f32.xlu0 %v2178
    %v2180 = vpop.xlane.xlu0 %2179
    %v2181 = vsel %vm1943, %v1894, -inf
    %2182 = vmax.xlane.f32.xlu0 %v2181
    %v2183 = vpop.xlane.xlu0 %2182
    %v2184 = vsel %vm1943, %v1895, -inf
    %2185 = vmax.xlane.f32.xlu0 %v2184
    %v2186 = vpop.xlane.xlu0 %2185
    %v2187 = vsel %vm1943, %v1896, -inf
    %2188 = vmax.xlane.f32.xlu0 %v2187
    %v2189 = vpop.xlane.xlu0 %2188
    %v2190 = vsel %vm1943, %v1897, -inf
    %2191 = vmax.xlane.f32.xlu0 %v2190
    %v2192 = vpop.xlane.xlu0 %2191
    %v2193 = vsel %vm1943, %v1898, -inf
    %2194 = vmax.xlane.f32.xlu0 %v2193
    %v2195 = vpop.xlane.xlu0 %2194
    %v2196 = vsel %vm1943, %v1899, -inf
    %2197 = vmax.xlane.f32.xlu0 %v2196
    %v2198 = vpop.xlane.xlu0 %2197
    %v2199 = vsel %vm1943, %v1900, -inf
    %2200 = vmax.xlane.f32.xlu0 %v2199
    %v2201 = vpop.xlane.xlu0 %2200
    %v2202 = vsel %vm1943, %v1901, -inf
    %2203 = vmax.xlane.f32.xlu0 %v2202
    %v2204 = vpop.xlane.xlu0 %2203
    %v2205 = vsel %vm1943, %v1902, -inf
    %2206 = vmax.xlane.f32.xlu0 %v2205
    %v2207 = vpop.xlane.xlu0 %2206
    %v2208 = vsel %vm1943, %v1903, -inf
    %2209 = vmax.xlane.f32.xlu0 %v2208
    %v2210 = vpop.xlane.xlu0 %2209
    %v2211 = vsel %vm1943, %v1904, -inf
    %2212 = vmax.xlane.f32.xlu0 %v2211
    %v2213 = vpop.xlane.xlu0 %2212
    %v2214 = vsel %vm1943, %v1905, -inf
    %2215 = vmax.xlane.f32.xlu0 %v2214
    %v2216 = vpop.xlane.xlu0 %2215
    %v2217 = vsel %vm1943, %v1906, -inf
    %2218 = vmax.xlane.f32.xlu0 %v2217
    %v2219 = vpop.xlane.xlu0 %2218
    %v2220 = vsel %vm1943, %v1907, -inf
    %2221 = vmax.xlane.f32.xlu0 %v2220
    %v2222 = vpop.xlane.xlu0 %2221
    %v2223 = vsel %vm1943, %v1908, -inf
    %2224 = vmax.xlane.f32.xlu0 %v2223
    %v2225 = vpop.xlane.xlu0 %2224
    %v2226 = vsel %vm1943, %v1909, -inf
    %2227 = vmax.xlane.f32.xlu0 %v2226
    %v2228 = vpop.xlane.xlu0 %2227
    %v2229 = vsel %vm1943, %v1910, -inf
    %2230 = vmax.xlane.f32.xlu0 %v2229
    %v2231 = vpop.xlane.xlu0 %2230
    %v2232 = vsel %vm1943, %v1911, -inf
    %2233 = vmax.xlane.f32.xlu0 %v2232
    %v2234 = vpop.xlane.xlu0 %2233
    %v2235 = vsel %vm1943, %v1912, -inf
    %2236 = vmax.xlane.f32.xlu0 %v2235
    %v2237 = vpop.xlane.xlu0 %2236
    %v2238 = vsel %vm1943, %v1913, -inf
    %2239 = vmax.xlane.f32.xlu0 %v2238
    %v2240 = vpop.xlane.xlu0 %2239
    %v2241 = vsel %vm1943, %v1914, -inf
    %2242 = vmax.xlane.f32.xlu0 %v2241
    %v2243 = vpop.xlane.xlu0 %2242
    %v2244 = vsel %vm1943, %v1915, -inf
    %2245 = vmax.xlane.f32.xlu0 %v2244
    %v2246 = vpop.xlane.xlu0 %2245
    %v2247 = vsel %vm1943, %v1916, -inf
    %2248 = vmax.xlane.f32.xlu0 %v2247
    %v2249 = vpop.xlane.xlu0 %2248
    %v2250 = vsel %vm1943, %v1917, -inf
    %2251 = vmax.xlane.f32.xlu0 %v2250
    %v2252 = vpop.xlane.xlu0 %2251
    %v2253 = vsel %vm1943, %v1918, -inf
    %2254 = vmax.xlane.f32.xlu0 %v2253
    %v2255 = vpop.xlane.xlu0 %2254
    %v2256 = vsel %vm1943, %v1919, -inf
    %2257 = vmax.xlane.f32.xlu0 %v2256
    %v2258 = vpop.xlane.xlu0 %2257
    %v2259 = vsel %vm1943, %v1920, -inf
    %2260 = vmax.xlane.f32.xlu0 %v2259
    %v2261 = vpop.xlane.xlu0 %2260
    %v2262 = vsel %vm1943, %v1921, -inf
    %2263 = vmax.xlane.f32.xlu0 %v2262
    %v2264 = vpop.xlane.xlu0 %2263
    %v2265 = vsel %vm1943, %v1922, -inf
    %2266 = vmax.xlane.f32.xlu0 %v2265
    %v2267 = vpop.xlane.xlu0 %2266
    %v2268 = vsel %vm1943, %v1923, -inf
    %2269 = vmax.xlane.f32.xlu0 %v2268
    %v2270 = vpop.xlane.xlu0 %2269
    %v2271 = vsel %vm1943, %v1924, -inf
    %2272 = vmax.xlane.f32.xlu0 %v2271
    %v2273 = vpop.xlane.xlu0 %2272
    %v2274 = vsel %vm1943, %v1925, -inf
    %2275 = vmax.xlane.f32.xlu0 %v2274
    %v2276 = vpop.xlane.xlu0 %2275
    %v2277 = vsel %vm1943, %v1926, -inf
    %2278 = vmax.xlane.f32.xlu0 %v2277
    %v2279 = vpop.xlane.xlu0 %2278
    %v2280 = vsel %vm1943, %v1927, -inf
    %2281 = vmax.xlane.f32.xlu0 %v2280
    %v2282 = vpop.xlane.xlu0 %2281
    %v2283 = vsel %vm1943, %v1928, -inf
    %2284 = vmax.xlane.f32.xlu0 %v2283
    %v2285 = vpop.xlane.xlu0 %2284
    %v2286 = vsel %vm1943, %v1929, -inf
    %2287 = vmax.xlane.f32.xlu0 %v2286
    %v2288 = vpop.xlane.xlu0 %2287
    %v2289 = vsel %vm1943, %v1930, -inf
    %2290 = vmax.xlane.f32.xlu0 %v2289
    %v2291 = vpop.xlane.xlu0 %2290
    %v2292 = vsel %vm1943, %v1931, -inf
    %2293 = vmax.xlane.f32.xlu0 %v2292
    %v2294 = vpop.xlane.xlu0 %2293
    %v2295 = vsel %vm1943, %v1932, -inf
    %2296 = vmax.xlane.f32.xlu0 %v2295
    %v2297 = vpop.xlane.xlu0 %2296
    %v2298 = vsel %vm1943, %v1933, -inf
    %2299 = vmax.xlane.f32.xlu0 %v2298
    %v2300 = vpop.xlane.xlu0 %2299
    %v2301 = vsel %vm1943, %v1934, -inf
    %2302 = vmax.xlane.f32.xlu0 %v2301
    %v2303 = vpop.xlane.xlu0 %2302
    %v2304 = vsel %vm1943, %v1935, -inf
    %2305 = vmax.xlane.f32.xlu0 %v2304
    %v2306 = vpop.xlane.xlu0 %2305
    %v2307 = vsel %vm1943, %v1936, -inf
    %2308 = vmax.xlane.f32.xlu0 %v2307
    %v2309 = vpop.xlane.xlu0 %2308
    %v2310 = vsel %vm1943, %v1937, -inf
    %2311 = vmax.xlane.f32.xlu0 %v2310
    %v2312 = vpop.xlane.xlu0 %2311
    %v2313 = vsel %vm1943, %v1938, -inf
    %2314 = vmax.xlane.f32.xlu0 %v2313
    %v2315 = vpop.xlane.xlu0 %2314
    %v2316 = vsel %vm1943, %v1939, -inf
    %2317 = vmax.xlane.f32.xlu0 %v2316
    %v2318 = vpop.xlane.xlu0 %2317
    %v2319 = vsel %vm1943, %v1940, -inf
    %2320 = vmax.xlane.f32.xlu0 %v2319
    %v2321 = vpop.xlane.xlu0 %2320
    %v2322 = vsel %vm1943, %v1941, -inf
    %2323 = vmax.xlane.f32.xlu0 %v2322
    %v2324 = vpop.xlane.xlu0 %2323
    %v2325 = vsel %vm1943, %v1942, -inf
    %2326 = vmax.xlane.f32.xlu0 %v2325
    %v2327 = vpop.xlane.xlu0 %2326
    %v2328 = vsub.f32 %v1815, %v1946
    %v2329 = vsub.f32 %v1816, %v1949
    %v2330 = vsub.f32 %v1817, %v1952
    %v2331 = vsub.f32 %v1818, %v1955
    %v2332 = vsub.f32 %v1819, %v1958
    %v2333 = vsub.f32 %v1820, %v1961
    %v2334 = vsub.f32 %v1821, %v1964
    %v2335 = vsub.f32 %v1822, %v1967
    %v2336 = vsub.f32 %v1823, %v1970
    %v2337 = vsub.f32 %v1824, %v1973
    %v2338 = vsub.f32 %v1825, %v1976
    %v2339 = vsub.f32 %v1826, %v1979
    %v2340 = vsub.f32 %v1827, %v1982
    %v2341 = vsub.f32 %v1828, %v1985
    %v2342 = vsub.f32 %v1829, %v1988
    %v2343 = vsub.f32 %v1830, %v1991
    %v2344 = vsub.f32 %v1831, %v1994
    %v2345 = vsub.f32 %v1832, %v1997
    %v2346 = vsub.f32 %v1833, %v2000
    %v2347 = vsub.f32 %v1834, %v2003
    %v2348 = vsub.f32 %v1835, %v2006
    %v2349 = vsub.f32 %v1836, %v2009
    %v2350 = vsub.f32 %v1837, %v2012
    %v2351 = vsub.f32 %v1838, %v2015
    %v2352 = vsub.f32 %v1839, %v2018
    %v2353 = vsub.f32 %v1840, %v2021
    %v2354 = vsub.f32 %v1841, %v2024
    %v2355 = vsub.f32 %v1842, %v2027
    %v2356 = vsub.f32 %v1843, %v2030
    %v2357 = vsub.f32 %v1844, %v2033
    %v2358 = vsub.f32 %v1845, %v2036
    %v2359 = vsub.f32 %v1846, %v2039
    %v2360 = vsub.f32 %v1847, %v2042
    %v2361 = vsub.f32 %v1848, %v2045
    %v2362 = vsub.f32 %v1849, %v2048
    %v2363 = vsub.f32 %v1850, %v2051
    %v2364 = vsub.f32 %v1851, %v2054
    %v2365 = vsub.f32 %v1852, %v2057
    %v2366 = vsub.f32 %v1853, %v2060
    %v2367 = vsub.f32 %v1854, %v2063
    %v2368 = vsub.f32 %v1855, %v2066
    %v2369 = vsub.f32 %v1856, %v2069
    %v2370 = vsub.f32 %v1857, %v2072
    %v2371 = vsub.f32 %v1858, %v2075
    %v2372 = vsub.f32 %v1859, %v2078
    %v2373 = vsub.f32 %v1860, %v2081
    %v2374 = vsub.f32 %v1861, %v2084
    %v2375 = vsub.f32 %v1862, %v2087
    %v2376 = vsub.f32 %v1863, %v2090
    %v2377 = vsub.f32 %v1864, %v2093
    %v2378 = vsub.f32 %v1865, %v2096
    %v2379 = vsub.f32 %v1866, %v2099
    %v2380 = vsub.f32 %v1867, %v2102
    %v2381 = vsub.f32 %v1868, %v2105
    %v2382 = vsub.f32 %v1869, %v2108
    %v2383 = vsub.f32 %v1870, %v2111
    %v2384 = vsub.f32 %v1871, %v2114
    %v2385 = vsub.f32 %v1872, %v2117
    %v2386 = vsub.f32 %v1873, %v2120
    %v2387 = vsub.f32 %v1874, %v2123
    %v2388 = vsub.f32 %v1875, %v2126
    %v2389 = vsub.f32 %v1876, %v2129
    %v2390 = vsub.f32 %v1877, %v2132
    %v2391 = vsub.f32 %v1878, %v2135
    %v2392 = vsub.f32 %v1879, %v2138
    %v2393 = vsub.f32 %v1880, %v2141
    %v2394 = vsub.f32 %v1881, %v2144
    %v2395 = vsub.f32 %v1882, %v2147
    %v2396 = vsub.f32 %v1883, %v2150
    %v2397 = vsub.f32 %v1884, %v2153
    %v2398 = vsub.f32 %v1885, %v2156
    %v2399 = vsub.f32 %v1886, %v2159
    %v2400 = vsub.f32 %v1887, %v2162
    %v2401 = vsub.f32 %v1888, %v2165
    %v2402 = vsub.f32 %v1889, %v2168
    %v2403 = vsub.f32 %v1890, %v2171
    %v2404 = vsub.f32 %v1891, %v2174
    %v2405 = vsub.f32 %v1892, %v2177
    %v2406 = vsub.f32 %v1893, %v2180
    %v2407 = vsub.f32 %v1894, %v2183
    %v2408 = vsub.f32 %v1895, %v2186
    %v2409 = vsub.f32 %v1896, %v2189
    %v2410 = vsub.f32 %v1897, %v2192
    %v2411 = vsub.f32 %v1898, %v2195
    %v2412 = vsub.f32 %v1899, %v2198
    %v2413 = vsub.f32 %v1900, %v2201
    %v2414 = vsub.f32 %v1901, %v2204
    %v2415 = vsub.f32 %v1902, %v2207
    %v2416 = vsub.f32 %v1903, %v2210
    %v2417 = vsub.f32 %v1904, %v2213
    %v2418 = vsub.f32 %v1905, %v2216
    %v2419 = vsub.f32 %v1906, %v2219
    %v2420 = vsub.f32 %v1907, %v2222
    %v2421 = vsub.f32 %v1908, %v2225
    %v2422 = vsub.f32 %v1909, %v2228
    %v2423 = vsub.f32 %v1910, %v2231
    %v2424 = vsub.f32 %v1911, %v2234
    %v2425 = vsub.f32 %v1912, %v2237
    %v2426 = vsub.f32 %v1913, %v2240
    %v2427 = vsub.f32 %v1914, %v2243
    %v2428 = vsub.f32 %v1915, %v2246
    %v2429 = vsub.f32 %v1916, %v2249
    %v2430 = vsub.f32 %v1917, %v2252
    %v2431 = vsub.f32 %v1918, %v2255
    %v2432 = vsub.f32 %v1919, %v2258
    %v2433 = vsub.f32 %v1920, %v2261
    %v2434 = vsub.f32 %v1921, %v2264
    %v2435 = vsub.f32 %v1922, %v2267
    %v2436 = vsub.f32 %v1923, %v2270
    %v2437 = vsub.f32 %v1924, %v2273
    %v2438 = vsub.f32 %v1925, %v2276
    %v2439 = vsub.f32 %v1926, %v2279
    %v2440 = vsub.f32 %v1927, %v2282
    %v2441 = vsub.f32 %v1928, %v2285
    %v2442 = vsub.f32 %v1929, %v2288
    %v2443 = vsub.f32 %v1930, %v2291
    %v2444 = vsub.f32 %v1931, %v2294
    %v2445 = vsub.f32 %v1932, %v2297
    %v2446 = vsub.f32 %v1933, %v2300
    %v2447 = vsub.f32 %v1934, %v2303
    %v2448 = vsub.f32 %v1935, %v2306
    %v2449 = vsub.f32 %v1936, %v2309
    %v2450 = vsub.f32 %v1937, %v2312
    %v2451 = vsub.f32 %v1938, %v2315
    %v2452 = vsub.f32 %v1939, %v2318
    %v2453 = vsub.f32 %v1940, %v2321
    %v2454 = vsub.f32 %v1941, %v2324
    %v2455 = vsub.f32 %v1942, %v2327
    %v2456 = vmul.f32 %v2328, 1.442695
    %v2457 = vpow.pop %v2456
    %v2458 = vmul.f32 %v2329, 1.442695
    %v2459 = vpow.pop %v2458
    %v2460 = vmul.f32 %v2330, 1.442695
    %v2461 = vpow.pop %v2460
    %v2462 = vmul.f32 %v2331, 1.442695
    %v2463 = vpow.pop %v2462
    %v2464 = vmul.f32 %v2332, 1.442695
    %v2465 = vpow.pop %v2464
    %v2466 = vmul.f32 %v2333, 1.442695
    %v2467 = vpow.pop %v2466
    %v2468 = vmul.f32 %v2334, 1.442695
    %v2469 = vpow.pop %v2468
    %v2470 = vmul.f32 %v2335, 1.442695
    %v2471 = vpow.pop %v2470
    %v2472 = vmul.f32 %v2336, 1.442695
    %v2473 = vpow.pop %v2472
    %v2474 = vmul.f32 %v2337, 1.442695
    %v2475 = vpow.pop %v2474
    %v2476 = vmul.f32 %v2338, 1.442695
    %v2477 = vpow.pop %v2476
    %v2478 = vmul.f32 %v2339, 1.442695
    %v2479 = vpow.pop %v2478
    %v2480 = vmul.f32 %v2340, 1.442695
    %v2481 = vpow.pop %v2480
    %v2482 = vmul.f32 %v2341, 1.442695
    %v2483 = vpow.pop %v2482
    %v2484 = vmul.f32 %v2342, 1.442695
    %v2485 = vpow.pop %v2484
    %v2486 = vmul.f32 %v2343, 1.442695
    %v2487 = vpow.pop %v2486
    %v2488 = vmul.f32 %v2344, 1.442695
    %v2489 = vpow.pop %v2488
    %v2490 = vmul.f32 %v2345, 1.442695
    %v2491 = vpow.pop %v2490
    %v2492 = vmul.f32 %v2346, 1.442695
    %v2493 = vpow.pop %v2492
    %v2494 = vmul.f32 %v2347, 1.442695
    %v2495 = vpow.pop %v2494
    %v2496 = vmul.f32 %v2348, 1.442695
    %v2497 = vpow.pop %v2496
    %v2498 = vmul.f32 %v2349, 1.442695
    %v2499 = vpow.pop %v2498
    %v2500 = vmul.f32 %v2350, 1.442695
    %v2501 = vpow.pop %v2500
    %v2502 = vmul.f32 %v2351, 1.442695
    %v2503 = vpow.pop %v2502
    %v2504 = vmul.f32 %v2352, 1.442695
    %v2505 = vpow.pop %v2504
    %v2506 = vmul.f32 %v2353, 1.442695
    %v2507 = vpow.pop %v2506
    %v2508 = vmul.f32 %v2354, 1.442695
    %v2509 = vpow.pop %v2508
    %v2510 = vmul.f32 %v2355, 1.442695
    %v2511 = vpow.pop %v2510
    %v2512 = vmul.f32 %v2356, 1.442695
    %v2513 = vpow.pop %v2512
    %v2514 = vmul.f32 %v2357, 1.442695
    %v2515 = vpow.pop %v2514
    %v2516 = vmul.f32 %v2358, 1.442695
    %v2517 = vpow.pop %v2516
    %v2518 = vmul.f32 %v2359, 1.442695
    %v2519 = vpow.pop %v2518
    %v2520 = vmul.f32 %v2360, 1.442695
    %v2521 = vpow.pop %v2520
    %v2522 = vmul.f32 %v2361, 1.442695
    %v2523 = vpow.pop %v2522
    %v2524 = vmul.f32 %v2362, 1.442695
    %v2525 = vpow.pop %v2524
    %v2526 = vmul.f32 %v2363, 1.442695
    %v2527 = vpow.pop %v2526
    %v2528 = vmul.f32 %v2364, 1.442695
    %v2529 = vpow.pop %v2528
    %v2530 = vmul.f32 %v2365, 1.442695
    %v2531 = vpow.pop %v2530
    %v2532 = vmul.f32 %v2366, 1.442695
    %v2533 = vpow.pop %v2532
    %v2534 = vmul.f32 %v2367, 1.442695
    %v2535 = vpow.pop %v2534
    %v2536 = vmul.f32 %v2368, 1.442695
    %v2537 = vpow.pop %v2536
    %v2538 = vmul.f32 %v2369, 1.442695
    %v2539 = vpow.pop %v2538
    %v2540 = vmul.f32 %v2370, 1.442695
    %v2541 = vpow.pop %v2540
    %v2542 = vmul.f32 %v2371, 1.442695
    %v2543 = vpow.pop %v2542
    %v2544 = vmul.f32 %v2372, 1.442695
    %v2545 = vpow.pop %v2544
    %v2546 = vmul.f32 %v2373, 1.442695
    %v2547 = vpow.pop %v2546
    %v2548 = vmul.f32 %v2374, 1.442695
    %v2549 = vpow.pop %v2548
    %v2550 = vmul.f32 %v2375, 1.442695
    %v2551 = vpow.pop %v2550
    %v2552 = vmul.f32 %v2376, 1.442695
    %v2553 = vpow.pop %v2552
    %v2554 = vmul.f32 %v2377, 1.442695
    %v2555 = vpow.pop %v2554
    %v2556 = vmul.f32 %v2378, 1.442695
    %v2557 = vpow.pop %v2556
    %v2558 = vmul.f32 %v2379, 1.442695
    %v2559 = vpow.pop %v2558
    %v2560 = vmul.f32 %v2380, 1.442695
    %v2561 = vpow.pop %v2560
    %v2562 = vmul.f32 %v2381, 1.442695
    %v2563 = vpow.pop %v2562
    %v2564 = vmul.f32 %v2382, 1.442695
    %v2565 = vpow.pop %v2564
    %v2566 = vmul.f32 %v2383, 1.442695
    %v2567 = vpow.pop %v2566
    %v2568 = vmul.f32 %v2384, 1.442695
    %v2569 = vpow.pop %v2568
    %v2570 = vmul.f32 %v2385, 1.442695
    %v2571 = vpow.pop %v2570
    %v2572 = vmul.f32 %v2386, 1.442695
    %v2573 = vpow.pop %v2572
    %v2574 = vmul.f32 %v2387, 1.442695
    %v2575 = vpow.pop %v2574
    %v2576 = vmul.f32 %v2388, 1.442695
    %v2577 = vpow.pop %v2576
    %v2578 = vmul.f32 %v2389, 1.442695
    %v2579 = vpow.pop %v2578
    %v2580 = vmul.f32 %v2390, 1.442695
    %v2581 = vpow.pop %v2580
    %v2582 = vmul.f32 %v2391, 1.442695
    %v2583 = vpow.pop %v2582
    %v2584 = vmul.f32 %v2392, 1.442695
    %v2585 = vpow.pop %v2584
    %v2586 = vmul.f32 %v2393, 1.442695
    %v2587 = vpow.pop %v2586
    %v2588 = vmul.f32 %v2394, 1.442695
    %v2589 = vpow.pop %v2588
    %v2590 = vmul.f32 %v2395, 1.442695
    %v2591 = vpow.pop %v2590
    %v2592 = vmul.f32 %v2396, 1.442695
    %v2593 = vpow.pop %v2592
    %v2594 = vmul.f32 %v2397, 1.442695
    %v2595 = vpow.pop %v2594
    %v2596 = vmul.f32 %v2398, 1.442695
    %v2597 = vpow.pop %v2596
    %v2598 = vmul.f32 %v2399, 1.442695
    %v2599 = vpow.pop %v2598
    %v2600 = vmul.f32 %v2400, 1.442695
    %v2601 = vpow.pop %v2600
    %v2602 = vmul.f32 %v2401, 1.442695
    %v2603 = vpow.pop %v2602
    %v2604 = vmul.f32 %v2402, 1.442695
    %v2605 = vpow.pop %v2604
    %v2606 = vmul.f32 %v2403, 1.442695
    %v2607 = vpow.pop %v2606
    %v2608 = vmul.f32 %v2404, 1.442695
    %v2609 = vpow.pop %v2608
    %v2610 = vmul.f32 %v2405, 1.442695
    %v2611 = vpow.pop %v2610
    %v2612 = vmul.f32 %v2406, 1.442695
    %v2613 = vpow.pop %v2612
    %v2614 = vmul.f32 %v2407, 1.442695
    %v2615 = vpow.pop %v2614
    %v2616 = vmul.f32 %v2408, 1.442695
    %v2617 = vpow.pop %v2616
    %v2618 = vmul.f32 %v2409, 1.442695
    %v2619 = vpow.pop %v2618
    %v2620 = vmul.f32 %v2410, 1.442695
    %v2621 = vpow.pop %v2620
    %v2622 = vmul.f32 %v2411, 1.442695
    %v2623 = vpow.pop %v2622
    %v2624 = vmul.f32 %v2412, 1.442695
    %v2625 = vpow.pop %v2624
    %v2626 = vmul.f32 %v2413, 1.442695
    %v2627 = vpow.pop %v2626
    %v2628 = vmul.f32 %v2414, 1.442695
    %v2629 = vpow.pop %v2628
    %v2630 = vmul.f32 %v2415, 1.442695
    %v2631 = vpow.pop %v2630
    %v2632 = vmul.f32 %v2416, 1.442695
    %v2633 = vpow.pop %v2632
    %v2634 = vmul.f32 %v2417, 1.442695
    %v2635 = vpow.pop %v2634
    %v2636 = vmul.f32 %v2418, 1.442695
    %v2637 = vpow.pop %v2636
    %v2638 = vmul.f32 %v2419, 1.442695
    %v2639 = vpow.pop %v2638
    %v2640 = vmul.f32 %v2420, 1.442695
    %v2641 = vpow.pop %v2640
    %v2642 = vmul.f32 %v2421, 1.442695
    %v2643 = vpow.pop %v2642
    %v2644 = vmul.f32 %v2422, 1.442695
    %v2645 = vpow.pop %v2644
    %v2646 = vmul.f32 %v2423, 1.442695
    %v2647 = vpow.pop %v2646
    %v2648 = vmul.f32 %v2424, 1.442695
    %v2649 = vpow.pop %v2648
    %v2650 = vmul.f32 %v2425, 1.442695
    %v2651 = vpow.pop %v2650
    %v2652 = vmul.f32 %v2426, 1.442695
    %v2653 = vpow.pop %v2652
    %v2654 = vmul.f32 %v2427, 1.442695
    %v2655 = vpow.pop %v2654
    %v2656 = vmul.f32 %v2428, 1.442695
    %v2657 = vpow.pop %v2656
    %v2658 = vmul.f32 %v2429, 1.442695
    %v2659 = vpow.pop %v2658
    %v2660 = vmul.f32 %v2430, 1.442695
    %v2661 = vpow.pop %v2660
    %v2662 = vmul.f32 %v2431, 1.442695
    %v2663 = vpow.pop %v2662
    %v2664 = vmul.f32 %v2432, 1.442695
    %v2665 = vpow.pop %v2664
    %v2666 = vmul.f32 %v2433, 1.442695
    %v2667 = vpow.pop %v2666
    %v2668 = vmul.f32 %v2434, 1.442695
    %v2669 = vpow.pop %v2668
    %v2670 = vmul.f32 %v2435, 1.442695
    %v2671 = vpow.pop %v2670
    %v2672 = vmul.f32 %v2436, 1.442695
    %v2673 = vpow.pop %v2672
    %v2674 = vmul.f32 %v2437, 1.442695
    %v2675 = vpow.pop %v2674
    %v2676 = vmul.f32 %v2438, 1.442695
    %v2677 = vpow.pop %v2676
    %v2678 = vmul.f32 %v2439, 1.442695
    %v2679 = vpow.pop %v2678
    %v2680 = vmul.f32 %v2440, 1.442695
    %v2681 = vpow.pop %v2680
    %v2682 = vmul.f32 %v2441, 1.442695
    %v2683 = vpow.pop %v2682
    %v2684 = vmul.f32 %v2442, 1.442695
    %v2685 = vpow.pop %v2684
    %v2686 = vmul.f32 %v2443, 1.442695
    %v2687 = vpow.pop %v2686
    %v2688 = vmul.f32 %v2444, 1.442695
    %v2689 = vpow.pop %v2688
    %v2690 = vmul.f32 %v2445, 1.442695
    %v2691 = vpow.pop %v2690
    %v2692 = vmul.f32 %v2446, 1.442695
    %v2693 = vpow.pop %v2692
    %v2694 = vmul.f32 %v2447, 1.442695
    %v2695 = vpow.pop %v2694
    %v2696 = vmul.f32 %v2448, 1.442695
    %v2697 = vpow.pop %v2696
    %v2698 = vmul.f32 %v2449, 1.442695
    %v2699 = vpow.pop %v2698
    %v2700 = vmul.f32 %v2450, 1.442695
    %v2701 = vpow.pop %v2700
    %v2702 = vmul.f32 %v2451, 1.442695
    %v2703 = vpow.pop %v2702
    %v2704 = vmul.f32 %v2452, 1.442695
    %v2705 = vpow.pop %v2704
    %v2706 = vmul.f32 %v2453, 1.442695
    %v2707 = vpow.pop %v2706
    %v2708 = vmul.f32 %v2454, 1.442695
    %v2709 = vpow.pop %v2708
    %v2710 = vmul.f32 %v2455, 1.442695
    %v2711 = vpow.pop %v2710
    %v2712 = vsel %vm1943, %v2457, 0.0
    %2713 = vadd.xlane.f32.xlu0 %v2712
    %v2714 = vpop.xlane.xlu0 %2713
    %v2715 = vsel %vm1943, %v2459, 0.0
    %2716 = vadd.xlane.f32.xlu0 %v2715
    %v2717 = vpop.xlane.xlu0 %2716
    %v2718 = vsel %vm1943, %v2461, 0.0
    %2719 = vadd.xlane.f32.xlu0 %v2718
    %v2720 = vpop.xlane.xlu0 %2719
    %v2721 = vsel %vm1943, %v2463, 0.0
    %2722 = vadd.xlane.f32.xlu0 %v2721
    %v2723 = vpop.xlane.xlu0 %2722
    %v2724 = vsel %vm1943, %v2465, 0.0
    %2725 = vadd.xlane.f32.xlu0 %v2724
    %v2726 = vpop.xlane.xlu0 %2725
    %v2727 = vsel %vm1943, %v2467, 0.0
    %2728 = vadd.xlane.f32.xlu0 %v2727
    %v2729 = vpop.xlane.xlu0 %2728
    %v2730 = vsel %vm1943, %v2469, 0.0
    %2731 = vadd.xlane.f32.xlu0 %v2730
    %v2732 = vpop.xlane.xlu0 %2731
    %v2733 = vsel %vm1943, %v2471, 0.0
    %2734 = vadd.xlane.f32.xlu0 %v2733
    %v2735 = vpop.xlane.xlu0 %2734
    %v2736 = vsel %vm1943, %v2473, 0.0
    %2737 = vadd.xlane.f32.xlu0 %v2736
    %v2738 = vpop.xlane.xlu0 %2737
    %v2739 = vsel %vm1943, %v2475, 0.0
    %2740 = vadd.xlane.f32.xlu0 %v2739
    %v2741 = vpop.xlane.xlu0 %2740
    %v2742 = vsel %vm1943, %v2477, 0.0
    %2743 = vadd.xlane.f32.xlu0 %v2742
    %v2744 = vpop.xlane.xlu0 %2743
    %v2745 = vsel %vm1943, %v2479, 0.0
    %2746 = vadd.xlane.f32.xlu0 %v2745
    %v2747 = vpop.xlane.xlu0 %2746
    %v2748 = vsel %vm1943, %v2481, 0.0
    %2749 = vadd.xlane.f32.xlu0 %v2748
    %v2750 = vpop.xlane.xlu0 %2749
    %v2751 = vsel %vm1943, %v2483, 0.0
    %2752 = vadd.xlane.f32.xlu0 %v2751
    %v2753 = vpop.xlane.xlu0 %2752
    %v2754 = vsel %vm1943, %v2485, 0.0
    %2755 = vadd.xlane.f32.xlu0 %v2754
    %v2756 = vpop.xlane.xlu0 %2755
    %v2757 = vsel %vm1943, %v2487, 0.0
    %2758 = vadd.xlane.f32.xlu0 %v2757
    %v2759 = vpop.xlane.xlu0 %2758
    %v2760 = vsel %vm1943, %v2489, 0.0
    %2761 = vadd.xlane.f32.xlu0 %v2760
    %v2762 = vpop.xlane.xlu0 %2761
    %v2763 = vsel %vm1943, %v2491, 0.0
    %2764 = vadd.xlane.f32.xlu0 %v2763
    %v2765 = vpop.xlane.xlu0 %2764
    %v2766 = vsel %vm1943, %v2493, 0.0
    %2767 = vadd.xlane.f32.xlu0 %v2766
    %v2768 = vpop.xlane.xlu0 %2767
    %v2769 = vsel %vm1943, %v2495, 0.0
    %2770 = vadd.xlane.f32.xlu0 %v2769
    %v2771 = vpop.xlane.xlu0 %2770
    %v2772 = vsel %vm1943, %v2497, 0.0
    %2773 = vadd.xlane.f32.xlu0 %v2772
    %v2774 = vpop.xlane.xlu0 %2773
    %v2775 = vsel %vm1943, %v2499, 0.0
    %2776 = vadd.xlane.f32.xlu0 %v2775
    %v2777 = vpop.xlane.xlu0 %2776
    %v2778 = vsel %vm1943, %v2501, 0.0
    %2779 = vadd.xlane.f32.xlu0 %v2778
    %v2780 = vpop.xlane.xlu0 %2779
    %v2781 = vsel %vm1943, %v2503, 0.0
    %2782 = vadd.xlane.f32.xlu0 %v2781
    %v2783 = vpop.xlane.xlu0 %2782
    %v2784 = vsel %vm1943, %v2505, 0.0
    %2785 = vadd.xlane.f32.xlu0 %v2784
    %v2786 = vpop.xlane.xlu0 %2785
    %v2787 = vsel %vm1943, %v2507, 0.0
    %2788 = vadd.xlane.f32.xlu0 %v2787
    %v2789 = vpop.xlane.xlu0 %2788
    %v2790 = vsel %vm1943, %v2509, 0.0
    %2791 = vadd.xlane.f32.xlu0 %v2790
    %v2792 = vpop.xlane.xlu0 %2791
    %v2793 = vsel %vm1943, %v2511, 0.0
    %2794 = vadd.xlane.f32.xlu0 %v2793
    %v2795 = vpop.xlane.xlu0 %2794
    %v2796 = vsel %vm1943, %v2513, 0.0
    %2797 = vadd.xlane.f32.xlu0 %v2796
    %v2798 = vpop.xlane.xlu0 %2797
    %v2799 = vsel %vm1943, %v2515, 0.0
    %2800 = vadd.xlane.f32.xlu0 %v2799
    %v2801 = vpop.xlane.xlu0 %2800
    %v2802 = vsel %vm1943, %v2517, 0.0
    %2803 = vadd.xlane.f32.xlu0 %v2802
    %v2804 = vpop.xlane.xlu0 %2803
    %v2805 = vsel %vm1943, %v2519, 0.0
    %2806 = vadd.xlane.f32.xlu0 %v2805
    %v2807 = vpop.xlane.xlu0 %2806
    %v2808 = vsel %vm1943, %v2521, 0.0
    %2809 = vadd.xlane.f32.xlu0 %v2808
    %v2810 = vpop.xlane.xlu0 %2809
    %v2811 = vsel %vm1943, %v2523, 0.0
    %2812 = vadd.xlane.f32.xlu0 %v2811
    %v2813 = vpop.xlane.xlu0 %2812
    %v2814 = vsel %vm1943, %v2525, 0.0
    %2815 = vadd.xlane.f32.xlu0 %v2814
    %v2816 = vpop.xlane.xlu0 %2815
    %v2817 = vsel %vm1943, %v2527, 0.0
    %2818 = vadd.xlane.f32.xlu0 %v2817
    %v2819 = vpop.xlane.xlu0 %2818
    %v2820 = vsel %vm1943, %v2529, 0.0
    %2821 = vadd.xlane.f32.xlu0 %v2820
    %v2822 = vpop.xlane.xlu0 %2821
    %v2823 = vsel %vm1943, %v2531, 0.0
    %2824 = vadd.xlane.f32.xlu0 %v2823
    %v2825 = vpop.xlane.xlu0 %2824
    %v2826 = vsel %vm1943, %v2533, 0.0
    %2827 = vadd.xlane.f32.xlu0 %v2826
    %v2828 = vpop.xlane.xlu0 %2827
    %v2829 = vsel %vm1943, %v2535, 0.0
    %2830 = vadd.xlane.f32.xlu0 %v2829
    %v2831 = vpop.xlane.xlu0 %2830
    %v2832 = vsel %vm1943, %v2537, 0.0
    %2833 = vadd.xlane.f32.xlu0 %v2832
    %v2834 = vpop.xlane.xlu0 %2833
    %v2835 = vsel %vm1943, %v2539, 0.0
    %2836 = vadd.xlane.f32.xlu0 %v2835
    %v2837 = vpop.xlane.xlu0 %2836
    %v2838 = vsel %vm1943, %v2541, 0.0
    %2839 = vadd.xlane.f32.xlu0 %v2838
    %v2840 = vpop.xlane.xlu0 %2839
    %v2841 = vsel %vm1943, %v2543, 0.0
    %2842 = vadd.xlane.f32.xlu0 %v2841
    %v2843 = vpop.xlane.xlu0 %2842
    %v2844 = vsel %vm1943, %v2545, 0.0
    %2845 = vadd.xlane.f32.xlu0 %v2844
    %v2846 = vpop.xlane.xlu0 %2845
    %v2847 = vsel %vm1943, %v2547, 0.0
    %2848 = vadd.xlane.f32.xlu0 %v2847
    %v2849 = vpop.xlane.xlu0 %2848
    %v2850 = vsel %vm1943, %v2549, 0.0
    %2851 = vadd.xlane.f32.xlu0 %v2850
    %v2852 = vpop.xlane.xlu0 %2851
    %v2853 = vsel %vm1943, %v2551, 0.0
    %2854 = vadd.xlane.f32.xlu0 %v2853
    %v2855 = vpop.xlane.xlu0 %2854
    %v2856 = vsel %vm1943, %v2553, 0.0
    %2857 = vadd.xlane.f32.xlu0 %v2856
    %v2858 = vpop.xlane.xlu0 %2857
    %v2859 = vsel %vm1943, %v2555, 0.0
    %2860 = vadd.xlane.f32.xlu0 %v2859
    %v2861 = vpop.xlane.xlu0 %2860
    %v2862 = vsel %vm1943, %v2557, 0.0
    %2863 = vadd.xlane.f32.xlu0 %v2862
    %v2864 = vpop.xlane.xlu0 %2863
    %v2865 = vsel %vm1943, %v2559, 0.0
    %2866 = vadd.xlane.f32.xlu0 %v2865
    %v2867 = vpop.xlane.xlu0 %2866
    %v2868 = vsel %vm1943, %v2561, 0.0
    %2869 = vadd.xlane.f32.xlu0 %v2868
    %v2870 = vpop.xlane.xlu0 %2869
    %v2871 = vsel %vm1943, %v2563, 0.0
    %2872 = vadd.xlane.f32.xlu0 %v2871
    %v2873 = vpop.xlane.xlu0 %2872
    %v2874 = vsel %vm1943, %v2565, 0.0
    %2875 = vadd.xlane.f32.xlu0 %v2874
    %v2876 = vpop.xlane.xlu0 %2875
    %v2877 = vsel %vm1943, %v2567, 0.0
    %2878 = vadd.xlane.f32.xlu0 %v2877
    %v2879 = vpop.xlane.xlu0 %2878
    %v2880 = vsel %vm1943, %v2569, 0.0
    %2881 = vadd.xlane.f32.xlu0 %v2880
    %v2882 = vpop.xlane.xlu0 %2881
    %v2883 = vsel %vm1943, %v2571, 0.0
    %2884 = vadd.xlane.f32.xlu0 %v2883
    %v2885 = vpop.xlane.xlu0 %2884
    %v2886 = vsel %vm1943, %v2573, 0.0
    %2887 = vadd.xlane.f32.xlu0 %v2886
    %v2888 = vpop.xlane.xlu0 %2887
    %v2889 = vsel %vm1943, %v2575, 0.0
    %2890 = vadd.xlane.f32.xlu0 %v2889
    %v2891 = vpop.xlane.xlu0 %2890
    %v2892 = vsel %vm1943, %v2577, 0.0
    %2893 = vadd.xlane.f32.xlu0 %v2892
    %v2894 = vpop.xlane.xlu0 %2893
    %v2895 = vsel %vm1943, %v2579, 0.0
    %2896 = vadd.xlane.f32.xlu0 %v2895
    %v2897 = vpop.xlane.xlu0 %2896
    %v2898 = vsel %vm1943, %v2581, 0.0
    %2899 = vadd.xlane.f32.xlu0 %v2898
    %v2900 = vpop.xlane.xlu0 %2899
    %v2901 = vsel %vm1943, %v2583, 0.0
    %2902 = vadd.xlane.f32.xlu0 %v2901
    %v2903 = vpop.xlane.xlu0 %2902
    %v2904 = vsel %vm1943, %v2585, 0.0
    %2905 = vadd.xlane.f32.xlu0 %v2904
    %v2906 = vpop.xlane.xlu0 %2905
    %v2907 = vsel %vm1943, %v2587, 0.0
    %2908 = vadd.xlane.f32.xlu0 %v2907
    %v2909 = vpop.xlane.xlu0 %2908
    %v2910 = vsel %vm1943, %v2589, 0.0
    %2911 = vadd.xlane.f32.xlu0 %v2910
    %v2912 = vpop.xlane.xlu0 %2911
    %v2913 = vsel %vm1943, %v2591, 0.0
    %2914 = vadd.xlane.f32.xlu0 %v2913
    %v2915 = vpop.xlane.xlu0 %2914
    %v2916 = vsel %vm1943, %v2593, 0.0
    %2917 = vadd.xlane.f32.xlu0 %v2916
    %v2918 = vpop.xlane.xlu0 %2917
    %v2919 = vsel %vm1943, %v2595, 0.0
    %2920 = vadd.xlane.f32.xlu0 %v2919
    %v2921 = vpop.xlane.xlu0 %2920
    %v2922 = vsel %vm1943, %v2597, 0.0
    %2923 = vadd.xlane.f32.xlu0 %v2922
    %v2924 = vpop.xlane.xlu0 %2923
    %v2925 = vsel %vm1943, %v2599, 0.0
    %2926 = vadd.xlane.f32.xlu0 %v2925
    %v2927 = vpop.xlane.xlu0 %2926
    %v2928 = vsel %vm1943, %v2601, 0.0
    %2929 = vadd.xlane.f32.xlu0 %v2928
    %v2930 = vpop.xlane.xlu0 %2929
    %v2931 = vsel %vm1943, %v2603, 0.0
    %2932 = vadd.xlane.f32.xlu0 %v2931
    %v2933 = vpop.xlane.xlu0 %2932
    %v2934 = vsel %vm1943, %v2605, 0.0
    %2935 = vadd.xlane.f32.xlu0 %v2934
    %v2936 = vpop.xlane.xlu0 %2935
    %v2937 = vsel %vm1943, %v2607, 0.0
    %2938 = vadd.xlane.f32.xlu0 %v2937
    %v2939 = vpop.xlane.xlu0 %2938
    %v2940 = vsel %vm1943, %v2609, 0.0
    %2941 = vadd.xlane.f32.xlu0 %v2940
    %v2942 = vpop.xlane.xlu0 %2941
    %v2943 = vsel %vm1943, %v2611, 0.0
    %2944 = vadd.xlane.f32.xlu0 %v2943
    %v2945 = vpop.xlane.xlu0 %2944
    %v2946 = vsel %vm1943, %v2613, 0.0
    %2947 = vadd.xlane.f32.xlu0 %v2946
    %v2948 = vpop.xlane.xlu0 %2947
    %v2949 = vsel %vm1943, %v2615, 0.0
    %2950 = vadd.xlane.f32.xlu0 %v2949
    %v2951 = vpop.xlane.xlu0 %2950
    %v2952 = vsel %vm1943, %v2617, 0.0
    %2953 = vadd.xlane.f32.xlu0 %v2952
    %v2954 = vpop.xlane.xlu0 %2953
    %v2955 = vsel %vm1943, %v2619, 0.0
    %2956 = vadd.xlane.f32.xlu0 %v2955
    %v2957 = vpop.xlane.xlu0 %2956
    %v2958 = vsel %vm1943, %v2621, 0.0
    %2959 = vadd.xlane.f32.xlu0 %v2958
    %v2960 = vpop.xlane.xlu0 %2959
    %v2961 = vsel %vm1943, %v2623, 0.0
    %2962 = vadd.xlane.f32.xlu0 %v2961
    %v2963 = vpop.xlane.xlu0 %2962
    %v2964 = vsel %vm1943, %v2625, 0.0
    %2965 = vadd.xlane.f32.xlu0 %v2964
    %v2966 = vpop.xlane.xlu0 %2965
    %v2967 = vsel %vm1943, %v2627, 0.0
    %2968 = vadd.xlane.f32.xlu0 %v2967
    %v2969 = vpop.xlane.xlu0 %2968
    %v2970 = vsel %vm1943, %v2629, 0.0
    %2971 = vadd.xlane.f32.xlu0 %v2970
    %v2972 = vpop.xlane.xlu0 %2971
    %v2973 = vsel %vm1943, %v2631, 0.0
    %2974 = vadd.xlane.f32.xlu0 %v2973
    %v2975 = vpop.xlane.xlu0 %2974
    %v2976 = vsel %vm1943, %v2633, 0.0
    %2977 = vadd.xlane.f32.xlu0 %v2976
    %v2978 = vpop.xlane.xlu0 %2977
    %v2979 = vsel %vm1943, %v2635, 0.0
    %2980 = vadd.xlane.f32.xlu0 %v2979
    %v2981 = vpop.xlane.xlu0 %2980
    %v2982 = vsel %vm1943, %v2637, 0.0
    %2983 = vadd.xlane.f32.xlu0 %v2982
    %v2984 = vpop.xlane.xlu0 %2983
    %v2985 = vsel %vm1943, %v2639, 0.0
    %2986 = vadd.xlane.f32.xlu0 %v2985
    %v2987 = vpop.xlane.xlu0 %2986
    %v2988 = vsel %vm1943, %v2641, 0.0
    %2989 = vadd.xlane.f32.xlu0 %v2988
    %v2990 = vpop.xlane.xlu0 %2989
    %v2991 = vsel %vm1943, %v2643, 0.0
    %2992 = vadd.xlane.f32.xlu0 %v2991
    %v2993 = vpop.xlane.xlu0 %2992
    %v2994 = vsel %vm1943, %v2645, 0.0
    %2995 = vadd.xlane.f32.xlu0 %v2994
    %v2996 = vpop.xlane.xlu0 %2995
    %v2997 = vsel %vm1943, %v2647, 0.0
    %2998 = vadd.xlane.f32.xlu0 %v2997
    %v2999 = vpop.xlane.xlu0 %2998
    %v3000 = vsel %vm1943, %v2649, 0.0
    %3001 = vadd.xlane.f32.xlu0 %v3000
    %v3002 = vpop.xlane.xlu0 %3001
    %v3003 = vsel %vm1943, %v2651, 0.0
    %3004 = vadd.xlane.f32.xlu0 %v3003
    %v3005 = vpop.xlane.xlu0 %3004
    %v3006 = vsel %vm1943, %v2653, 0.0
    %3007 = vadd.xlane.f32.xlu0 %v3006
    %v3008 = vpop.xlane.xlu0 %3007
    %v3009 = vsel %vm1943, %v2655, 0.0
    %3010 = vadd.xlane.f32.xlu0 %v3009
    %v3011 = vpop.xlane.xlu0 %3010
    %v3012 = vsel %vm1943, %v2657, 0.0
    %3013 = vadd.xlane.f32.xlu0 %v3012
    %v3014 = vpop.xlane.xlu0 %3013
    %v3015 = vsel %vm1943, %v2659, 0.0
    %3016 = vadd.xlane.f32.xlu0 %v3015
    %v3017 = vpop.xlane.xlu0 %3016
    %v3018 = vsel %vm1943, %v2661, 0.0
    %3019 = vadd.xlane.f32.xlu0 %v3018
    %v3020 = vpop.xlane.xlu0 %3019
    %v3021 = vsel %vm1943, %v2663, 0.0
    %3022 = vadd.xlane.f32.xlu0 %v3021
    %v3023 = vpop.xlane.xlu0 %3022
    %v3024 = vsel %vm1943, %v2665, 0.0
    %3025 = vadd.xlane.f32.xlu0 %v3024
    %v3026 = vpop.xlane.xlu0 %3025
    %v3027 = vsel %vm1943, %v2667, 0.0
    %3028 = vadd.xlane.f32.xlu0 %v3027
    %v3029 = vpop.xlane.xlu0 %3028
    %v3030 = vsel %vm1943, %v2669, 0.0
    %3031 = vadd.xlane.f32.xlu0 %v3030
    %v3032 = vpop.xlane.xlu0 %3031
    %v3033 = vsel %vm1943, %v2671, 0.0
    %3034 = vadd.xlane.f32.xlu0 %v3033
    %v3035 = vpop.xlane.xlu0 %3034
    %v3036 = vsel %vm1943, %v2673, 0.0
    %3037 = vadd.xlane.f32.xlu0 %v3036
    %v3038 = vpop.xlane.xlu0 %3037
    %v3039 = vsel %vm1943, %v2675, 0.0
    %3040 = vadd.xlane.f32.xlu0 %v3039
    %v3041 = vpop.xlane.xlu0 %3040
    %v3042 = vsel %vm1943, %v2677, 0.0
    %3043 = vadd.xlane.f32.xlu0 %v3042
    %v3044 = vpop.xlane.xlu0 %3043
    %v3045 = vsel %vm1943, %v2679, 0.0
    %3046 = vadd.xlane.f32.xlu0 %v3045
    %v3047 = vpop.xlane.xlu0 %3046
    %v3048 = vsel %vm1943, %v2681, 0.0
    %3049 = vadd.xlane.f32.xlu0 %v3048
    %v3050 = vpop.xlane.xlu0 %3049
    %v3051 = vsel %vm1943, %v2683, 0.0
    %3052 = vadd.xlane.f32.xlu0 %v3051
    %v3053 = vpop.xlane.xlu0 %3052
    %v3054 = vsel %vm1943, %v2685, 0.0
    %3055 = vadd.xlane.f32.xlu0 %v3054
    %v3056 = vpop.xlane.xlu0 %3055
    %v3057 = vsel %vm1943, %v2687, 0.0
    %3058 = vadd.xlane.f32.xlu0 %v3057
    %v3059 = vpop.xlane.xlu0 %3058
    %v3060 = vsel %vm1943, %v2689, 0.0
    %3061 = vadd.xlane.f32.xlu0 %v3060
    %v3062 = vpop.xlane.xlu0 %3061
    %v3063 = vsel %vm1943, %v2691, 0.0
    %3064 = vadd.xlane.f32.xlu0 %v3063
    %v3065 = vpop.xlane.xlu0 %3064
    %v3066 = vsel %vm1943, %v2693, 0.0
    %3067 = vadd.xlane.f32.xlu0 %v3066
    %v3068 = vpop.xlane.xlu0 %3067
    %v3069 = vsel %vm1943, %v2695, 0.0
    %3070 = vadd.xlane.f32.xlu0 %v3069
    %v3071 = vpop.xlane.xlu0 %3070
    %v3072 = vsel %vm1943, %v2697, 0.0
    %3073 = vadd.xlane.f32.xlu0 %v3072
    %v3074 = vpop.xlane.xlu0 %3073
    %v3075 = vsel %vm1943, %v2699, 0.0
    %3076 = vadd.xlane.f32.xlu0 %v3075
    %v3077 = vpop.xlane.xlu0 %3076
    %v3078 = vsel %vm1943, %v2701, 0.0
    %3079 = vadd.xlane.f32.xlu0 %v3078
    %v3080 = vpop.xlane.xlu0 %3079
    %v3081 = vsel %vm1943, %v2703, 0.0
    %3082 = vadd.xlane.f32.xlu0 %v3081
    %v3083 = vpop.xlane.xlu0 %3082
    %v3084 = vsel %vm1943, %v2705, 0.0
    %3085 = vadd.xlane.f32.xlu0 %v3084
    %v3086 = vpop.xlane.xlu0 %3085
    %v3087 = vsel %vm1943, %v2707, 0.0
    %3088 = vadd.xlane.f32.xlu0 %v3087
    %v3089 = vpop.xlane.xlu0 %3088
    %v3090 = vsel %vm1943, %v2709, 0.0
    %3091 = vadd.xlane.f32.xlu0 %v3090
    %v3092 = vpop.xlane.xlu0 %3091
    %v3093 = vsel %vm1943, %v2711, 0.0
    %3094 = vadd.xlane.f32.xlu0 %v3093
    %v3095 = vpop.xlane.xlu0 %3094
    %v3096 = vpack.c.bf16 %v2459, %v2457
    %v3097 = vpack.c.bf16 %v2463, %v2461
    %v3098 = vpack.c.bf16 %v2467, %v2465
    %v3099 = vpack.c.bf16 %v2471, %v2469
    %v3100 = vpack.c.bf16 %v2475, %v2473
    %v3101 = vpack.c.bf16 %v2479, %v2477
    %v3102 = vpack.c.bf16 %v2483, %v2481
    %v3103 = vpack.c.bf16 %v2487, %v2485
    %v3104 = vpack.c.bf16 %v2491, %v2489
    %v3105 = vpack.c.bf16 %v2495, %v2493
    %v3106 = vpack.c.bf16 %v2499, %v2497
    %v3107 = vpack.c.bf16 %v2503, %v2501
    %v3108 = vpack.c.bf16 %v2507, %v2505
    %v3109 = vpack.c.bf16 %v2511, %v2509
    %v3110 = vpack.c.bf16 %v2515, %v2513
    %v3111 = vpack.c.bf16 %v2519, %v2517
    %v3112 = vpack.c.bf16 %v2523, %v2521
    %v3113 = vpack.c.bf16 %v2527, %v2525
    %v3114 = vpack.c.bf16 %v2531, %v2529
    %v3115 = vpack.c.bf16 %v2535, %v2533
    %v3116 = vpack.c.bf16 %v2539, %v2537
    %v3117 = vpack.c.bf16 %v2543, %v2541
    %v3118 = vpack.c.bf16 %v2547, %v2545
    %v3119 = vpack.c.bf16 %v2551, %v2549
    %v3120 = vpack.c.bf16 %v2555, %v2553
    %v3121 = vpack.c.bf16 %v2559, %v2557
    %v3122 = vpack.c.bf16 %v2563, %v2561
    %v3123 = vpack.c.bf16 %v2567, %v2565
    %v3124 = vpack.c.bf16 %v2571, %v2569
    %v3125 = vpack.c.bf16 %v2575, %v2573
    %v3126 = vpack.c.bf16 %v2579, %v2577
    %v3127 = vpack.c.bf16 %v2583, %v2581
    %v3128 = vpack.c.bf16 %v2587, %v2585
    %v3129 = vpack.c.bf16 %v2591, %v2589
    %v3130 = vpack.c.bf16 %v2595, %v2593
    %v3131 = vpack.c.bf16 %v2599, %v2597
    %v3132 = vpack.c.bf16 %v2603, %v2601
    %v3133 = vpack.c.bf16 %v2607, %v2605
    %v3134 = vpack.c.bf16 %v2611, %v2609
    %v3135 = vpack.c.bf16 %v2615, %v2613
    %v3136 = vpack.c.bf16 %v2619, %v2617
    %v3137 = vpack.c.bf16 %v2623, %v2621
    %v3138 = vpack.c.bf16 %v2627, %v2625
    %v3139 = vpack.c.bf16 %v2631, %v2629
    %v3140 = vpack.c.bf16 %v2635, %v2633
    %v3141 = vpack.c.bf16 %v2639, %v2637
    %v3142 = vpack.c.bf16 %v2643, %v2641
    %v3143 = vpack.c.bf16 %v2647, %v2645
    %v3144 = vpack.c.bf16 %v2651, %v2649
    %v3145 = vpack.c.bf16 %v2655, %v2653
    %v3146 = vpack.c.bf16 %v2659, %v2657
    %v3147 = vpack.c.bf16 %v2663, %v2661
    %v3148 = vpack.c.bf16 %v2667, %v2665
    %v3149 = vpack.c.bf16 %v2671, %v2669
    %v3150 = vpack.c.bf16 %v2675, %v2673
    %v3151 = vpack.c.bf16 %v2679, %v2677
    %v3152 = vpack.c.bf16 %v2683, %v2681
    %v3153 = vpack.c.bf16 %v2687, %v2685
    %v3154 = vpack.c.bf16 %v2691, %v2689
    %v3155 = vpack.c.bf16 %v2695, %v2693
    %v3156 = vpack.c.bf16 %v2699, %v2697
    %v3157 = vpack.c.bf16 %v2703, %v2701
    %v3158 = vpack.c.bf16 %v2707, %v2705
    %v3159 = vpack.c.bf16 %v2711, %v2709
    %v3160 = vpack.c.bf16 %v145, %v142
    %v3161 = vpack.c.bf16 %v153, %v150
    %v3162 = vpack.c.bf16 %v161, %v158
    %v3163 = vpack.c.bf16 %v169, %v166
    %v3165 = vsel %vm1943, %v3096, 0
    %v3168 = vsel %vm1943, %v3097, 0
    %v3171 = vsel %vm1943, %v3098, 0
    %v3174 = vsel %vm1943, %v3099, 0
    %v3177 = vsel %vm1943, %v3100, 0
    %v3180 = vsel %vm1943, %v3101, 0
    %v3183 = vsel %vm1943, %v3102, 0
    %v3186 = vsel %vm1943, %v3103, 0
    %v3189 = vsel %vm1943, %v3104, 0
    %v3192 = vsel %vm1943, %v3105, 0
    %v3195 = vsel %vm1943, %v3106, 0
    %v3198 = vsel %vm1943, %v3107, 0
    %v3201 = vsel %vm1943, %v3108, 0
    %v3204 = vsel %vm1943, %v3109, 0
    %v3207 = vsel %vm1943, %v3110, 0
    %v3210 = vsel %vm1943, %v3111, 0
    %v3213 = vsel %vm1943, %v3112, 0
    %v3216 = vsel %vm1943, %v3113, 0
    %v3219 = vsel %vm1943, %v3114, 0
    %v3222 = vsel %vm1943, %v3115, 0
    %v3225 = vsel %vm1943, %v3116, 0
    %v3228 = vsel %vm1943, %v3117, 0
    %v3231 = vsel %vm1943, %v3118, 0
    %v3234 = vsel %vm1943, %v3119, 0
    %v3237 = vsel %vm1943, %v3120, 0
    %v3240 = vsel %vm1943, %v3121, 0
    %v3243 = vsel %vm1943, %v3122, 0
    %v3246 = vsel %vm1943, %v3123, 0
    %v3249 = vsel %vm1943, %v3124, 0
    %v3252 = vsel %vm1943, %v3125, 0
    %v3255 = vsel %vm1943, %v3126, 0
    %v3258 = vsel %vm1943, %v3127, 0
    %v3261 = vsel %vm1943, %v3128, 0
    %v3264 = vsel %vm1943, %v3129, 0
    %v3267 = vsel %vm1943, %v3130, 0
    %v3270 = vsel %vm1943, %v3131, 0
    %v3273 = vsel %vm1943, %v3132, 0
    %v3276 = vsel %vm1943, %v3133, 0
    %v3279 = vsel %vm1943, %v3134, 0
    %v3282 = vsel %vm1943, %v3135, 0
    %v3285 = vsel %vm1943, %v3136, 0
    %v3288 = vsel %vm1943, %v3137, 0
    %v3291 = vsel %vm1943, %v3138, 0
    %v3294 = vsel %vm1943, %v3139, 0
    %v3297 = vsel %vm1943, %v3140, 0
    %v3300 = vsel %vm1943, %v3141, 0
    %v3303 = vsel %vm1943, %v3142, 0
    %v3306 = vsel %vm1943, %v3143, 0
    %v3309 = vsel %vm1943, %v3144, 0
    %v3312 = vsel %vm1943, %v3145, 0
    %v3315 = vsel %vm1943, %v3146, 0
    %v3318 = vsel %vm1943, %v3147, 0
    %v3321 = vsel %vm1943, %v3148, 0
    %v3324 = vsel %vm1943, %v3149, 0
    %v3327 = vsel %vm1943, %v3150, 0
    %v3330 = vsel %vm1943, %v3151, 0
    %v3333 = vsel %vm1943, %v3152, 0
    %v3336 = vsel %vm1943, %v3153, 0
    %v3339 = vsel %vm1943, %v3154, 0
    %v3342 = vsel %vm1943, %v3155, 0
    %v3345 = vsel %vm1943, %v3156, 0
    %v3348 = vsel %vm1943, %v3157, 0
    %v3351 = vsel %vm1943, %v3158, 0
    %v3354 = vsel %vm1943, %v3159, 0
    %3356 = vmatprep.subr.bf16.mxu0 0
    %3357 = vmatpush1.bf16.msra.mxu0 %v3160
    %3358 = vmatprep.subr.bf16.mxu0 0
    %3359 = vmatpush1.bf16.msra.mxu0 %v3161
    %3360 = vmatprep.subr.bf16.mxu0 0
    %3361 = vmatpush1.bf16.msra.mxu0 %v3162
    %3362 = vmatprep.subr.bf16.mxu0 0
    %3363 = vmatpush1.bf16.msra.mxu0 %v3163
    %3364 = vmatprep.subr.bf16.mxu0 0
    %3365 = vmatpush1.bf16.msra.mxu0 0
    %3366 = vmatprep.subr.bf16.mxu0 0
    %3367 = vmatpush1.bf16.msra.mxu0 0
    %3368 = vmatprep.subr.bf16.mxu0 0
    %3369 = vmatpush1.bf16.msra.mxu0 0
    %3370 = vmatprep.subr.bf16.mxu0 0
    %3371 = vmatpush1.bf16.msra.mxu0 0
    %3372 = vmatprep.subr.bf16.mxu0 0
    %3373 = vmatpush1.bf16.msra.mxu0 0
    %3374 = vmatprep.subr.bf16.mxu0 0
    %3375 = vmatpush1.bf16.msra.mxu0 0
    %3376 = vmatprep.subr.bf16.mxu0 0
    %3377 = vmatpush1.bf16.msra.mxu0 0
    %3378 = vmatprep.subr.bf16.mxu0 0
    %3379 = vmatpush1.bf16.msra.mxu0 0
    %3380 = vmatprep.subr.bf16.mxu0 0
    %3381 = vmatpush1.bf16.msra.mxu0 0
    %3382 = vmatprep.subr.bf16.mxu0 0
    %3383 = vmatpush1.bf16.msra.mxu0 0
    %3384 = vmatprep.subr.bf16.mxu0 0
    %3385 = vmatpush1.bf16.msra.mxu0 0
    %3386 = vmatprep.subr.bf16.mxu0 0
    %3387 = vmatpush1.bf16.msra.mxu0 0
    %3388 = vmatprep.mubr.bf16.mxu0 0
    %3389 = vmatmul.mubr.bf16.gmra.mrb[0].mxu0 %v3165
    %v3390 = vpop.f32.mrb[0].mxu0
    %v3391 = vadd.f32 0.0, %v3390
    %v3392 = vpop.f32.mrb[0].mxu0
    %v3393 = vpop.f32.mrb[0].mxu0
    %v3394 = vadd.f32 0.0, %v3393
    %v3395 = vpop.f32.mrb[0].mxu0
    %3396 = vmatprep.mubr.bf16.mxu0 0
    %3397 = vmatmul.mubr.bf16.gmra.mrb[0].mxu0 %v3168
    %v3398 = vpop.f32.mrb[0].mxu0
    %v3399 = vadd.f32 0.0, %v3398
    %v3400 = vpop.f32.mrb[0].mxu0
    %v3401 = vpop.f32.mrb[0].mxu0
    %v3402 = vadd.f32 0.0, %v3401
    %v3403 = vpop.f32.mrb[0].mxu0
    %3404 = vmatprep.mubr.bf16.mxu0 0
    %3405 = vmatmul.mubr.bf16.gmra.mrb[0].mxu0 %v3171
    %v3406 = vpop.f32.mrb[0].mxu0
    %v3407 = vadd.f32 0.0, %v3406
    %v3408 = vpop.f32.mrb[0].mxu0
    %v3409 = vpop.f32.mrb[0].mxu0
    %v3410 = vadd.f32 0.0, %v3409
    %v3411 = vpop.f32.mrb[0].mxu0
    %3412 = vmatprep.mubr.bf16.mxu0 0
    %3413 = vmatmul.mubr.bf16.gmra.mrb[0].mxu0 %v3174
    %v3414 = vpop.f32.mrb[0].mxu0
    %v3415 = vadd.f32 0.0, %v3414
    %v3416 = vpop.f32.mrb[0].mxu0
    %v3417 = vpop.f32.mrb[0].mxu0
    %v3418 = vadd.f32 0.0, %v3417
    %v3419 = vpop.f32.mrb[0].mxu0
    %3420 = vmatprep.mubr.bf16.mxu0 0
    %3421 = vmatmul.mubr.bf16.gmra.mrb[0].mxu0 %v3177
    %v3422 = vpop.f32.mrb[0].mxu0
    %v3423 = vadd.f32 0.0, %v3422
    %v3424 = vpop.f32.mrb[0].mxu0
    %v3425 = vpop.f32.mrb[0].mxu0
    %v3426 = vadd.f32 0.0, %v3425
    %v3427 = vpop.f32.mrb[0].mxu0
    %3428 = vmatprep.mubr.bf16.mxu0 0
    %3429 = vmatmul.mubr.bf16.gmra.mrb[0].mxu0 %v3180
    %v3430 = vpop.f32.mrb[0].mxu0
    %v3431 = vadd.f32 0.0, %v3430
    %v3432 = vpop.f32.mrb[0].mxu0
    %v3433 = vpop.f32.mrb[0].mxu0
    %v3434 = vadd.f32 0.0, %v3433
    %v3435 = vpop.f32.mrb[0].mxu0
    %3436 = vmatprep.mubr.bf16.mxu0 0
    %3437 = vmatmul.mubr.bf16.gmra.mrb[0].mxu0 %v3183
    %v3438 = vpop.f32.mrb[0].mxu0
    %v3439 = vadd.f32 0.0, %v3438
    %v3440 = vpop.f32.mrb[0].mxu0
    %v3441 = vpop.f32.mrb[0].mxu0
    %v3442 = vadd.f32 0.0, %v3441
    %v3443 = vpop.f32.mrb[0].mxu0
    %3444 = vmatprep.mubr.bf16.mxu0 0
    %3445 = vmatmul.mubr.bf16.gmra.mrb[0].mxu0 %v3186
    %v3446 = vpop.f32.mrb[0].mxu0
    %v3447 = vadd.f32 0.0, %v3446
    %v3448 = vpop.f32.mrb[0].mxu0
    %v3449 = vpop.f32.mrb[0].mxu0
    %v3450 = vadd.f32 0.0, %v3449
    %v3451 = vpop.f32.mrb[0].mxu0
    %3452 = vmatprep.mubr.bf16.mxu0 0
    %3453 = vmatmul.mubr.bf16.gmra.mrb[0].mxu0 %v3189
    %v3454 = vpop.f32.mrb[0].mxu0
    %v3455 = vadd.f32 0.0, %v3454
    %v3456 = vpop.f32.mrb[0].mxu0
    %v3457 = vpop.f32.mrb[0].mxu0
    %v3458 = vadd.f32 0.0, %v3457
    %v3459 = vpop.f32.mrb[0].mxu0
    %3460 = vmatprep.mubr.bf16.mxu0 0
    %3461 = vmatmul.mubr.bf16.gmra.mrb[0].mxu0 %v3192
    %v3462 = vpop.f32.mrb[0].mxu0
    %v3463 = vadd.f32 0.0, %v3462
    %v3464 = vpop.f32.mrb[0].mxu0
    %v3465 = vpop.f32.mrb[0].mxu0
    %v3466 = vadd.f32 0.0, %v3465
    %v3467 = vpop.f32.mrb[0].mxu0
    %3468 = vmatprep.mubr.bf16.mxu0 0
    %3469 = vmatmul.mubr.bf16.gmra.mrb[0].mxu0 %v3195
    %v3470 = vpop.f32.mrb[0].mxu0
    %v3471 = vadd.f32 0.0, %v3470
    %v3472 = vpop.f32.mrb[0].mxu0
    %v3473 = vpop.f32.mrb[0].mxu0
    %v3474 = vadd.f32 0.0, %v3473
    %v3475 = vpop.f32.mrb[0].mxu0
    %3476 = vmatprep.mubr.bf16.mxu0 0
    %3477 = vmatmul.mubr.bf16.gmra.mrb[0].mxu0 %v3198
    %v3478 = vpop.f32.mrb[0].mxu0
    %v3479 = vadd.f32 0.0, %v3478
    %v3480 = vpop.f32.mrb[0].mxu0
    %v3481 = vpop.f32.mrb[0].mxu0
    %v3482 = vadd.f32 0.0, %v3481
    %v3483 = vpop.f32.mrb[0].mxu0
    %3484 = vmatprep.mubr.bf16.mxu0 0
    %3485 = vmatmul.mubr.bf16.gmra.mrb[0].mxu0 %v3201
    %v3486 = vpop.f32.mrb[0].mxu0
    %v3487 = vadd.f32 0.0, %v3486
    %v3488 = vpop.f32.mrb[0].mxu0
    %v3489 = vpop.f32.mrb[0].mxu0
    %v3490 = vadd.f32 0.0, %v3489
    %v3491 = vpop.f32.mrb[0].mxu0
    %3492 = vmatprep.mubr.bf16.mxu0 0
    %3493 = vmatmul.mubr.bf16.gmra.mrb[0].mxu0 %v3204
    %v3494 = vpop.f32.mrb[0].mxu0
    %v3495 = vadd.f32 0.0, %v3494
    %v3496 = vpop.f32.mrb[0].mxu0
    %v3497 = vpop.f32.mrb[0].mxu0
    %v3498 = vadd.f32 0.0, %v3497
    %v3499 = vpop.f32.mrb[0].mxu0
    %3500 = vmatprep.mubr.bf16.mxu0 0
    %3501 = vmatmul.mubr.bf16.gmra.mrb[0].mxu0 %v3207
    %v3502 = vpop.f32.mrb[0].mxu0
    %v3503 = vadd.f32 0.0, %v3502
    %v3504 = vpop.f32.mrb[0].mxu0
    %v3505 = vpop.f32.mrb[0].mxu0
    %v3506 = vadd.f32 0.0, %v3505
    %v3507 = vpop.f32.mrb[0].mxu0
    %3508 = vmatprep.mubr.bf16.mxu0 0
    %3509 = vmatmul.mubr.bf16.gmra.mrb[0].mxu0 %v3210
    %v3510 = vpop.f32.mrb[0].mxu0
    %v3511 = vadd.f32 0.0, %v3510
    %v3512 = vpop.f32.mrb[0].mxu0
    %v3513 = vpop.f32.mrb[0].mxu0
    %v3514 = vadd.f32 0.0, %v3513
    %v3515 = vpop.f32.mrb[0].mxu0
    %3516 = vmatprep.mubr.bf16.mxu0 0
    %3517 = vmatmul.mubr.bf16.gmra.mrb[0].mxu0 %v3213
    %v3518 = vpop.f32.mrb[0].mxu0
    %v3519 = vadd.f32 0.0, %v3518
    %v3520 = vpop.f32.mrb[0].mxu0
    %v3521 = vpop.f32.mrb[0].mxu0
    %v3522 = vadd.f32 0.0, %v3521
    %v3523 = vpop.f32.mrb[0].mxu0
    %3524 = vmatprep.mubr.bf16.mxu0 0
    %3525 = vmatmul.mubr.bf16.gmra.mrb[0].mxu0 %v3216
    %v3526 = vpop.f32.mrb[0].mxu0
    %v3527 = vadd.f32 0.0, %v3526
    %v3528 = vpop.f32.mrb[0].mxu0
    %v3529 = vpop.f32.mrb[0].mxu0
    %v3530 = vadd.f32 0.0, %v3529
    %v3531 = vpop.f32.mrb[0].mxu0
    %3532 = vmatprep.mubr.bf16.mxu0 0
    %3533 = vmatmul.mubr.bf16.gmra.mrb[0].mxu0 %v3219
    %v3534 = vpop.f32.mrb[0].mxu0
    %v3535 = vadd.f32 0.0, %v3534
    %v3536 = vpop.f32.mrb[0].mxu0
    %v3537 = vpop.f32.mrb[0].mxu0
    %v3538 = vadd.f32 0.0, %v3537
    %v3539 = vpop.f32.mrb[0].mxu0
    %3540 = vmatprep.mubr.bf16.mxu0 0
    %3541 = vmatmul.mubr.bf16.gmra.mrb[0].mxu0 %v3222
    %v3542 = vpop.f32.mrb[0].mxu0
    %v3543 = vadd.f32 0.0, %v3542
    %v3544 = vpop.f32.mrb[0].mxu0
    %v3545 = vpop.f32.mrb[0].mxu0
    %v3546 = vadd.f32 0.0, %v3545
    %v3547 = vpop.f32.mrb[0].mxu0
    %3548 = vmatprep.mubr.bf16.mxu0 0
    %3549 = vmatmul.mubr.bf16.gmra.mrb[0].mxu0 %v3225
    %v3550 = vpop.f32.mrb[0].mxu0
    %v3551 = vadd.f32 0.0, %v3550
    %v3552 = vpop.f32.mrb[0].mxu0
    %v3553 = vpop.f32.mrb[0].mxu0
    %v3554 = vadd.f32 0.0, %v3553
    %v3555 = vpop.f32.mrb[0].mxu0
    %3556 = vmatprep.mubr.bf16.mxu0 0
    %3557 = vmatmul.mubr.bf16.gmra.mrb[0].mxu0 %v3228
    %v3558 = vpop.f32.mrb[0].mxu0
    %v3559 = vadd.f32 0.0, %v3558
    %v3560 = vpop.f32.mrb[0].mxu0
    %v3561 = vpop.f32.mrb[0].mxu0
    %v3562 = vadd.f32 0.0, %v3561
    %v3563 = vpop.f32.mrb[0].mxu0
    %3564 = vmatprep.mubr.bf16.mxu0 0
    %3565 = vmatmul.mubr.bf16.gmra.mrb[0].mxu0 %v3231
    %v3566 = vpop.f32.mrb[0].mxu0
    %v3567 = vadd.f32 0.0, %v3566
    %v3568 = vpop.f32.mrb[0].mxu0
    %v3569 = vpop.f32.mrb[0].mxu0
    %v3570 = vadd.f32 0.0, %v3569
    %v3571 = vpop.f32.mrb[0].mxu0
    %3572 = vmatprep.mubr.bf16.mxu0 0
    %3573 = vmatmul.mubr.bf16.gmra.mrb[0].mxu0 %v3234
    %v3574 = vpop.f32.mrb[0].mxu0
    %v3575 = vadd.f32 0.0, %v3574
    %v3576 = vpop.f32.mrb[0].mxu0
    %v3577 = vpop.f32.mrb[0].mxu0
    %v3578 = vadd.f32 0.0, %v3577
    %v3579 = vpop.f32.mrb[0].mxu0
    %3580 = vmatprep.mubr.bf16.mxu0 0
    %3581 = vmatmul.mubr.bf16.gmra.mrb[0].mxu0 %v3237
    %v3582 = vpop.f32.mrb[0].mxu0
    %v3583 = vadd.f32 0.0, %v3582
    %v3584 = vpop.f32.mrb[0].mxu0
    %v3585 = vpop.f32.mrb[0].mxu0
    %v3586 = vadd.f32 0.0, %v3585
    %v3587 = vpop.f32.mrb[0].mxu0
    %3588 = vmatprep.mubr.bf16.mxu0 0
    %3589 = vmatmul.mubr.bf16.gmra.mrb[0].mxu0 %v3240
    %v3590 = vpop.f32.mrb[0].mxu0
    %v3591 = vadd.f32 0.0, %v3590
    %v3592 = vpop.f32.mrb[0].mxu0
    %v3593 = vpop.f32.mrb[0].mxu0
    %v3594 = vadd.f32 0.0, %v3593
    %v3595 = vpop.f32.mrb[0].mxu0
    %3596 = vmatprep.mubr.bf16.mxu0 0
    %3597 = vmatmul.mubr.bf16.gmra.mrb[0].mxu0 %v3243
    %v3598 = vpop.f32.mrb[0].mxu0
    %v3599 = vadd.f32 0.0, %v3598
    %v3600 = vpop.f32.mrb[0].mxu0
    %v3601 = vpop.f32.mrb[0].mxu0
    %v3602 = vadd.f32 0.0, %v3601
    %v3603 = vpop.f32.mrb[0].mxu0
    %3604 = vmatprep.mubr.bf16.mxu0 0
    %3605 = vmatmul.mubr.bf16.gmra.mrb[0].mxu0 %v3246
    %v3606 = vpop.f32.mrb[0].mxu0
    %v3607 = vadd.f32 0.0, %v3606
    %v3608 = vpop.f32.mrb[0].mxu0
    %v3609 = vpop.f32.mrb[0].mxu0
    %v3610 = vadd.f32 0.0, %v3609
    %v3611 = vpop.f32.mrb[0].mxu0
    %3612 = vmatprep.mubr.bf16.mxu0 0
    %3613 = vmatmul.mubr.bf16.gmra.mrb[0].mxu0 %v3249
    %v3614 = vpop.f32.mrb[0].mxu0
    %v3615 = vadd.f32 0.0, %v3614
    %v3616 = vpop.f32.mrb[0].mxu0
    %v3617 = vpop.f32.mrb[0].mxu0
    %v3618 = vadd.f32 0.0, %v3617
    %v3619 = vpop.f32.mrb[0].mxu0
    %3620 = vmatprep.mubr.bf16.mxu0 0
    %3621 = vmatmul.mubr.bf16.gmra.mrb[0].mxu0 %v3252
    %v3622 = vpop.f32.mrb[0].mxu0
    %v3623 = vadd.f32 0.0, %v3622
    %v3624 = vpop.f32.mrb[0].mxu0
    %v3625 = vpop.f32.mrb[0].mxu0
    %v3626 = vadd.f32 0.0, %v3625
    %v3627 = vpop.f32.mrb[0].mxu0
    %3628 = vmatprep.mubr.bf16.mxu0 0
    %3629 = vmatmul.mubr.bf16.gmra.mrb[0].mxu0 %v3255
    %v3630 = vpop.f32.mrb[0].mxu0
    %v3631 = vadd.f32 0.0, %v3630
    %v3632 = vpop.f32.mrb[0].mxu0
    %v3633 = vpop.f32.mrb[0].mxu0
    %v3634 = vadd.f32 0.0, %v3633
    %v3635 = vpop.f32.mrb[0].mxu0
    %3636 = vmatprep.mubr.bf16.mxu0 0
    %3637 = vmatmul.mubr.bf16.gmra.mrb[0].mxu0 %v3258
    %v3638 = vpop.f32.mrb[0].mxu0
    %v3639 = vadd.f32 0.0, %v3638
    %v3640 = vpop.f32.mrb[0].mxu0
    %v3641 = vpop.f32.mrb[0].mxu0
    %v3642 = vadd.f32 0.0, %v3641
    %v3643 = vpop.f32.mrb[0].mxu0
    %3644 = vmatprep.mubr.bf16.mxu0 0
    %3645 = vmatmul.mubr.bf16.gmra.mrb[0].mxu0 %v3261
    %v3646 = vpop.f32.mrb[0].mxu0
    %v3647 = vadd.f32 0.0, %v3646
    %v3648 = vpop.f32.mrb[0].mxu0
    %v3649 = vpop.f32.mrb[0].mxu0
    %v3650 = vadd.f32 0.0, %v3649
    %v3651 = vpop.f32.mrb[0].mxu0
    %3652 = vmatprep.mubr.bf16.mxu0 0
    %3653 = vmatmul.mubr.bf16.gmra.mrb[0].mxu0 %v3264
    %v3654 = vpop.f32.mrb[0].mxu0
    %v3655 = vadd.f32 0.0, %v3654
    %v3656 = vpop.f32.mrb[0].mxu0
    %v3657 = vpop.f32.mrb[0].mxu0
    %v3658 = vadd.f32 0.0, %v3657
    %v3659 = vpop.f32.mrb[0].mxu0
    %3660 = vmatprep.mubr.bf16.mxu0 0
    %3661 = vmatmul.mubr.bf16.gmra.mrb[0].mxu0 %v3267
    %v3662 = vpop.f32.mrb[0].mxu0
    %v3663 = vadd.f32 0.0, %v3662
    %v3664 = vpop.f32.mrb[0].mxu0
    %v3665 = vpop.f32.mrb[0].mxu0
    %v3666 = vadd.f32 0.0, %v3665
    %v3667 = vpop.f32.mrb[0].mxu0
    %3668 = vmatprep.mubr.bf16.mxu0 0
    %3669 = vmatmul.mubr.bf16.gmra.mrb[0].mxu0 %v3270
    %v3670 = vpop.f32.mrb[0].mxu0
    %v3671 = vadd.f32 0.0, %v3670
    %v3672 = vpop.f32.mrb[0].mxu0
    %v3673 = vpop.f32.mrb[0].mxu0
    %v3674 = vadd.f32 0.0, %v3673
    %v3675 = vpop.f32.mrb[0].mxu0
    %3676 = vmatprep.mubr.bf16.mxu0 0
    %3677 = vmatmul.mubr.bf16.gmra.mrb[0].mxu0 %v3273
    %v3678 = vpop.f32.mrb[0].mxu0
    %v3679 = vadd.f32 0.0, %v3678
    %v3680 = vpop.f32.mrb[0].mxu0
    %v3681 = vpop.f32.mrb[0].mxu0
    %v3682 = vadd.f32 0.0, %v3681
    %v3683 = vpop.f32.mrb[0].mxu0
    %3684 = vmatprep.mubr.bf16.mxu0 0
    %3685 = vmatmul.mubr.bf16.gmra.mrb[0].mxu0 %v3276
    %v3686 = vpop.f32.mrb[0].mxu0
    %v3687 = vadd.f32 0.0, %v3686
    %v3688 = vpop.f32.mrb[0].mxu0
    %v3689 = vpop.f32.mrb[0].mxu0
    %v3690 = vadd.f32 0.0, %v3689
    %v3691 = vpop.f32.mrb[0].mxu0
    %3692 = vmatprep.mubr.bf16.mxu0 0
    %3693 = vmatmul.mubr.bf16.gmra.mrb[0].mxu0 %v3279
    %v3694 = vpop.f32.mrb[0].mxu0
    %v3695 = vadd.f32 0.0, %v3694
    %v3696 = vpop.f32.mrb[0].mxu0
    %v3697 = vpop.f32.mrb[0].mxu0
    %v3698 = vadd.f32 0.0, %v3697
    %v3699 = vpop.f32.mrb[0].mxu0
    %3700 = vmatprep.mubr.bf16.mxu0 0
    %3701 = vmatmul.mubr.bf16.gmra.mrb[0].mxu0 %v3282
    %v3702 = vpop.f32.mrb[0].mxu0
    %v3703 = vadd.f32 0.0, %v3702
    %v3704 = vpop.f32.mrb[0].mxu0
    %v3705 = vpop.f32.mrb[0].mxu0
    %v3706 = vadd.f32 0.0, %v3705
    %v3707 = vpop.f32.mrb[0].mxu0
    %3708 = vmatprep.mubr.bf16.mxu0 0
    %3709 = vmatmul.mubr.bf16.gmra.mrb[0].mxu0 %v3285
    %v3710 = vpop.f32.mrb[0].mxu0
    %v3711 = vadd.f32 0.0, %v3710
    %v3712 = vpop.f32.mrb[0].mxu0
    %v3713 = vpop.f32.mrb[0].mxu0
    %v3714 = vadd.f32 0.0, %v3713
    %v3715 = vpop.f32.mrb[0].mxu0
    %3716 = vmatprep.mubr.bf16.mxu0 0
    %3717 = vmatmul.mubr.bf16.gmra.mrb[0].mxu0 %v3288
    %v3718 = vpop.f32.mrb[0].mxu0
    %v3719 = vadd.f32 0.0, %v3718
    %v3720 = vpop.f32.mrb[0].mxu0
    %v3721 = vpop.f32.mrb[0].mxu0
    %v3722 = vadd.f32 0.0, %v3721
    %v3723 = vpop.f32.mrb[0].mxu0
    %3724 = vmatprep.mubr.bf16.mxu0 0
    %3725 = vmatmul.mubr.bf16.gmra.mrb[0].mxu0 %v3291
    %v3726 = vpop.f32.mrb[0].mxu0
    %v3727 = vadd.f32 0.0, %v3726
    %v3728 = vpop.f32.mrb[0].mxu0
    %v3729 = vpop.f32.mrb[0].mxu0
    %v3730 = vadd.f32 0.0, %v3729
    %v3731 = vpop.f32.mrb[0].mxu0
    %3732 = vmatprep.mubr.bf16.mxu0 0
    %3733 = vmatmul.mubr.bf16.gmra.mrb[0].mxu0 %v3294
    %v3734 = vpop.f32.mrb[0].mxu0
    %v3735 = vadd.f32 0.0, %v3734
    %v3736 = vpop.f32.mrb[0].mxu0
    %v3737 = vpop.f32.mrb[0].mxu0
    %v3738 = vadd.f32 0.0, %v3737
    %v3739 = vpop.f32.mrb[0].mxu0
    %3740 = vmatprep.mubr.bf16.mxu0 0
    %3741 = vmatmul.mubr.bf16.gmra.mrb[0].mxu0 %v3297
    %v3742 = vpop.f32.mrb[0].mxu0
    %v3743 = vadd.f32 0.0, %v3742
    %v3744 = vpop.f32.mrb[0].mxu0
    %v3745 = vpop.f32.mrb[0].mxu0
    %v3746 = vadd.f32 0.0, %v3745
    %v3747 = vpop.f32.mrb[0].mxu0
    %3748 = vmatprep.mubr.bf16.mxu0 0
    %3749 = vmatmul.mubr.bf16.gmra.mrb[0].mxu0 %v3300
    %v3750 = vpop.f32.mrb[0].mxu0
    %v3751 = vadd.f32 0.0, %v3750
    %v3752 = vpop.f32.mrb[0].mxu0
    %v3753 = vpop.f32.mrb[0].mxu0
    %v3754 = vadd.f32 0.0, %v3753
    %v3755 = vpop.f32.mrb[0].mxu0
    %3756 = vmatprep.mubr.bf16.mxu0 0
    %3757 = vmatmul.mubr.bf16.gmra.mrb[0].mxu0 %v3303
    %v3758 = vpop.f32.mrb[0].mxu0
    %v3759 = vadd.f32 0.0, %v3758
    %v3760 = vpop.f32.mrb[0].mxu0
    %v3761 = vpop.f32.mrb[0].mxu0
    %v3762 = vadd.f32 0.0, %v3761
    %v3763 = vpop.f32.mrb[0].mxu0
    %3764 = vmatprep.mubr.bf16.mxu0 0
    %3765 = vmatmul.mubr.bf16.gmra.mrb[0].mxu0 %v3306
    %v3766 = vpop.f32.mrb[0].mxu0
    %v3767 = vadd.f32 0.0, %v3766
    %v3768 = vpop.f32.mrb[0].mxu0
    %v3769 = vpop.f32.mrb[0].mxu0
    %v3770 = vadd.f32 0.0, %v3769
    %v3771 = vpop.f32.mrb[0].mxu0
    %3772 = vmatprep.mubr.bf16.mxu0 0
    %3773 = vmatmul.mubr.bf16.gmra.mrb[0].mxu0 %v3309
    %v3774 = vpop.f32.mrb[0].mxu0
    %v3775 = vadd.f32 0.0, %v3774
    %v3776 = vpop.f32.mrb[0].mxu0
    %v3777 = vpop.f32.mrb[0].mxu0
    %v3778 = vadd.f32 0.0, %v3777
    %v3779 = vpop.f32.mrb[0].mxu0
    %3780 = vmatprep.mubr.bf16.mxu0 0
    %3781 = vmatmul.mubr.bf16.gmra.mrb[0].mxu0 %v3312
    %v3782 = vpop.f32.mrb[0].mxu0
    %v3783 = vadd.f32 0.0, %v3782
    %v3784 = vpop.f32.mrb[0].mxu0
    %v3785 = vpop.f32.mrb[0].mxu0
    %v3786 = vadd.f32 0.0, %v3785
    %v3787 = vpop.f32.mrb[0].mxu0
    %3788 = vmatprep.mubr.bf16.mxu0 0
    %3789 = vmatmul.mubr.bf16.gmra.mrb[0].mxu0 %v3315
    %v3790 = vpop.f32.mrb[0].mxu0
    %v3791 = vadd.f32 0.0, %v3790
    %v3792 = vpop.f32.mrb[0].mxu0
    %v3793 = vpop.f32.mrb[0].mxu0
    %v3794 = vadd.f32 0.0, %v3793
    %v3795 = vpop.f32.mrb[0].mxu0
    %3796 = vmatprep.mubr.bf16.mxu0 0
    %3797 = vmatmul.mubr.bf16.gmra.mrb[0].mxu0 %v3318
    %v3798 = vpop.f32.mrb[0].mxu0
    %v3799 = vadd.f32 0.0, %v3798
    %v3800 = vpop.f32.mrb[0].mxu0
    %v3801 = vpop.f32.mrb[0].mxu0
    %v3802 = vadd.f32 0.0, %v3801
    %v3803 = vpop.f32.mrb[0].mxu0
    %3804 = vmatprep.mubr.bf16.mxu0 0
    %3805 = vmatmul.mubr.bf16.gmra.mrb[0].mxu0 %v3321
    %v3806 = vpop.f32.mrb[0].mxu0
    %v3807 = vadd.f32 0.0, %v3806
    %v3808 = vpop.f32.mrb[0].mxu0
    %v3809 = vpop.f32.mrb[0].mxu0
    %v3810 = vadd.f32 0.0, %v3809
    %v3811 = vpop.f32.mrb[0].mxu0
    %3812 = vmatprep.mubr.bf16.mxu0 0
    %3813 = vmatmul.mubr.bf16.gmra.mrb[0].mxu0 %v3324
    %v3814 = vpop.f32.mrb[0].mxu0
    %v3815 = vadd.f32 0.0, %v3814
    %v3816 = vpop.f32.mrb[0].mxu0
    %v3817 = vpop.f32.mrb[0].mxu0
    %v3818 = vadd.f32 0.0, %v3817
    %v3819 = vpop.f32.mrb[0].mxu0
    %3820 = vmatprep.mubr.bf16.mxu0 0
    %3821 = vmatmul.mubr.bf16.gmra.mrb[0].mxu0 %v3327
    %v3822 = vpop.f32.mrb[0].mxu0
    %v3823 = vadd.f32 0.0, %v3822
    %v3824 = vpop.f32.mrb[0].mxu0
    %v3825 = vpop.f32.mrb[0].mxu0
    %v3826 = vadd.f32 0.0, %v3825
    %v3827 = vpop.f32.mrb[0].mxu0
    %3828 = vmatprep.mubr.bf16.mxu0 0
    %3829 = vmatmul.mubr.bf16.gmra.mrb[0].mxu0 %v3330
    %v3830 = vpop.f32.mrb[0].mxu0
    %v3831 = vadd.f32 0.0, %v3830
    %v3832 = vpop.f32.mrb[0].mxu0
    %v3833 = vpop.f32.mrb[0].mxu0
    %v3834 = vadd.f32 0.0, %v3833
    %v3835 = vpop.f32.mrb[0].mxu0
    %3836 = vmatprep.mubr.bf16.mxu0 0
    %3837 = vmatmul.mubr.bf16.gmra.mrb[0].mxu0 %v3333
    %v3838 = vpop.f32.mrb[0].mxu0
    %v3839 = vadd.f32 0.0, %v3838
    %v3840 = vpop.f32.mrb[0].mxu0
    %v3841 = vpop.f32.mrb[0].mxu0
    %v3842 = vadd.f32 0.0, %v3841
    %v3843 = vpop.f32.mrb[0].mxu0
    %3844 = vmatprep.mubr.bf16.mxu0 0
    %3845 = vmatmul.mubr.bf16.gmra.mrb[0].mxu0 %v3336
    %v3846 = vpop.f32.mrb[0].mxu0
    %v3847 = vadd.f32 0.0, %v3846
    %v3848 = vpop.f32.mrb[0].mxu0
    %v3849 = vpop.f32.mrb[0].mxu0
    %v3850 = vadd.f32 0.0, %v3849
    %v3851 = vpop.f32.mrb[0].mxu0
    %3852 = vmatprep.mubr.bf16.mxu0 0
    %3853 = vmatmul.mubr.bf16.gmra.mrb[0].mxu0 %v3339
    %v3854 = vpop.f32.mrb[0].mxu0
    %v3855 = vadd.f32 0.0, %v3854
    %v3856 = vpop.f32.mrb[0].mxu0
    %v3857 = vpop.f32.mrb[0].mxu0
    %v3858 = vadd.f32 0.0, %v3857
    %v3859 = vpop.f32.mrb[0].mxu0
    %3860 = vmatprep.mubr.bf16.mxu0 0
    %3861 = vmatmul.mubr.bf16.gmra.mrb[0].mxu0 %v3342
    %v3862 = vpop.f32.mrb[0].mxu0
    %v3863 = vadd.f32 0.0, %v3862
    %v3864 = vpop.f32.mrb[0].mxu0
    %v3865 = vpop.f32.mrb[0].mxu0
    %v3866 = vadd.f32 0.0, %v3865
    %v3867 = vpop.f32.mrb[0].mxu0
    %3868 = vmatprep.mubr.bf16.mxu0 0
    %3869 = vmatmul.mubr.bf16.gmra.mrb[0].mxu0 %v3345
    %v3870 = vpop.f32.mrb[0].mxu0
    %v3871 = vadd.f32 0.0, %v3870
    %v3872 = vpop.f32.mrb[0].mxu0
    %v3873 = vpop.f32.mrb[0].mxu0
    %v3874 = vadd.f32 0.0, %v3873
    %v3875 = vpop.f32.mrb[0].mxu0
    %3876 = vmatprep.mubr.bf16.mxu0 0
    %3877 = vmatmul.mubr.bf16.gmra.mrb[0].mxu0 %v3348
    %v3878 = vpop.f32.mrb[0].mxu0
    %v3879 = vadd.f32 0.0, %v3878
    %v3880 = vpop.f32.mrb[0].mxu0
    %v3881 = vpop.f32.mrb[0].mxu0
    %v3882 = vadd.f32 0.0, %v3881
    %v3883 = vpop.f32.mrb[0].mxu0
    %3884 = vmatprep.mubr.bf16.mxu0 0
    %3885 = vmatmul.mubr.bf16.gmra.mrb[0].mxu0 %v3351
    %v3886 = vpop.f32.mrb[0].mxu0
    %v3887 = vadd.f32 0.0, %v3886
    %v3888 = vpop.f32.mrb[0].mxu0
    %v3889 = vpop.f32.mrb[0].mxu0
    %v3890 = vadd.f32 0.0, %v3889
    %v3891 = vpop.f32.mrb[0].mxu0
    %3892 = vmatprep.mubr.bf16.mxu0 0
    %3893 = vmatmul.mubr.bf16.gmra.mrb[0].mxu0 %v3354
    %v3894 = vpop.f32.mrb[0].mxu0
    %v3895 = vadd.f32 0.0, %v3894
    %v3896 = vpop.f32.mrb[0].mxu0
    %v3897 = vpop.f32.mrb[0].mxu0
    %v3898 = vadd.f32 0.0, %v3897
    %v3899 = vpop.f32.mrb[0].mxu0
    %3900 = vdwg.mxu0
    %v3901 = vrcp.pop %v2714
    %v3902 = vrcp.pop %v2717
    %v3903 = vrcp.pop %v2720
    %v3904 = vrcp.pop %v2723
    %v3905 = vrcp.pop %v2726
    %v3906 = vrcp.pop %v2729
    %v3907 = vrcp.pop %v2732
    %v3908 = vrcp.pop %v2735
    %v3909 = vrcp.pop %v2738
    %v3910 = vrcp.pop %v2741
    %v3911 = vrcp.pop %v2744
    %v3912 = vrcp.pop %v2747
    %v3913 = vrcp.pop %v2750
    %v3914 = vrcp.pop %v2753
    %v3915 = vrcp.pop %v2756
    %v3916 = vrcp.pop %v2759
    %v3917 = vrcp.pop %v2762
    %v3918 = vrcp.pop %v2765
    %v3919 = vrcp.pop %v2768
    %v3920 = vrcp.pop %v2771
    %v3921 = vrcp.pop %v2774
    %v3922 = vrcp.pop %v2777
    %v3923 = vrcp.pop %v2780
    %v3924 = vrcp.pop %v2783
    %v3925 = vrcp.pop %v2786
    %v3926 = vrcp.pop %v2789
    %v3927 = vrcp.pop %v2792
    %v3928 = vrcp.pop %v2795
    %v3929 = vrcp.pop %v2798
    %v3930 = vrcp.pop %v2801
    %v3931 = vrcp.pop %v2804
    %v3932 = vrcp.pop %v2807
    %v3933 = vrcp.pop %v2810
    %v3934 = vrcp.pop %v2813
    %v3935 = vrcp.pop %v2816
    %v3936 = vrcp.pop %v2819
    %v3937 = vrcp.pop %v2822
    %v3938 = vrcp.pop %v2825
    %v3939 = vrcp.pop %v2828
    %v3940 = vrcp.pop %v2831
    %v3941 = vrcp.pop %v2834
    %v3942 = vrcp.pop %v2837
    %v3943 = vrcp.pop %v2840
    %v3944 = vrcp.pop %v2843
    %v3945 = vrcp.pop %v2846
    %v3946 = vrcp.pop %v2849
    %v3947 = vrcp.pop %v2852
    %v3948 = vrcp.pop %v2855
    %v3949 = vrcp.pop %v2858
    %v3950 = vrcp.pop %v2861
    %v3951 = vrcp.pop %v2864
    %v3952 = vrcp.pop %v2867
    %v3953 = vrcp.pop %v2870
    %v3954 = vrcp.pop %v2873
    %v3955 = vrcp.pop %v2876
    %v3956 = vrcp.pop %v2879
    %v3957 = vrcp.pop %v2882
    %v3958 = vrcp.pop %v2885
    %v3959 = vrcp.pop %v2888
    %v3960 = vrcp.pop %v2891
    %v3961 = vrcp.pop %v2894
    %v3962 = vrcp.pop %v2897
    %v3963 = vrcp.pop %v2900
    %v3964 = vrcp.pop %v2903
    %v3965 = vrcp.pop %v2906
    %v3966 = vrcp.pop %v2909
    %v3967 = vrcp.pop %v2912
    %v3968 = vrcp.pop %v2915
    %v3969 = vrcp.pop %v2918
    %v3970 = vrcp.pop %v2921
    %v3971 = vrcp.pop %v2924
    %v3972 = vrcp.pop %v2927
    %v3973 = vrcp.pop %v2930
    %v3974 = vrcp.pop %v2933
    %v3975 = vrcp.pop %v2936
    %v3976 = vrcp.pop %v2939
    %v3977 = vrcp.pop %v2942
    %v3978 = vrcp.pop %v2945
    %v3979 = vrcp.pop %v2948
    %v3980 = vrcp.pop %v2951
    %v3981 = vrcp.pop %v2954
    %v3982 = vrcp.pop %v2957
    %v3983 = vrcp.pop %v2960
    %v3984 = vrcp.pop %v2963
    %v3985 = vrcp.pop %v2966
    %v3986 = vrcp.pop %v2969
    %v3987 = vrcp.pop %v2972
    %v3988 = vrcp.pop %v2975
    %v3989 = vrcp.pop %v2978
    %v3990 = vrcp.pop %v2981
    %v3991 = vrcp.pop %v2984
    %v3992 = vrcp.pop %v2987
    %v3993 = vrcp.pop %v2990
    %v3994 = vrcp.pop %v2993
    %v3995 = vrcp.pop %v2996
    %v3996 = vrcp.pop %v2999
    %v3997 = vrcp.pop %v3002
    %v3998 = vrcp.pop %v3005
    %v3999 = vrcp.pop %v3008
    %v4000 = vrcp.pop %v3011
    %v4001 = vrcp.pop %v3014
    %v4002 = vrcp.pop %v3017
    %v4003 = vrcp.pop %v3020
    %v4004 = vrcp.pop %v3023
    %v4005 = vrcp.pop %v3026
    %v4006 = vrcp.pop %v3029
    %v4007 = vrcp.pop %v3032
    %v4008 = vrcp.pop %v3035
    %v4009 = vrcp.pop %v3038
    %v4010 = vrcp.pop %v3041
    %v4011 = vrcp.pop %v3044
    %v4012 = vrcp.pop %v3047
    %v4013 = vrcp.pop %v3050
    %v4014 = vrcp.pop %v3053
    %v4015 = vrcp.pop %v3056
    %v4016 = vrcp.pop %v3059
    %v4017 = vrcp.pop %v3062
    %v4018 = vrcp.pop %v3065
    %v4019 = vrcp.pop %v3068
    %v4020 = vrcp.pop %v3071
    %v4021 = vrcp.pop %v3074
    %v4022 = vrcp.pop %v3077
    %v4023 = vrcp.pop %v3080
    %v4024 = vrcp.pop %v3083
    %v4025 = vrcp.pop %v3086
    %v4026 = vrcp.pop %v3089
    %v4027 = vrcp.pop %v3092
    %v4028 = vrcp.pop %v3095
    %v4029 = vmul.f32 %v3391, %v3901
    %v4030 = vmul.f32 %v3394, %v3902
    %v4031 = vmul.f32 %v3399, %v3903
    %v4032 = vmul.f32 %v3402, %v3904
    %v4033 = vmul.f32 %v3407, %v3905
    %v4034 = vmul.f32 %v3410, %v3906
    %v4035 = vmul.f32 %v3415, %v3907
    %v4036 = vmul.f32 %v3418, %v3908
    %v4037 = vmul.f32 %v3423, %v3909
    %v4038 = vmul.f32 %v3426, %v3910
    %v4039 = vmul.f32 %v3431, %v3911
    %v4040 = vmul.f32 %v3434, %v3912
    %v4041 = vmul.f32 %v3439, %v3913
    %v4042 = vmul.f32 %v3442, %v3914
    %v4043 = vmul.f32 %v3447, %v3915
    %v4044 = vmul.f32 %v3450, %v3916
    %v4045 = vmul.f32 %v3455, %v3917
    %v4046 = vmul.f32 %v3458, %v3918
    %v4047 = vmul.f32 %v3463, %v3919
    %v4048 = vmul.f32 %v3466, %v3920
    %v4049 = vmul.f32 %v3471, %v3921
    %v4050 = vmul.f32 %v3474, %v3922
    %v4051 = vmul.f32 %v3479, %v3923
    %v4052 = vmul.f32 %v3482, %v3924
    %v4053 = vmul.f32 %v3487, %v3925
    %v4054 = vmul.f32 %v3490, %v3926
    %v4055 = vmul.f32 %v3495, %v3927
    %v4056 = vmul.f32 %v3498, %v3928
    %v4057 = vmul.f32 %v3503, %v3929
    %v4058 = vmul.f32 %v3506, %v3930
    %v4059 = vmul.f32 %v3511, %v3931
    %v4060 = vmul.f32 %v3514, %v3932
    %v4061 = vmul.f32 %v3519, %v3933
    %v4062 = vmul.f32 %v3522, %v3934
    %v4063 = vmul.f32 %v3527, %v3935
    %v4064 = vmul.f32 %v3530, %v3936
    %v4065 = vmul.f32 %v3535, %v3937
    %v4066 = vmul.f32 %v3538, %v3938
    %v4067 = vmul.f32 %v3543, %v3939
    %v4068 = vmul.f32 %v3546, %v3940
    %v4069 = vmul.f32 %v3551, %v3941
    %v4070 = vmul.f32 %v3554, %v3942
    %v4071 = vmul.f32 %v3559, %v3943
    %v4072 = vmul.f32 %v3562, %v3944
    %v4073 = vmul.f32 %v3567, %v3945
    %v4074 = vmul.f32 %v3570, %v3946
    %v4075 = vmul.f32 %v3575, %v3947
    %v4076 = vmul.f32 %v3578, %v3948
    %v4077 = vmul.f32 %v3583, %v3949
    %v4078 = vmul.f32 %v3586, %v3950
    %v4079 = vmul.f32 %v3591, %v3951
    %v4080 = vmul.f32 %v3594, %v3952
    %v4081 = vmul.f32 %v3599, %v3953
    %v4082 = vmul.f32 %v3602, %v3954
    %v4083 = vmul.f32 %v3607, %v3955
    %v4084 = vmul.f32 %v3610, %v3956
    %v4085 = vmul.f32 %v3615, %v3957
    %v4086 = vmul.f32 %v3618, %v3958
    %v4087 = vmul.f32 %v3623, %v3959
    %v4088 = vmul.f32 %v3626, %v3960
    %v4089 = vmul.f32 %v3631, %v3961
    %v4090 = vmul.f32 %v3634, %v3962
    %v4091 = vmul.f32 %v3639, %v3963
    %v4092 = vmul.f32 %v3642, %v3964
    %v4093 = vmul.f32 %v3647, %v3965
    %v4094 = vmul.f32 %v3650, %v3966
    %v4095 = vmul.f32 %v3655, %v3967
    %v4096 = vmul.f32 %v3658, %v3968
    %v4097 = vmul.f32 %v3663, %v3969
    %v4098 = vmul.f32 %v3666, %v3970
    %v4099 = vmul.f32 %v3671, %v3971
    %v4100 = vmul.f32 %v3674, %v3972
    %v4101 = vmul.f32 %v3679, %v3973
    %v4102 = vmul.f32 %v3682, %v3974
    %v4103 = vmul.f32 %v3687, %v3975
    %v4104 = vmul.f32 %v3690, %v3976
    %v4105 = vmul.f32 %v3695, %v3977
    %v4106 = vmul.f32 %v3698, %v3978
    %v4107 = vmul.f32 %v3703, %v3979
    %v4108 = vmul.f32 %v3706, %v3980
    %v4109 = vmul.f32 %v3711, %v3981
    %v4110 = vmul.f32 %v3714, %v3982
    %v4111 = vmul.f32 %v3719, %v3983
    %v4112 = vmul.f32 %v3722, %v3984
    %v4113 = vmul.f32 %v3727, %v3985
    %v4114 = vmul.f32 %v3730, %v3986
    %v4115 = vmul.f32 %v3735, %v3987
    %v4116 = vmul.f32 %v3738, %v3988
    %v4117 = vmul.f32 %v3743, %v3989
    %v4118 = vmul.f32 %v3746, %v3990
    %v4119 = vmul.f32 %v3751, %v3991
    %v4120 = vmul.f32 %v3754, %v3992
    %v4121 = vmul.f32 %v3759, %v3993
    %v4122 = vmul.f32 %v3762, %v3994
    %v4123 = vmul.f32 %v3767, %v3995
    %v4124 = vmul.f32 %v3770, %v3996
    %v4125 = vmul.f32 %v3775, %v3997
    %v4126 = vmul.f32 %v3778, %v3998
    %v4127 = vmul.f32 %v3783, %v3999
    %v4128 = vmul.f32 %v3786, %v4000
    %v4129 = vmul.f32 %v3791, %v4001
    %v4130 = vmul.f32 %v3794, %v4002
    %v4131 = vmul.f32 %v3799, %v4003
    %v4132 = vmul.f32 %v3802, %v4004
    %v4133 = vmul.f32 %v3807, %v4005
    %v4134 = vmul.f32 %v3810, %v4006
    %v4135 = vmul.f32 %v3815, %v4007
    %v4136 = vmul.f32 %v3818, %v4008
    %v4137 = vmul.f32 %v3823, %v4009
    %v4138 = vmul.f32 %v3826, %v4010
    %v4139 = vmul.f32 %v3831, %v4011
    %v4140 = vmul.f32 %v3834, %v4012
    %v4141 = vmul.f32 %v3839, %v4013
    %v4142 = vmul.f32 %v3842, %v4014
    %v4143 = vmul.f32 %v3847, %v4015
    %v4144 = vmul.f32 %v3850, %v4016
    %v4145 = vmul.f32 %v3855, %v4017
    %v4146 = vmul.f32 %v3858, %v4018
    %v4147 = vmul.f32 %v3863, %v4019
    %v4148 = vmul.f32 %v3866, %v4020
    %v4149 = vmul.f32 %v3871, %v4021
    %v4150 = vmul.f32 %v3874, %v4022
    %v4151 = vmul.f32 %v3879, %v4023
    %v4152 = vmul.f32 %v3882, %v4024
    %v4153 = vmul.f32 %v3887, %v4025
    %v4154 = vmul.f32 %v3890, %v4026
    %v4155 = vmul.f32 %v3895, %v4027
    %v4156 = vmul.f32 %v3898, %v4028
    %v4157 = vld [vmem:[%s6] sm:$0x1]
    %v4158 = vld [vmem:[%s6 + $0x1] sm:$0x1]
    %v4159 = vld [vmem:[%s6 + $0x2] sm:$0x1]
    %v4160 = vld [vmem:[%s6 + $0x3] sm:$0x1]
    %v4161 = vld [vmem:[%s6 + $0x4] sm:$0x1]
    %v4162 = vld [vmem:[%s6 + $0x5] sm:$0x1]
    %v4163 = vld [vmem:[%s6 + $0x6] sm:$0x1]
    %v4164 = vld [vmem:[%s6 + $0x7] sm:$0x1]
    %v4165 = vld [vmem:[%s6 + $0x8] sm:$0x1]
    %v4166 = vld [vmem:[%s6 + $0x9] sm:$0x1]
    %v4167 = vld [vmem:[%s6 + $0xa] sm:$0x1]
    %v4168 = vld [vmem:[%s6 + $0xb] sm:$0x1]
    %v4169 = vld [vmem:[%s6 + $0xc] sm:$0x1]
    %v4170 = vld [vmem:[%s6 + $0xd] sm:$0x1]
    %v4171 = vld [vmem:[%s6 + $0xe] sm:$0x1]
    %v4172 = vld [vmem:[%s6 + $0xf] sm:$0x1]
    %v4189 = vlaneseq
    %v4190 = vshrl.u32 %v4189, 7
    %v4191 = vsub.s32 0, %v4190
    %v4192 = vrot.slane %v4157, %v4191
    %v4193 = vlaneseq
    %v4194 = vshrl.u32 %v4193, 7
    %v4195 = vsub.s32 0, %v4194
    %v4196 = vrot.slane %v4158, %v4195
    %v4197 = vlaneseq
    %v4198 = vshrl.u32 %v4197, 7
    %v4199 = vsub.s32 0, %v4198
    %v4200 = vrot.slane %v4159, %v4199
    %v4201 = vlaneseq
    %v4202 = vshrl.u32 %v4201, 7
    %v4203 = vsub.s32 0, %v4202
    %v4204 = vrot.slane %v4160, %v4203
    %v4205 = vlaneseq
    %v4206 = vshrl.u32 %v4205, 7
    %v4207 = vsub.s32 0, %v4206
    %v4208 = vrot.slane %v4161, %v4207
    %v4209 = vlaneseq
    %v4210 = vshrl.u32 %v4209, 7
    %v4211 = vsub.s32 0, %v4210
    %v4212 = vrot.slane %v4162, %v4211
    %v4213 = vlaneseq
    %v4214 = vshrl.u32 %v4213, 7
    %v4215 = vsub.s32 0, %v4214
    %v4216 = vrot.slane %v4163, %v4215
    %v4217 = vlaneseq
    %v4218 = vshrl.u32 %v4217, 7
    %v4219 = vsub.s32 0, %v4218
    %v4220 = vrot.slane %v4164, %v4219
    %v4221 = vlaneseq
    %v4222 = vshrl.u32 %v4221, 7
    %v4223 = vsub.s32 0, %v4222
    %v4224 = vrot.slane %v4165, %v4223
    %v4225 = vlaneseq
    %v4226 = vshrl.u32 %v4225, 7
    %v4227 = vsub.s32 0, %v4226
    %v4228 = vrot.slane %v4166, %v4227
    %v4229 = vlaneseq
    %v4230 = vshrl.u32 %v4229, 7
    %v4231 = vsub.s32 0, %v4230
    %v4232 = vrot.slane %v4167, %v4231
    %v4233 = vlaneseq
    %v4234 = vshrl.u32 %v4233, 7
    %v4235 = vsub.s32 0, %v4234
    %v4236 = vrot.slane %v4168, %v4235
    %v4237 = vlaneseq
    %v4238 = vshrl.u32 %v4237, 7
    %v4239 = vsub.s32 0, %v4238
    %v4240 = vrot.slane %v4169, %v4239
    %v4241 = vlaneseq
    %v4242 = vshrl.u32 %v4241, 7
    %v4243 = vsub.s32 0, %v4242
    %v4244 = vrot.slane %v4170, %v4243
    %v4245 = vlaneseq
    %v4246 = vshrl.u32 %v4245, 7
    %v4247 = vsub.s32 0, %v4246
    %v4248 = vrot.slane %v4171, %v4247
    %v4249 = vlaneseq
    %v4250 = vshrl.u32 %v4249, 7
    %v4251 = vsub.s32 0, %v4250
    %v4252 = vrot.slane %v4172, %v4251
    %v4269 = vmul.f32 %v4029, %v4192
    %v4270 = vmul.f32 %v4030, %v4192
    %v4271 = vmul.f32 %v4031, %v4192
    %v4272 = vmul.f32 %v4032, %v4192
    %v4273 = vmul.f32 %v4033, %v4192
    %v4274 = vmul.f32 %v4034, %v4192
    %v4275 = vmul.f32 %v4035, %v4192
    %v4276 = vmul.f32 %v4036, %v4192
    %v4277 = vmul.f32 %v4037, %v4196
    %v4278 = vmul.f32 %v4038, %v4196
    %v4279 = vmul.f32 %v4039, %v4196
    %v4280 = vmul.f32 %v4040, %v4196
    %v4281 = vmul.f32 %v4041, %v4196
    %v4282 = vmul.f32 %v4042, %v4196
    %v4283 = vmul.f32 %v4043, %v4196
    %v4284 = vmul.f32 %v4044, %v4196
    %v4285 = vmul.f32 %v4045, %v4200
    %v4286 = vmul.f32 %v4046, %v4200
    %v4287 = vmul.f32 %v4047, %v4200
    %v4288 = vmul.f32 %v4048, %v4200
    %v4289 = vmul.f32 %v4049, %v4200
    %v4290 = vmul.f32 %v4050, %v4200
    %v4291 = vmul.f32 %v4051, %v4200
    %v4292 = vmul.f32 %v4052, %v4200
    %v4293 = vmul.f32 %v4053, %v4204
    %v4294 = vmul.f32 %v4054, %v4204
    %v4295 = vmul.f32 %v4055, %v4204
    %v4296 = vmul.f32 %v4056, %v4204
    %v4297 = vmul.f32 %v4057, %v4204
    %v4298 = vmul.f32 %v4058, %v4204
    %v4299 = vmul.f32 %v4059, %v4204
    %v4300 = vmul.f32 %v4060, %v4204
    %v4301 = vmul.f32 %v4061, %v4208
    %v4302 = vmul.f32 %v4062, %v4208
    %v4303 = vmul.f32 %v4063, %v4208
    %v4304 = vmul.f32 %v4064, %v4208
    %v4305 = vmul.f32 %v4065, %v4208
    %v4306 = vmul.f32 %v4066, %v4208
    %v4307 = vmul.f32 %v4067, %v4208
    %v4308 = vmul.f32 %v4068, %v4208
    %v4309 = vmul.f32 %v4069, %v4212
    %v4310 = vmul.f32 %v4070, %v4212
    %v4311 = vmul.f32 %v4071, %v4212
    %v4312 = vmul.f32 %v4072, %v4212
    %v4313 = vmul.f32 %v4073, %v4212
    %v4314 = vmul.f32 %v4074, %v4212
    %v4315 = vmul.f32 %v4075, %v4212
    %v4316 = vmul.f32 %v4076, %v4212
    %v4317 = vmul.f32 %v4077, %v4216
    %v4318 = vmul.f32 %v4078, %v4216
    %v4319 = vmul.f32 %v4079, %v4216
    %v4320 = vmul.f32 %v4080, %v4216
    %v4321 = vmul.f32 %v4081, %v4216
    %v4322 = vmul.f32 %v4082, %v4216
    %v4323 = vmul.f32 %v4083, %v4216
    %v4324 = vmul.f32 %v4084, %v4216
    %v4325 = vmul.f32 %v4085, %v4220
    %v4326 = vmul.f32 %v4086, %v4220
    %v4327 = vmul.f32 %v4087, %v4220
    %v4328 = vmul.f32 %v4088, %v4220
    %v4329 = vmul.f32 %v4089, %v4220
    %v4330 = vmul.f32 %v4090, %v4220
    %v4331 = vmul.f32 %v4091, %v4220
    %v4332 = vmul.f32 %v4092, %v4220
    %v4333 = vmul.f32 %v4093, %v4224
    %v4334 = vmul.f32 %v4094, %v4224
    %v4335 = vmul.f32 %v4095, %v4224
    %v4336 = vmul.f32 %v4096, %v4224
    %v4337 = vmul.f32 %v4097, %v4224
    %v4338 = vmul.f32 %v4098, %v4224
    %v4339 = vmul.f32 %v4099, %v4224
    %v4340 = vmul.f32 %v4100, %v4224
    %v4341 = vmul.f32 %v4101, %v4228
    %v4342 = vmul.f32 %v4102, %v4228
    %v4343 = vmul.f32 %v4103, %v4228
    %v4344 = vmul.f32 %v4104, %v4228
    %v4345 = vmul.f32 %v4105, %v4228
    %v4346 = vmul.f32 %v4106, %v4228
    %v4347 = vmul.f32 %v4107, %v4228
    %v4348 = vmul.f32 %v4108, %v4228
    %v4349 = vmul.f32 %v4109, %v4232
    %v4350 = vmul.f32 %v4110, %v4232
    %v4351 = vmul.f32 %v4111, %v4232
    %v4352 = vmul.f32 %v4112, %v4232
    %v4353 = vmul.f32 %v4113, %v4232
    %v4354 = vmul.f32 %v4114, %v4232
    %v4355 = vmul.f32 %v4115, %v4232
    %v4356 = vmul.f32 %v4116, %v4232
    %v4357 = vmul.f32 %v4117, %v4236
    %v4358 = vmul.f32 %v4118, %v4236
    %v4359 = vmul.f32 %v4119, %v4236
    %v4360 = vmul.f32 %v4120, %v4236
    %v4361 = vmul.f32 %v4121, %v4236
    %v4362 = vmul.f32 %v4122, %v4236
    %v4363 = vmul.f32 %v4123, %v4236
    %v4364 = vmul.f32 %v4124, %v4236
    %v4365 = vmul.f32 %v4125, %v4240
    %v4366 = vmul.f32 %v4126, %v4240
    %v4367 = vmul.f32 %v4127, %v4240
    %v4368 = vmul.f32 %v4128, %v4240
    %v4369 = vmul.f32 %v4129, %v4240
    %v4370 = vmul.f32 %v4130, %v4240
    %v4371 = vmul.f32 %v4131, %v4240
    %v4372 = vmul.f32 %v4132, %v4240
    %v4373 = vmul.f32 %v4133, %v4244
    %v4374 = vmul.f32 %v4134, %v4244
    %v4375 = vmul.f32 %v4135, %v4244
    %v4376 = vmul.f32 %v4136, %v4244
    %v4377 = vmul.f32 %v4137, %v4244
    %v4378 = vmul.f32 %v4138, %v4244
    %v4379 = vmul.f32 %v4139, %v4244
    %v4380 = vmul.f32 %v4140, %v4244
    %v4381 = vmul.f32 %v4141, %v4248
    %v4382 = vmul.f32 %v4142, %v4248
    %v4383 = vmul.f32 %v4143, %v4248
    %v4384 = vmul.f32 %v4144, %v4248
    %v4385 = vmul.f32 %v4145, %v4248
    %v4386 = vmul.f32 %v4146, %v4248
    %v4387 = vmul.f32 %v4147, %v4248
    %v4388 = vmul.f32 %v4148, %v4248
    %v4389 = vmul.f32 %v4149, %v4252
    %v4390 = vmul.f32 %v4150, %v4252
    %v4391 = vmul.f32 %v4151, %v4252
    %v4392 = vmul.f32 %v4152, %v4252
    %v4393 = vmul.f32 %v4153, %v4252
    %v4394 = vmul.f32 %v4154, %v4252
    %v4395 = vmul.f32 %v4155, %v4252
    %v4396 = vmul.f32 %v4156, %v4252
    %v4397 = vadd.f32 %v4269, %v4277
    %v4398 = vadd.f32 %v4397, %v4285
    %v4399 = vadd.f32 %v4398, %v4293
    %v4400 = vadd.f32 %v4399, %v4301
    %v4401 = vadd.f32 %v4400, %v4309
    %v4402 = vadd.f32 %v4401, %v4317
    %v4403 = vadd.f32 %v4402, %v4325
    %v4404 = vadd.f32 %v4403, %v4333
    %v4405 = vadd.f32 %v4404, %v4341
    %v4406 = vadd.f32 %v4405, %v4349
    %v4407 = vadd.f32 %v4406, %v4357
    %v4408 = vadd.f32 %v4407, %v4365
    %v4409 = vadd.f32 %v4408, %v4373
    %v4410 = vadd.f32 %v4409, %v4381
    %v4411 = vadd.f32 %v4410, %v4389
    %v4412 = vadd.f32 %v4270, %v4278
    %v4413 = vadd.f32 %v4412, %v4286
    %v4414 = vadd.f32 %v4413, %v4294
    %v4415 = vadd.f32 %v4414, %v4302
    %v4416 = vadd.f32 %v4415, %v4310
    %v4417 = vadd.f32 %v4416, %v4318
    %v4418 = vadd.f32 %v4417, %v4326
    %v4419 = vadd.f32 %v4418, %v4334
    %v4420 = vadd.f32 %v4419, %v4342
    %v4421 = vadd.f32 %v4420, %v4350
    %v4422 = vadd.f32 %v4421, %v4358
    %v4423 = vadd.f32 %v4422, %v4366
    %v4424 = vadd.f32 %v4423, %v4374
    %v4425 = vadd.f32 %v4424, %v4382
    %v4426 = vadd.f32 %v4425, %v4390
    %v4427 = vadd.f32 %v4271, %v4279
    %v4428 = vadd.f32 %v4427, %v4287
    %v4429 = vadd.f32 %v4428, %v4295
    %v4430 = vadd.f32 %v4429, %v4303
    %v4431 = vadd.f32 %v4430, %v4311
    %v4432 = vadd.f32 %v4431, %v4319
    %v4433 = vadd.f32 %v4432, %v4327
    %v4434 = vadd.f32 %v4433, %v4335
    %v4435 = vadd.f32 %v4434, %v4343
    %v4436 = vadd.f32 %v4435, %v4351
    %v4437 = vadd.f32 %v4436, %v4359
    %v4438 = vadd.f32 %v4437, %v4367
    %v4439 = vadd.f32 %v4438, %v4375
    %v4440 = vadd.f32 %v4439, %v4383
    %v4441 = vadd.f32 %v4440, %v4391
    %v4442 = vadd.f32 %v4272, %v4280
    %v4443 = vadd.f32 %v4442, %v4288
    %v4444 = vadd.f32 %v4443, %v4296
    %v4445 = vadd.f32 %v4444, %v4304
    %v4446 = vadd.f32 %v4445, %v4312
    %v4447 = vadd.f32 %v4446, %v4320
    %v4448 = vadd.f32 %v4447, %v4328
    %v4449 = vadd.f32 %v4448, %v4336
    %v4450 = vadd.f32 %v4449, %v4344
    %v4451 = vadd.f32 %v4450, %v4352
    %v4452 = vadd.f32 %v4451, %v4360
    %v4453 = vadd.f32 %v4452, %v4368
    %v4454 = vadd.f32 %v4453, %v4376
    %v4455 = vadd.f32 %v4454, %v4384
    %v4456 = vadd.f32 %v4455, %v4392
    %v4457 = vadd.f32 %v4273, %v4281
    %v4458 = vadd.f32 %v4457, %v4289
    %v4459 = vadd.f32 %v4458, %v4297
    %v4460 = vadd.f32 %v4459, %v4305
    %v4461 = vadd.f32 %v4460, %v4313
    %v4462 = vadd.f32 %v4461, %v4321
    %v4463 = vadd.f32 %v4462, %v4329
    %v4464 = vadd.f32 %v4463, %v4337
    %v4465 = vadd.f32 %v4464, %v4345
    %v4466 = vadd.f32 %v4465, %v4353
    %v4467 = vadd.f32 %v4466, %v4361
    %v4468 = vadd.f32 %v4467, %v4369
    %v4469 = vadd.f32 %v4468, %v4377
    %v4470 = vadd.f32 %v4469, %v4385
    %v4471 = vadd.f32 %v4470, %v4393
    %v4472 = vadd.f32 %v4274, %v4282
    %v4473 = vadd.f32 %v4472, %v4290
    %v4474 = vadd.f32 %v4473, %v4298
    %v4475 = vadd.f32 %v4474, %v4306
    %v4476 = vadd.f32 %v4475, %v4314
    %v4477 = vadd.f32 %v4476, %v4322
    %v4478 = vadd.f32 %v4477, %v4330
    %v4479 = vadd.f32 %v4478, %v4338
    %v4480 = vadd.f32 %v4479, %v4346
    %v4481 = vadd.f32 %v4480, %v4354
    %v4482 = vadd.f32 %v4481, %v4362
    %v4483 = vadd.f32 %v4482, %v4370
    %v4484 = vadd.f32 %v4483, %v4378
    %v4485 = vadd.f32 %v4484, %v4386
    %v4486 = vadd.f32 %v4485, %v4394
    %v4487 = vadd.f32 %v4275, %v4283
    %v4488 = vadd.f32 %v4487, %v4291
    %v4489 = vadd.f32 %v4488, %v4299
    %v4490 = vadd.f32 %v4489, %v4307
    %v4491 = vadd.f32 %v4490, %v4315
    %v4492 = vadd.f32 %v4491, %v4323
    %v4493 = vadd.f32 %v4492, %v4331
    %v4494 = vadd.f32 %v4493, %v4339
    %v4495 = vadd.f32 %v4494, %v4347
    %v4496 = vadd.f32 %v4495, %v4355
    %v4497 = vadd.f32 %v4496, %v4363
    %v4498 = vadd.f32 %v4497, %v4371
    %v4499 = vadd.f32 %v4498, %v4379
    %v4500 = vadd.f32 %v4499, %v4387
    %v4501 = vadd.f32 %v4500, %v4395
    %v4502 = vadd.f32 %v4276, %v4284
    %v4503 = vadd.f32 %v4502, %v4292
    %v4504 = vadd.f32 %v4503, %v4300
    %v4505 = vadd.f32 %v4504, %v4308
    %v4506 = vadd.f32 %v4505, %v4316
    %v4507 = vadd.f32 %v4506, %v4324
    %v4508 = vadd.f32 %v4507, %v4332
    %v4509 = vadd.f32 %v4508, %v4340
    %v4510 = vadd.f32 %v4509, %v4348
    %v4511 = vadd.f32 %v4510, %v4356
    %v4512 = vadd.f32 %v4511, %v4364
    %v4513 = vadd.f32 %v4512, %v4372
    %v4514 = vadd.f32 %v4513, %v4380
    %v4515 = vadd.f32 %v4514, %v4388
    %v4516 = vadd.f32 %v4515, %v4396
    %v4517 = vld [vmem:[%s7] sm:$0x1]
    %v4519 = vlaneseq
    %v4520 = vshrl.u32 %v4519, 7
    %v4521 = vsub.s32 0, %v4520
    %v4522 = vrot.slane %v4517, %v4521
    %v4524 = vadd.f32 %v4411, %v4522
    %v4525 = vadd.f32 %v4426, %v4522
    %v4526 = vadd.f32 %v4441, %v4522
    %v4527 = vadd.f32 %v4456, %v4522
    %v4528 = vadd.f32 %v4471, %v4522
    %v4529 = vadd.f32 %v4486, %v4522
    %v4530 = vadd.f32 %v4501, %v4522
    %v4531 = vadd.f32 %v4516, %v4522
    %4532 = vst [vmem:[#allocation7] sm:$0xff] %v4524
    %4533 = vst [vmem:[#allocation7 + $0x8] sm:$0xff] %v4525
    %4534 = vst [vmem:[#allocation7 + $0x10] sm:$0xff] %v4526
    %4535 = vst [vmem:[#allocation7 + $0x18] sm:$0xff] %v4527
    %4536 = vst [vmem:[#allocation7 + $0x20] sm:$0xff] %v4528
    %4537 = vst [vmem:[#allocation7 + $0x28] sm:$0xff] %v4529
    %4538 = vst [vmem:[#allocation7 + $0x30] sm:$0xff] %v4530
    %4539 = vst [vmem:[#allocation7 + $0x38] sm:$0xff] %v4531
    // Predicated region
    $region42: #{tpu_custom_call.1} parent=1 // pred_check
      _
    $region43: #{tpu_custom_call.1} parent=1 // pred_check_branch
      %4541 = sbr.rel (0) target = $region45
    $region44: #{tpu_custom_call.1} parent=1 // pred_region
      %s4543 = ssub.s32 1024, 1024
      %4544 = vsyncadd [#allocation4], %s4543
      %s4545 = sshll.u32 [#allocation7], 4
      %s4546 = int_to_ptr.vmem [resolvable:$true] %s4545
      %4551 = dma.vmem_to_hbm [thread:$0]  %s4546, 1024, %s8, [#allocation4], 128, 128, 8
    $region45: #{tpu_custom_call.1} parent=1 // pred_fallthru
      _
    // Predicated region
    $region46: #{tpu_custom_call.1} parent=1 // pred_check
      _
    $region47: #{tpu_custom_call.1} parent=1 // pred_check_branch
      %4553 = sbr.rel (0) target = $region49
    $region48: #{tpu_custom_call.1} parent=1 // pred_region
      %4554 = dma.done [#allocation4], 1024
    $region49: #{tpu_custom_call.1} parent=1 // pred_fallthru
      _
    %4555 = vsyncpa [#allocation3], 1
    %4556 = vsyncpa [#allocation4], 1
    %4557 = vsyncpa [#allocation5], 1

</llo_original>
